<compile_context>
chip_gen: v7x
topology: tpu7x:2x2x1
jax: 0.10.0
libtpu: 0.0.40
codegen_flags: <defaults>
</compile_context>

<pallas_src>
import functools

import jax
import jax.numpy as jnp
import numpy as np
from jax.experimental import pallas as pl
from jax.experimental.pallas import tpu as pltpu

_BN_EPS = 1e-5


def layer_specs(color_channels, pooling_kernels):
    # (name, C_in, C_out, kernel_size == stride, activation)
    return [("m1", 256, 128, 1, "relu"),
            ("m2", 128, 64, pooling_kernels[1], "relu"),
            ("m3", 64, 32, pooling_kernels[0], "relu"),
            ("bottle", 32, color_channels, 1, "sigmoid")]


# ----------------------------- fused Pallas kernel ---------------------------

def _decoder_kernel(*refs, layer_meta):
    """Whole decoder forward in one kernel invocation.

    refs = (x, [w_small, gamma, beta] * n_layers, out).
    layer_meta = ((g_in, cin, cout, k, activation), ...)  (static per layer).
    """
    x_ref, out_ref = refs[0], refs[-1]
    y = x_ref[...]
    m_rows = y.shape[0]

    for li, (g_in, cin, cout, k, act) in enumerate(layer_meta):
        w_ref, gamma_ref, beta_ref = refs[1 + 3 * li: 4 + 3 * li]
        w = w_ref[...]                               # dense (cin, k*k*cout)

        # ConvTranspose2d(kernel==stride, no padding) == per-pixel matmul.
        # The same dense weight applies to every incoming spatial-offset
        # column group -> g_in small dense dots instead of kron(I_g, W).
        if g_in == 1:
            y = jnp.dot(y, w, preferred_element_type=jnp.float32)
        else:
            parts = [
                jnp.dot(y[:, g * cin:(g + 1) * cin], w,
                        preferred_element_type=jnp.float32)
                for g in range(g_in)
            ]
            y = jnp.concatenate(parts, axis=-1)
        # NOTE: the conv bias is intentionally dropped — a per-channel constant
        # added right before training-mode BatchNorm is cancelled by the mean.

        g_out = g_in * k * k

        # Training-mode BatchNorm2d (batch statistics, biased variance).
        s1 = jnp.sum(y, axis=0, keepdims=True)       # (1, g_out*cout)
        s2 = jnp.sum(y * y, axis=0, keepdims=True)   # (1, g_out*cout)
        if g_out > 1:                                # fold groups per channel
            cs1 = s1[:, 0:cout]
            cs2 = s2[:, 0:cout]
            for g in range(1, g_out):
                cs1 = cs1 + s1[:, g * cout:(g + 1) * cout]
                cs2 = cs2 + s2[:, g * cout:(g + 1) * cout]
        else:
            cs1, cs2 = s1, s2
        inv_count = 1.0 / float(m_rows * g_out)
        mean = cs1 * inv_count                       # (1, cout)
        var = cs2 * inv_count - mean * mean          # biased variance
        rstd = jax.lax.rsqrt(var + _BN_EPS)
        scale = gamma_ref[...] * rstd                # (1, cout)
        shift = beta_ref[...] - mean * scale         # (1, cout)
        if g_out > 1:                                # expand back to columns
            scale = jnp.concatenate([scale] * g_out, axis=-1)
            shift = jnp.concatenate([shift] * g_out, axis=-1)
        y = y * scale + shift
        y = jnp.maximum(y, 0.0) if act == "relu" else jax.nn.sigmoid(y)

    out_ref[...] = y


def fused_decoder(rows, flat_layer_args, layer_meta, c_final):
    m = rows.shape[0]
    inputs = [rows] + list(flat_layer_args)
    in_specs = [pl.BlockSpec(a.shape, lambda i: (0, 0)) for a in inputs]
    kern = functools.partial(_decoder_kernel, layer_meta=tuple(layer_meta))
    return pl.pallas_call(
        kern,
        out_shape=jax.ShapeDtypeStruct((m, c_final), jnp.float32),
        grid_spec=pltpu.PrefetchScalarGridSpec(
            num_scalar_prefetch=0,
            grid=(1,),                       # whole problem fits in VMEM
            in_specs=in_specs,
            out_specs=pl.BlockSpec((m, c_final), lambda i: (0, 0))),
        compiler_params=pltpu.CompilerParams(
            dimension_semantics=("arbitrary",),
            vmem_limit_bytes=8 * 1024 * 1024),   # right-sized (~1 MiB actual)
    )(*inputs)


# ----------------------------- host-side prep (runs once) --------------------

def _round_up(x, m):
    return ((x + m - 1) // m) * m


def build_layer_inputs(params, pooling_kernels, color_channels):
    """Dense per-layer operands + static metadata (depends only on params)."""
    specs = layer_specs(color_channels, pooling_kernels)
    g_in = 1
    flat, meta = [], []
    last = len(specs) - 1
    cc_pad = color_channels
    for idx, (name, cin, cout, k, act) in enumerate(specs):
        w, _b, gamma, beta = params[name]     # bias dropped (BN cancels it)
        if idx == last and cout % 8 != 0:
            # Pad the final (bottle) out-channels so the last store is a
            # lane-dense (M, 128) slab; padded channels have zero weight and
            # are sliced off afterwards.
            cout_p = _round_up(cout, 8)
            w = jnp.pad(w, ((0, 0), (0, cout_p - cout), (0, 0), (0, 0)))
            gamma = jnp.pad(gamma, (0, cout_p - cout), constant_values=1.0)
            beta = jnp.pad(beta, (0, cout_p - cout))
            cout = cout_p
            cc_pad = cout_p
        # (cin, cout, k, k) -> (cin, k*k*cout), columns = (a, b, o), o fastest.
        w_small = jnp.transpose(w, (0, 2, 3, 1)).reshape(cin, k * k * cout)
        flat += [w_small, gamma.reshape(1, cout), beta.reshape(1, cout)]
        meta.append((g_in, cin, cout, k, act))
        g_in = g_in * k * k
    return flat, tuple(meta), cc_pad


def make_decoder_forward(params, decoder_input_size, pooling_kernels,
                         color_channels):
    """Build a jitted forward; all host-side weight prep is hoisted here."""
    flat, meta, cc_pad = build_layer_inputs(params, pooling_kernels,
                                            color_channels)
    d = decoder_input_size
    k2 = pooling_kernels[1]                  # m2 stride
    k3 = pooling_kernels[0]                  # m3 stride
    g_final = meta[-1][0] * meta[-1][3] ** 2
    c_final = g_final * cc_pad

    # TODO(synk): running_mean / running_var buffer updates (training-only side
    # effect of nn.BatchNorm2d) are not modelled; they do not affect the output.

    @jax.jit
    def forward(x, *weights):
        n = x.size // (256 * d * d)
        # x.view(-1, 256, d, d) -> NHWC rows at the base resolution.
        rows = (x.reshape(n, 256, d, d).transpose(0, 2, 3, 1)
                .reshape(n * d * d, 256))
        out_mat = fused_decoder(rows, weights, meta, c_final)
        # Single un-blocking of the space-to-depth layout, on the tiny output.
        out = out_mat.reshape(n, d, d, k2, k2, k3, k3, cc_pad)
        out = out.transpose(0, 7, 1, 3, 5, 2, 4, 6)   # (n,c,i,a2,a3,j,b2,b3)
        out = out.reshape(n, cc_pad, d * k2 * k3, d * k2 * k3)
        return out[:, :color_channels]                # drop padded channels

    return lambda x: forward(x, *flat)


# ----------------------------- params + pure-JAX reference -------------------

def init_params(key, color_channels, pooling_kernels):
    params = {}
    for name, cin, cout, k, _act in layer_specs(color_channels, pooling_kernels):
        key, k1, k2 = jax.random.split(key, 3)
        bound = 1.0 / float(np.sqrt(cin * k * k))
        w = jax.random.uniform(k1, (cin, cout, k, k), jnp.float32, -bound, bound)
        b = jax.random.uniform(k2, (cout,), jnp.float32, -bound, bound)
        gamma = jnp.ones((cout,), jnp.float32)
        beta = jnp.zeros((cout,), jnp.float32)
        params[name] = (w, b, gamma, beta)
    return params


def reference_forward(x, params, decoder_input_size, pooling_kernels, color_channels):
    """Independent NCHW reference (einsum conv-transpose + jnp batch-norm)."""
    d = decoder_input_size
    n = x.size // (256 * d * d)
    out = x.reshape(n, 256, d, d)
    for name, _cin, _cout, k, act in layer_specs(color_channels, pooling_kernels):
        w, b, gamma, beta = params[name]
        t = jnp.einsum("ncij,coab->noiajb", out, w)
        nn_, co, hh, _, ww, _ = t.shape
        out = t.reshape(nn_, co, hh * k, ww * k) + b[None, :, None, None]
        mean = out.mean(axis=(0, 2, 3))
        var = out.var(axis=(0, 2, 3))
        out = ((out - mean[None, :, None, None])
               / jnp.sqrt(var + _BN_EPS)[None, :, None, None]
               * gamma[None, :, None, None] + beta[None, :, None, None])
        out = jnp.maximum(out, 0.0) if act == "relu" else jax.nn.sigmoid(out)
    return out


# ----------------------------- main ------------------------------------------

if __name__ == "__main__":
    color_channels = 3
    pooling_kernels = (2, 2)
    decoder_input_size = 4
    batch = 2

    key = jax.random.PRNGKey(0)
    kx, kp = jax.random.split(key)
    x = jax.random.normal(
        kx, (batch, 256 * decoder_input_size * decoder_input_size), jnp.float32)
    params = init_params(kp, color_channels, pooling_kernels)

    # Host prep hoisted: build once, call many times through one jit dispatch.
    decoder_forward = make_decoder_forward(
        params, decoder_input_size, pooling_kernels, color_channels)

    out = jax.block_until_ready(decoder_forward(x))

    ref = reference_forward(x, params, decoder_input_size, pooling_kernels,
                            color_channels)
    np.testing.assert_allclose(np.asarray(out), np.asarray(ref),
                               rtol=2e-4, atol=2e-4)

    print("KERNEL_OK")
</pallas_src>

<mosaic_0001>
module attributes {stable_mosaic.version = 11 : i64} {
  func.func @_decoder_kernel(%arg0: i32, %arg1: memref<32x256xf32, #tpu.memory_space<vmem>>, %arg2: memref<256x128xf32, #tpu.memory_space<vmem>>, %arg3: memref<1x128xf32, #tpu.memory_space<vmem>>, %arg4: memref<1x128xf32, #tpu.memory_space<vmem>>, %arg5: memref<128x256xf32, #tpu.memory_space<vmem>>, %arg6: memref<1x64xf32, #tpu.memory_space<vmem>>, %arg7: memref<1x64xf32, #tpu.memory_space<vmem>>, %arg8: memref<64x128xf32, #tpu.memory_space<vmem>>, %arg9: memref<1x32xf32, #tpu.memory_space<vmem>>, %arg10: memref<1x32xf32, #tpu.memory_space<vmem>>, %arg11: memref<32x8xf32, #tpu.memory_space<vmem>>, %arg12: memref<1x8xf32, #tpu.memory_space<vmem>>, %arg13: memref<1x8xf32, #tpu.memory_space<vmem>>, %arg14: memref<32x128xf32, #tpu.memory_space<vmem>>) attributes {dimension_semantics = [#tpu.dimension_semantics<arbitrary>], iteration_bounds = array<i64: 1>, scalar_prefetch = 0 : i64, scratch_operands = 0 : i64, tpu.core_type = #tpu.core_type<tc>, window_params = [{pipeline_mode = #tpu.pipeline_mode<synchronous>, transform_indices = @transform_0, window_bounds = array<i64: 32, 256>}, {pipeline_mode = #tpu.pipeline_mode<synchronous>, transform_indices = @transform_1, window_bounds = array<i64: 256, 128>}, {pipeline_mode = #tpu.pipeline_mode<synchronous>, transform_indices = @transform_2, window_bounds = array<i64: 1, 128>}, {pipeline_mode = #tpu.pipeline_mode<synchronous>, transform_indices = @transform_3, window_bounds = array<i64: 1, 128>}, {pipeline_mode = #tpu.pipeline_mode<synchronous>, transform_indices = @transform_4, window_bounds = array<i64: 128, 256>}, {pipeline_mode = #tpu.pipeline_mode<synchronous>, transform_indices = @transform_5, window_bounds = array<i64: 1, 64>}, {pipeline_mode = #tpu.pipeline_mode<synchronous>, transform_indices = @transform_6, window_bounds = array<i64: 1, 64>}, {pipeline_mode = #tpu.pipeline_mode<synchronous>, transform_indices = @transform_7, window_bounds = array<i64: 64, 128>}, {pipeline_mode = #tpu.pipeline_mode<synchronous>, transform_indices = @transform_8, window_bounds = array<i64: 1, 32>}, {pipeline_mode = #tpu.pipeline_mode<synchronous>, transform_indices = @transform_9, window_bounds = array<i64: 1, 32>}, {pipeline_mode = #tpu.pipeline_mode<synchronous>, transform_indices = @transform_10, window_bounds = array<i64: 32, 8>}, {pipeline_mode = #tpu.pipeline_mode<synchronous>, transform_indices = @transform_11, window_bounds = array<i64: 1, 8>}, {pipeline_mode = #tpu.pipeline_mode<synchronous>, transform_indices = @transform_12, window_bounds = array<i64: 1, 8>}, {pipeline_mode = #tpu.pipeline_mode<synchronous>, transform_indices = @transform_13, window_bounds = array<i64: 32, 128>}]} {
    %c0 = arith.constant 0 : index
    %c0_0 = arith.constant 0 : index
    %0 = vector.load %arg1[%c0, %c0_0] : memref<32x256xf32, #tpu.memory_space<vmem>>, vector<32x256xf32>
    %c0_1 = arith.constant 0 : index
    %c0_2 = arith.constant 0 : index
    %1 = vector.load %arg2[%c0_1, %c0_2] : memref<256x128xf32, #tpu.memory_space<vmem>>, vector<256x128xf32>
    %cst = arith.constant dense<0.000000e+00> : vector<32x128xf32>
    %2 = tpu.matmul %0, %1, %cst {dimension_numbers = #tpu.dot_dimension_numbers<[1], [0], [0], [1], [0, 0, 1, 1], [], []>} : vector<32x256xf32>, vector<256x128xf32>, vector<32x128xf32> -> vector<32x128xf32>
    %cst_3 = arith.constant dense<0.000000e+00> : vector<128xf32>
    %3 = vector.multi_reduction <add>, %2, %cst_3 [0] : vector<32x128xf32> to vector<128xf32>
    %4 = vector.shape_cast %3 : vector<128xf32> to vector<1x128xf32>
    %5 = arith.mulf %2, %2 : vector<32x128xf32>
    %cst_4 = arith.constant dense<0.000000e+00> : vector<128xf32>
    %6 = vector.multi_reduction <add>, %5, %cst_4 [0] : vector<32x128xf32> to vector<128xf32>
    %7 = vector.shape_cast %6 : vector<128xf32> to vector<1x128xf32>
    %cst_5 = arith.constant 3.125000e-02 : f32
    %8 = vector.broadcast %cst_5 : f32 to vector<1x128xf32>
    %9 = arith.mulf %4, %8 : vector<1x128xf32>
    %cst_6 = arith.constant 3.125000e-02 : f32
    %10 = vector.broadcast %cst_6 : f32 to vector<1x128xf32>
    %11 = arith.mulf %7, %10 : vector<1x128xf32>
    %12 = arith.mulf %9, %9 : vector<1x128xf32>
    %13 = arith.subf %11, %12 : vector<1x128xf32>
    %cst_7 = arith.constant 9.99999974E-6 : f32
    %14 = vector.broadcast %cst_7 : f32 to vector<1x128xf32>
    %15 = arith.addf %13, %14 : vector<1x128xf32>
    %16 = math.rsqrt %15 : vector<1x128xf32>
    %c0_8 = arith.constant 0 : index
    %c0_9 = arith.constant 0 : index
    %17 = vector.load %arg3[%c0_8, %c0_9] : memref<1x128xf32, #tpu.memory_space<vmem>>, vector<1x128xf32>
    %18 = arith.mulf %17, %16 : vector<1x128xf32>
    %c0_10 = arith.constant 0 : index
    %c0_11 = arith.constant 0 : index
    %19 = vector.load %arg4[%c0_10, %c0_11] : memref<1x128xf32, #tpu.memory_space<vmem>>, vector<1x128xf32>
    %20 = arith.mulf %9, %18 : vector<1x128xf32>
    %21 = arith.subf %19, %20 : vector<1x128xf32>
    %22 = vector.broadcast %18 : vector<1x128xf32> to vector<32x128xf32>
    %23 = arith.mulf %2, %22 : vector<32x128xf32>
    %24 = vector.broadcast %21 : vector<1x128xf32> to vector<32x128xf32>
    %25 = arith.addf %23, %24 : vector<32x128xf32>
    %cst_12 = arith.constant 0.000000e+00 : f32
    %26 = vector.broadcast %cst_12 : f32 to vector<32x128xf32>
    %27 = arith.maximumf %25, %26 : vector<32x128xf32>
    %c0_13 = arith.constant 0 : index
    %c0_14 = arith.constant 0 : index
    %28 = vector.load %arg5[%c0_13, %c0_14] : memref<128x256xf32, #tpu.memory_space<vmem>>, vector<128x256xf32>
    %cst_15 = arith.constant dense<0.000000e+00> : vector<32x256xf32>
    %29 = tpu.matmul %27, %28, %cst_15 {dimension_numbers = #tpu.dot_dimension_numbers<[1], [0], [0], [1], [0, 0, 1, 1], [], []>} : vector<32x128xf32>, vector<128x256xf32>, vector<32x256xf32> -> vector<32x256xf32>
    %cst_16 = arith.constant dense<0.000000e+00> : vector<256xf32>
    %30 = vector.multi_reduction <add>, %29, %cst_16 [0] : vector<32x256xf32> to vector<256xf32>
    %31 = vector.shape_cast %30 : vector<256xf32> to vector<1x256xf32>
    %32 = arith.mulf %29, %29 : vector<32x256xf32>
    %cst_17 = arith.constant dense<0.000000e+00> : vector<256xf32>
    %33 = vector.multi_reduction <add>, %32, %cst_17 [0] : vector<32x256xf32> to vector<256xf32>
    %34 = vector.shape_cast %33 : vector<256xf32> to vector<1x256xf32>
    %35 = vector.extract_strided_slice %31 {offsets = [0, 0], sizes = [1, 64], strides = [1, 1]} : vector<1x256xf32> to vector<1x64xf32>
    %36 = vector.extract_strided_slice %34 {offsets = [0, 0], sizes = [1, 64], strides = [1, 1]} : vector<1x256xf32> to vector<1x64xf32>
    %37 = vector.extract_strided_slice %31 {offsets = [0, 64], sizes = [1, 64], strides = [1, 1]} : vector<1x256xf32> to vector<1x64xf32>
    %38 = arith.addf %35, %37 : vector<1x64xf32>
    %39 = vector.extract_strided_slice %34 {offsets = [0, 64], sizes = [1, 64], strides = [1, 1]} : vector<1x256xf32> to vector<1x64xf32>
    %40 = arith.addf %36, %39 : vector<1x64xf32>
    %41 = vector.extract_strided_slice %31 {offsets = [0, 128], sizes = [1, 64], strides = [1, 1]} : vector<1x256xf32> to vector<1x64xf32>
    %42 = arith.addf %38, %41 : vector<1x64xf32>
    %43 = vector.extract_strided_slice %34 {offsets = [0, 128], sizes = [1, 64], strides = [1, 1]} : vector<1x256xf32> to vector<1x64xf32>
    %44 = arith.addf %40, %43 : vector<1x64xf32>
    %45 = vector.extract_strided_slice %31 {offsets = [0, 192], sizes = [1, 64], strides = [1, 1]} : vector<1x256xf32> to vector<1x64xf32>
    %46 = arith.addf %42, %45 : vector<1x64xf32>
    %47 = vector.extract_strided_slice %34 {offsets = [0, 192], sizes = [1, 64], strides = [1, 1]} : vector<1x256xf32> to vector<1x64xf32>
    %48 = arith.addf %44, %47 : vector<1x64xf32>
    %cst_18 = arith.constant 7.812500e-03 : f32
    %49 = vector.broadcast %cst_18 : f32 to vector<1x64xf32>
    %50 = arith.mulf %46, %49 : vector<1x64xf32>
    %cst_19 = arith.constant 7.812500e-03 : f32
    %51 = vector.broadcast %cst_19 : f32 to vector<1x64xf32>
    %52 = arith.mulf %48, %51 : vector<1x64xf32>
    %53 = arith.mulf %50, %50 : vector<1x64xf32>
    %54 = arith.subf %52, %53 : vector<1x64xf32>
    %cst_20 = arith.constant 9.99999974E-6 : f32
    %55 = vector.broadcast %cst_20 : f32 to vector<1x64xf32>
    %56 = arith.addf %54, %55 : vector<1x64xf32>
    %57 = math.rsqrt %56 : vector<1x64xf32>
    %c0_21 = arith.constant 0 : index
    %c0_22 = arith.constant 0 : index
    %58 = vector.load %arg6[%c0_21, %c0_22] : memref<1x64xf32, #tpu.memory_space<vmem>>, vector<1x64xf32>
    %59 = arith.mulf %58, %57 : vector<1x64xf32>
    %c0_23 = arith.constant 0 : index
    %c0_24 = arith.constant 0 : index
    %60 = vector.load %arg7[%c0_23, %c0_24] : memref<1x64xf32, #tpu.memory_space<vmem>>, vector<1x64xf32>
    %61 = arith.mulf %50, %59 : vector<1x64xf32>
    %62 = arith.subf %60, %61 : vector<1x64xf32>
    %63 = tpu.concatenate %59, %59, %59, %59 in 1 : vector<1x64xf32>, vector<1x64xf32>, vector<1x64xf32>, vector<1x64xf32> -> vector<1x256xf32>
    %64 = tpu.concatenate %62, %62, %62, %62 in 1 : vector<1x64xf32>, vector<1x64xf32>, vector<1x64xf32>, vector<1x64xf32> -> vector<1x256xf32>
    %65 = vector.broadcast %63 : vector<1x256xf32> to vector<32x256xf32>
    %66 = arith.mulf %29, %65 : vector<32x256xf32>
    %67 = vector.broadcast %64 : vector<1x256xf32> to vector<32x256xf32>
    %68 = arith.addf %66, %67 : vector<32x256xf32>
    %cst_25 = arith.constant 0.000000e+00 : f32
    %69 = vector.broadcast %cst_25 : f32 to vector<32x256xf32>
    %70 = arith.maximumf %68, %69 : vector<32x256xf32>
    %c0_26 = arith.constant 0 : index
    %c0_27 = arith.constant 0 : index
    %71 = vector.load %arg8[%c0_26, %c0_27] : memref<64x128xf32, #tpu.memory_space<vmem>>, vector<64x128xf32>
    %72 = vector.extract_strided_slice %70 {offsets = [0, 0], sizes = [32, 64], strides = [1, 1]} : vector<32x256xf32> to vector<32x64xf32>
    %cst_28 = arith.constant dense<0.000000e+00> : vector<32x128xf32>
    %73 = tpu.matmul %72, %71, %cst_28 {dimension_numbers = #tpu.dot_dimension_numbers<[1], [0], [0], [1], [0, 0, 1, 1], [], []>} : vector<32x64xf32>, vector<64x128xf32>, vector<32x128xf32> -> vector<32x128xf32>
    %74 = vector.extract_strided_slice %70 {offsets = [0, 64], sizes = [32, 64], strides = [1, 1]} : vector<32x256xf32> to vector<32x64xf32>
    %cst_29 = arith.constant dense<0.000000e+00> : vector<32x128xf32>
    %75 = tpu.matmul %74, %71, %cst_29 {dimension_numbers = #tpu.dot_dimension_numbers<[1], [0], [0], [1], [0, 0, 1, 1], [], []>} : vector<32x64xf32>, vector<64x128xf32>, vector<32x128xf32> -> vector<32x128xf32>
    %76 = vector.extract_strided_slice %70 {offsets = [0, 128], sizes = [32, 64], strides = [1, 1]} : vector<32x256xf32> to vector<32x64xf32>
    %cst_30 = arith.constant dense<0.000000e+00> : vector<32x128xf32>
    %77 = tpu.matmul %76, %71, %cst_30 {dimension_numbers = #tpu.dot_dimension_numbers<[1], [0], [0], [1], [0, 0, 1, 1], [], []>} : vector<32x64xf32>, vector<64x128xf32>, vector<32x128xf32> -> vector<32x128xf32>
    %78 = vector.extract_strided_slice %70 {offsets = [0, 192], sizes = [32, 64], strides = [1, 1]} : vector<32x256xf32> to vector<32x64xf32>
    %cst_31 = arith.constant dense<0.000000e+00> : vector<32x128xf32>
    %79 = tpu.matmul %78, %71, %cst_31 {dimension_numbers = #tpu.dot_dimension_numbers<[1], [0], [0], [1], [0, 0, 1, 1], [], []>} : vector<32x64xf32>, vector<64x128xf32>, vector<32x128xf32> -> vector<32x128xf32>
    %80 = tpu.concatenate %73, %75, %77, %79 in 1 : vector<32x128xf32>, vector<32x128xf32>, vector<32x128xf32>, vector<32x128xf32> -> vector<32x512xf32>
    %cst_32 = arith.constant dense<0.000000e+00> : vector<512xf32>
    %81 = vector.multi_reduction <add>, %80, %cst_32 [0] : vector<32x512xf32> to vector<512xf32>
    %82 = vector.shape_cast %81 : vector<512xf32> to vector<1x512xf32>
    %83 = arith.mulf %80, %80 : vector<32x512xf32>
    %cst_33 = arith.constant dense<0.000000e+00> : vector<512xf32>
    %84 = vector.multi_reduction <add>, %83, %cst_33 [0] : vector<32x512xf32> to vector<512xf32>
    %85 = vector.shape_cast %84 : vector<512xf32> to vector<1x512xf32>
    %86 = vector.extract_strided_slice %82 {offsets = [0, 0], sizes = [1, 32], strides = [1, 1]} : vector<1x512xf32> to vector<1x32xf32>
    %87 = vector.extract_strided_slice %85 {offsets = [0, 0], sizes = [1, 32], strides = [1, 1]} : vector<1x512xf32> to vector<1x32xf32>
    %88 = vector.extract_strided_slice %82 {offsets = [0, 32], sizes = [1, 32], strides = [1, 1]} : vector<1x512xf32> to vector<1x32xf32>
    %89 = arith.addf %86, %88 : vector<1x32xf32>
    %90 = vector.extract_strided_slice %85 {offsets = [0, 32], sizes = [1, 32], strides = [1, 1]} : vector<1x512xf32> to vector<1x32xf32>
    %91 = arith.addf %87, %90 : vector<1x32xf32>
    %92 = vector.extract_strided_slice %82 {offsets = [0, 64], sizes = [1, 32], strides = [1, 1]} : vector<1x512xf32> to vector<1x32xf32>
    %93 = arith.addf %89, %92 : vector<1x32xf32>
    %94 = vector.extract_strided_slice %85 {offsets = [0, 64], sizes = [1, 32], strides = [1, 1]} : vector<1x512xf32> to vector<1x32xf32>
    %95 = arith.addf %91, %94 : vector<1x32xf32>
    %96 = vector.extract_strided_slice %82 {offsets = [0, 96], sizes = [1, 32], strides = [1, 1]} : vector<1x512xf32> to vector<1x32xf32>
    %97 = arith.addf %93, %96 : vector<1x32xf32>
    %98 = vector.extract_strided_slice %85 {offsets = [0, 96], sizes = [1, 32], strides = [1, 1]} : vector<1x512xf32> to vector<1x32xf32>
    %99 = arith.addf %95, %98 : vector<1x32xf32>
    %100 = vector.extract_strided_slice %82 {offsets = [0, 128], sizes = [1, 32], strides = [1, 1]} : vector<1x512xf32> to vector<1x32xf32>
    %101 = arith.addf %97, %100 : vector<1x32xf32>
    %102 = vector.extract_strided_slice %85 {offsets = [0, 128], sizes = [1, 32], strides = [1, 1]} : vector<1x512xf32> to vector<1x32xf32>
    %103 = arith.addf %99, %102 : vector<1x32xf32>
    %104 = vector.extract_strided_slice %82 {offsets = [0, 160], sizes = [1, 32], strides = [1, 1]} : vector<1x512xf32> to vector<1x32xf32>
    %105 = arith.addf %101, %104 : vector<1x32xf32>
    %106 = vector.extract_strided_slice %85 {offsets = [0, 160], sizes = [1, 32], strides = [1, 1]} : vector<1x512xf32> to vector<1x32xf32>
    %107 = arith.addf %103, %106 : vector<1x32xf32>
    %108 = vector.extract_strided_slice %82 {offsets = [0, 192], sizes = [1, 32], strides = [1, 1]} : vector<1x512xf32> to vector<1x32xf32>
    %109 = arith.addf %105, %108 : vector<1x32xf32>
    %110 = vector.extract_strided_slice %85 {offsets = [0, 192], sizes = [1, 32], strides = [1, 1]} : vector<1x512xf32> to vector<1x32xf32>
    %111 = arith.addf %107, %110 : vector<1x32xf32>
    %112 = vector.extract_strided_slice %82 {offsets = [0, 224], sizes = [1, 32], strides = [1, 1]} : vector<1x512xf32> to vector<1x32xf32>
    %113 = arith.addf %109, %112 : vector<1x32xf32>
    %114 = vector.extract_strided_slice %85 {offsets = [0, 224], sizes = [1, 32], strides = [1, 1]} : vector<1x512xf32> to vector<1x32xf32>
    %115 = arith.addf %111, %114 : vector<1x32xf32>
    %116 = vector.extract_strided_slice %82 {offsets = [0, 256], sizes = [1, 32], strides = [1, 1]} : vector<1x512xf32> to vector<1x32xf32>
    %117 = arith.addf %113, %116 : vector<1x32xf32>
    %118 = vector.extract_strided_slice %85 {offsets = [0, 256], sizes = [1, 32], strides = [1, 1]} : vector<1x512xf32> to vector<1x32xf32>
    %119 = arith.addf %115, %118 : vector<1x32xf32>
    %120 = vector.extract_strided_slice %82 {offsets = [0, 288], sizes = [1, 32], strides = [1, 1]} : vector<1x512xf32> to vector<1x32xf32>
    %121 = arith.addf %117, %120 : vector<1x32xf32>
    %122 = vector.extract_strided_slice %85 {offsets = [0, 288], sizes = [1, 32], strides = [1, 1]} : vector<1x512xf32> to vector<1x32xf32>
    %123 = arith.addf %119, %122 : vector<1x32xf32>
    %124 = vector.extract_strided_slice %82 {offsets = [0, 320], sizes = [1, 32], strides = [1, 1]} : vector<1x512xf32> to vector<1x32xf32>
    %125 = arith.addf %121, %124 : vector<1x32xf32>
    %126 = vector.extract_strided_slice %85 {offsets = [0, 320], sizes = [1, 32], strides = [1, 1]} : vector<1x512xf32> to vector<1x32xf32>
    %127 = arith.addf %123, %126 : vector<1x32xf32>
    %128 = vector.extract_strided_slice %82 {offsets = [0, 352], sizes = [1, 32], strides = [1, 1]} : vector<1x512xf32> to vector<1x32xf32>
    %129 = arith.addf %125, %128 : vector<1x32xf32>
    %130 = vector.extract_strided_slice %85 {offsets = [0, 352], sizes = [1, 32], strides = [1, 1]} : vector<1x512xf32> to vector<1x32xf32>
    %131 = arith.addf %127, %130 : vector<1x32xf32>
    %132 = vector.extract_strided_slice %82 {offsets = [0, 384], sizes = [1, 32], strides = [1, 1]} : vector<1x512xf32> to vector<1x32xf32>
    %133 = arith.addf %129, %132 : vector<1x32xf32>
    %134 = vector.extract_strided_slice %85 {offsets = [0, 384], sizes = [1, 32], strides = [1, 1]} : vector<1x512xf32> to vector<1x32xf32>
    %135 = arith.addf %131, %134 : vector<1x32xf32>
    %136 = vector.extract_strided_slice %82 {offsets = [0, 416], sizes = [1, 32], strides = [1, 1]} : vector<1x512xf32> to vector<1x32xf32>
    %137 = arith.addf %133, %136 : vector<1x32xf32>
    %138 = vector.extract_strided_slice %85 {offsets = [0, 416], sizes = [1, 32], strides = [1, 1]} : vector<1x512xf32> to vector<1x32xf32>
    %139 = arith.addf %135, %138 : vector<1x32xf32>
    %140 = vector.extract_strided_slice %82 {offsets = [0, 448], sizes = [1, 32], strides = [1, 1]} : vector<1x512xf32> to vector<1x32xf32>
    %141 = arith.addf %137, %140 : vector<1x32xf32>
    %142 = vector.extract_strided_slice %85 {offsets = [0, 448], sizes = [1, 32], strides = [1, 1]} : vector<1x512xf32> to vector<1x32xf32>
    %143 = arith.addf %139, %142 : vector<1x32xf32>
    %144 = vector.extract_strided_slice %82 {offsets = [0, 480], sizes = [1, 32], strides = [1, 1]} : vector<1x512xf32> to vector<1x32xf32>
    %145 = arith.addf %141, %144 : vector<1x32xf32>
    %146 = vector.extract_strided_slice %85 {offsets = [0, 480], sizes = [1, 32], strides = [1, 1]} : vector<1x512xf32> to vector<1x32xf32>
    %147 = arith.addf %143, %146 : vector<1x32xf32>
    %cst_34 = arith.constant 0.001953125 : f32
    %148 = vector.broadcast %cst_34 : f32 to vector<1x32xf32>
    %149 = arith.mulf %145, %148 : vector<1x32xf32>
    %cst_35 = arith.constant 0.001953125 : f32
    %150 = vector.broadcast %cst_35 : f32 to vector<1x32xf32>
    %151 = arith.mulf %147, %150 : vector<1x32xf32>
    %152 = arith.mulf %149, %149 : vector<1x32xf32>
    %153 = arith.subf %151, %152 : vector<1x32xf32>
    %cst_36 = arith.constant 9.99999974E-6 : f32
    %154 = vector.broadcast %cst_36 : f32 to vector<1x32xf32>
    %155 = arith.addf %153, %154 : vector<1x32xf32>
    %156 = math.rsqrt %155 : vector<1x32xf32>
    %c0_37 = arith.constant 0 : index
    %c0_38 = arith.constant 0 : index
    %157 = vector.load %arg9[%c0_37, %c0_38] : memref<1x32xf32, #tpu.memory_space<vmem>>, vector<1x32xf32>
    %158 = arith.mulf %157, %156 : vector<1x32xf32>
    %c0_39 = arith.constant 0 : index
    %c0_40 = arith.constant 0 : index
    %159 = vector.load %arg10[%c0_39, %c0_40] : memref<1x32xf32, #tpu.memory_space<vmem>>, vector<1x32xf32>
    %160 = arith.mulf %149, %158 : vector<1x32xf32>
    %161 = arith.subf %159, %160 : vector<1x32xf32>
    %162 = tpu.concatenate %158, %158, %158, %158, %158, %158, %158, %158, %158, %158, %158, %158, %158, %158, %158, %158 in 1 : vector<1x32xf32>, vector<1x32xf32>, vector<1x32xf32>, vector<1x32xf32>, vector<1x32xf32>, vector<1x32xf32>, vector<1x32xf32>, vector<1x32xf32>, vector<1x32xf32>, vector<1x32xf32>, vector<1x32xf32>, vector<1x32xf32>, vector<1x32xf32>, vector<1x32xf32>, vector<1x32xf32>, vector<1x32xf32> -> vector<1x512xf32>
    %163 = tpu.concatenate %161, %161, %161, %161, %161, %161, %161, %161, %161, %161, %161, %161, %161, %161, %161, %161 in 1 : vector<1x32xf32>, vector<1x32xf32>, vector<1x32xf32>, vector<1x32xf32>, vector<1x32xf32>, vector<1x32xf32>, vector<1x32xf32>, vector<1x32xf32>, vector<1x32xf32>, vector<1x32xf32>, vector<1x32xf32>, vector<1x32xf32>, vector<1x32xf32>, vector<1x32xf32>, vector<1x32xf32>, vector<1x32xf32> -> vector<1x512xf32>
    %164 = vector.broadcast %162 : vector<1x512xf32> to vector<32x512xf32>
    %165 = arith.mulf %80, %164 : vector<32x512xf32>
    %166 = vector.broadcast %163 : vector<1x512xf32> to vector<32x512xf32>
    %167 = arith.addf %165, %166 : vector<32x512xf32>
    %cst_41 = arith.constant 0.000000e+00 : f32
    %168 = vector.broadcast %cst_41 : f32 to vector<32x512xf32>
    %169 = arith.maximumf %167, %168 : vector<32x512xf32>
    %c0_42 = arith.constant 0 : index
    %c0_43 = arith.constant 0 : index
    %170 = vector.load %arg11[%c0_42, %c0_43] : memref<32x8xf32, #tpu.memory_space<vmem>>, vector<32x8xf32>
    %171 = vector.extract_strided_slice %169 {offsets = [0, 0], sizes = [32, 32], strides = [1, 1]} : vector<32x512xf32> to vector<32x32xf32>
    %cst_44 = arith.constant dense<0.000000e+00> : vector<32x8xf32>
    %172 = tpu.matmul %171, %170, %cst_44 {dimension_numbers = #tpu.dot_dimension_numbers<[1], [0], [0], [1], [0, 0, 1, 1], [], []>} : vector<32x32xf32>, vector<32x8xf32>, vector<32x8xf32> -> vector<32x8xf32>
    %173 = vector.extract_strided_slice %169 {offsets = [0, 32], sizes = [32, 32], strides = [1, 1]} : vector<32x512xf32> to vector<32x32xf32>
    %cst_45 = arith.constant dense<0.000000e+00> : vector<32x8xf32>
    %174 = tpu.matmul %173, %170, %cst_45 {dimension_numbers = #tpu.dot_dimension_numbers<[1], [0], [0], [1], [0, 0, 1, 1], [], []>} : vector<32x32xf32>, vector<32x8xf32>, vector<32x8xf32> -> vector<32x8xf32>
    %175 = vector.extract_strided_slice %169 {offsets = [0, 64], sizes = [32, 32], strides = [1, 1]} : vector<32x512xf32> to vector<32x32xf32>
    %cst_46 = arith.constant dense<0.000000e+00> : vector<32x8xf32>
    %176 = tpu.matmul %175, %170, %cst_46 {dimension_numbers = #tpu.dot_dimension_numbers<[1], [0], [0], [1], [0, 0, 1, 1], [], []>} : vector<32x32xf32>, vector<32x8xf32>, vector<32x8xf32> -> vector<32x8xf32>
    %177 = vector.extract_strided_slice %169 {offsets = [0, 96], sizes = [32, 32], strides = [1, 1]} : vector<32x512xf32> to vector<32x32xf32>
    %cst_47 = arith.constant dense<0.000000e+00> : vector<32x8xf32>
    %178 = tpu.matmul %177, %170, %cst_47 {dimension_numbers = #tpu.dot_dimension_numbers<[1], [0], [0], [1], [0, 0, 1, 1], [], []>} : vector<32x32xf32>, vector<32x8xf32>, vector<32x8xf32> -> vector<32x8xf32>
    %179 = vector.extract_strided_slice %169 {offsets = [0, 128], sizes = [32, 32], strides = [1, 1]} : vector<32x512xf32> to vector<32x32xf32>
    %cst_48 = arith.constant dense<0.000000e+00> : vector<32x8xf32>
    %180 = tpu.matmul %179, %170, %cst_48 {dimension_numbers = #tpu.dot_dimension_numbers<[1], [0], [0], [1], [0, 0, 1, 1], [], []>} : vector<32x32xf32>, vector<32x8xf32>, vector<32x8xf32> -> vector<32x8xf32>
    %181 = vector.extract_strided_slice %169 {offsets = [0, 160], sizes = [32, 32], strides = [1, 1]} : vector<32x512xf32> to vector<32x32xf32>
    %cst_49 = arith.constant dense<0.000000e+00> : vector<32x8xf32>
    %182 = tpu.matmul %181, %170, %cst_49 {dimension_numbers = #tpu.dot_dimension_numbers<[1], [0], [0], [1], [0, 0, 1, 1], [], []>} : vector<32x32xf32>, vector<32x8xf32>, vector<32x8xf32> -> vector<32x8xf32>
    %183 = vector.extract_strided_slice %169 {offsets = [0, 192], sizes = [32, 32], strides = [1, 1]} : vector<32x512xf32> to vector<32x32xf32>
    %cst_50 = arith.constant dense<0.000000e+00> : vector<32x8xf32>
    %184 = tpu.matmul %183, %170, %cst_50 {dimension_numbers = #tpu.dot_dimension_numbers<[1], [0], [0], [1], [0, 0, 1, 1], [], []>} : vector<32x32xf32>, vector<32x8xf32>, vector<32x8xf32> -> vector<32x8xf32>
    %185 = vector.extract_strided_slice %169 {offsets = [0, 224], sizes = [32, 32], strides = [1, 1]} : vector<32x512xf32> to vector<32x32xf32>
    %cst_51 = arith.constant dense<0.000000e+00> : vector<32x8xf32>
    %186 = tpu.matmul %185, %170, %cst_51 {dimension_numbers = #tpu.dot_dimension_numbers<[1], [0], [0], [1], [0, 0, 1, 1], [], []>} : vector<32x32xf32>, vector<32x8xf32>, vector<32x8xf32> -> vector<32x8xf32>
    %187 = vector.extract_strided_slice %169 {offsets = [0, 256], sizes = [32, 32], strides = [1, 1]} : vector<32x512xf32> to vector<32x32xf32>
    %cst_52 = arith.constant dense<0.000000e+00> : vector<32x8xf32>
    %188 = tpu.matmul %187, %170, %cst_52 {dimension_numbers = #tpu.dot_dimension_numbers<[1], [0], [0], [1], [0, 0, 1, 1], [], []>} : vector<32x32xf32>, vector<32x8xf32>, vector<32x8xf32> -> vector<32x8xf32>
    %189 = vector.extract_strided_slice %169 {offsets = [0, 288], sizes = [32, 32], strides = [1, 1]} : vector<32x512xf32> to vector<32x32xf32>
    %cst_53 = arith.constant dense<0.000000e+00> : vector<32x8xf32>
    %190 = tpu.matmul %189, %170, %cst_53 {dimension_numbers = #tpu.dot_dimension_numbers<[1], [0], [0], [1], [0, 0, 1, 1], [], []>} : vector<32x32xf32>, vector<32x8xf32>, vector<32x8xf32> -> vector<32x8xf32>
    %191 = vector.extract_strided_slice %169 {offsets = [0, 320], sizes = [32, 32], strides = [1, 1]} : vector<32x512xf32> to vector<32x32xf32>
    %cst_54 = arith.constant dense<0.000000e+00> : vector<32x8xf32>
    %192 = tpu.matmul %191, %170, %cst_54 {dimension_numbers = #tpu.dot_dimension_numbers<[1], [0], [0], [1], [0, 0, 1, 1], [], []>} : vector<32x32xf32>, vector<32x8xf32>, vector<32x8xf32> -> vector<32x8xf32>
    %193 = vector.extract_strided_slice %169 {offsets = [0, 352], sizes = [32, 32], strides = [1, 1]} : vector<32x512xf32> to vector<32x32xf32>
    %cst_55 = arith.constant dense<0.000000e+00> : vector<32x8xf32>
    %194 = tpu.matmul %193, %170, %cst_55 {dimension_numbers = #tpu.dot_dimension_numbers<[1], [0], [0], [1], [0, 0, 1, 1], [], []>} : vector<32x32xf32>, vector<32x8xf32>, vector<32x8xf32> -> vector<32x8xf32>
    %195 = vector.extract_strided_slice %169 {offsets = [0, 384], sizes = [32, 32], strides = [1, 1]} : vector<32x512xf32> to vector<32x32xf32>
    %cst_56 = arith.constant dense<0.000000e+00> : vector<32x8xf32>
    %196 = tpu.matmul %195, %170, %cst_56 {dimension_numbers = #tpu.dot_dimension_numbers<[1], [0], [0], [1], [0, 0, 1, 1], [], []>} : vector<32x32xf32>, vector<32x8xf32>, vector<32x8xf32> -> vector<32x8xf32>
    %197 = vector.extract_strided_slice %169 {offsets = [0, 416], sizes = [32, 32], strides = [1, 1]} : vector<32x512xf32> to vector<32x32xf32>
    %cst_57 = arith.constant dense<0.000000e+00> : vector<32x8xf32>
    %198 = tpu.matmul %197, %170, %cst_57 {dimension_numbers = #tpu.dot_dimension_numbers<[1], [0], [0], [1], [0, 0, 1, 1], [], []>} : vector<32x32xf32>, vector<32x8xf32>, vector<32x8xf32> -> vector<32x8xf32>
    %199 = vector.extract_strided_slice %169 {offsets = [0, 448], sizes = [32, 32], strides = [1, 1]} : vector<32x512xf32> to vector<32x32xf32>
    %cst_58 = arith.constant dense<0.000000e+00> : vector<32x8xf32>
    %200 = tpu.matmul %199, %170, %cst_58 {dimension_numbers = #tpu.dot_dimension_numbers<[1], [0], [0], [1], [0, 0, 1, 1], [], []>} : vector<32x32xf32>, vector<32x8xf32>, vector<32x8xf32> -> vector<32x8xf32>
    %201 = vector.extract_strided_slice %169 {offsets = [0, 480], sizes = [32, 32], strides = [1, 1]} : vector<32x512xf32> to vector<32x32xf32>
    %cst_59 = arith.constant dense<0.000000e+00> : vector<32x8xf32>
    %202 = tpu.matmul %201, %170, %cst_59 {dimension_numbers = #tpu.dot_dimension_numbers<[1], [0], [0], [1], [0, 0, 1, 1], [], []>} : vector<32x32xf32>, vector<32x8xf32>, vector<32x8xf32> -> vector<32x8xf32>
    %203 = tpu.concatenate %172, %174, %176, %178, %180, %182, %184, %186, %188, %190, %192, %194, %196, %198, %200, %202 in 1 : vector<32x8xf32>, vector<32x8xf32>, vector<32x8xf32>, vector<32x8xf32>, vector<32x8xf32>, vector<32x8xf32>, vector<32x8xf32>, vector<32x8xf32>, vector<32x8xf32>, vector<32x8xf32>, vector<32x8xf32>, vector<32x8xf32>, vector<32x8xf32>, vector<32x8xf32>, vector<32x8xf32>, vector<32x8xf32> -> vector<32x128xf32>
    %cst_60 = arith.constant dense<0.000000e+00> : vector<128xf32>
    %204 = vector.multi_reduction <add>, %203, %cst_60 [0] : vector<32x128xf32> to vector<128xf32>
    %205 = vector.shape_cast %204 : vector<128xf32> to vector<1x128xf32>
    %206 = arith.mulf %203, %203 : vector<32x128xf32>
    %cst_61 = arith.constant dense<0.000000e+00> : vector<128xf32>
    %207 = vector.multi_reduction <add>, %206, %cst_61 [0] : vector<32x128xf32> to vector<128xf32>
    %208 = vector.shape_cast %207 : vector<128xf32> to vector<1x128xf32>
    %209 = vector.extract_strided_slice %205 {offsets = [0, 0], sizes = [1, 8], strides = [1, 1]} : vector<1x128xf32> to vector<1x8xf32>
    %210 = vector.extract_strided_slice %208 {offsets = [0, 0], sizes = [1, 8], strides = [1, 1]} : vector<1x128xf32> to vector<1x8xf32>
    %211 = vector.extract_strided_slice %205 {offsets = [0, 8], sizes = [1, 8], strides = [1, 1]} : vector<1x128xf32> to vector<1x8xf32>
    %212 = arith.addf %209, %211 : vector<1x8xf32>
    %213 = vector.extract_strided_slice %208 {offsets = [0, 8], sizes = [1, 8], strides = [1, 1]} : vector<1x128xf32> to vector<1x8xf32>
    %214 = arith.addf %210, %213 : vector<1x8xf32>
    %215 = vector.extract_strided_slice %205 {offsets = [0, 16], sizes = [1, 8], strides = [1, 1]} : vector<1x128xf32> to vector<1x8xf32>
    %216 = arith.addf %212, %215 : vector<1x8xf32>
    %217 = vector.extract_strided_slice %208 {offsets = [0, 16], sizes = [1, 8], strides = [1, 1]} : vector<1x128xf32> to vector<1x8xf32>
    %218 = arith.addf %214, %217 : vector<1x8xf32>
    %219 = vector.extract_strided_slice %205 {offsets = [0, 24], sizes = [1, 8], strides = [1, 1]} : vector<1x128xf32> to vector<1x8xf32>
    %220 = arith.addf %216, %219 : vector<1x8xf32>
    %221 = vector.extract_strided_slice %208 {offsets = [0, 24], sizes = [1, 8], strides = [1, 1]} : vector<1x128xf32> to vector<1x8xf32>
    %222 = arith.addf %218, %221 : vector<1x8xf32>
    %223 = vector.extract_strided_slice %205 {offsets = [0, 32], sizes = [1, 8], strides = [1, 1]} : vector<1x128xf32> to vector<1x8xf32>
    %224 = arith.addf %220, %223 : vector<1x8xf32>
    %225 = vector.extract_strided_slice %208 {offsets = [0, 32], sizes = [1, 8], strides = [1, 1]} : vector<1x128xf32> to vector<1x8xf32>
    %226 = arith.addf %222, %225 : vector<1x8xf32>
    %227 = vector.extract_strided_slice %205 {offsets = [0, 40], sizes = [1, 8], strides = [1, 1]} : vector<1x128xf32> to vector<1x8xf32>
    %228 = arith.addf %224, %227 : vector<1x8xf32>
    %229 = vector.extract_strided_slice %208 {offsets = [0, 40], sizes = [1, 8], strides = [1, 1]} : vector<1x128xf32> to vector<1x8xf32>
    %230 = arith.addf %226, %229 : vector<1x8xf32>
    %231 = vector.extract_strided_slice %205 {offsets = [0, 48], sizes = [1, 8], strides = [1, 1]} : vector<1x128xf32> to vector<1x8xf32>
    %232 = arith.addf %228, %231 : vector<1x8xf32>
    %233 = vector.extract_strided_slice %208 {offsets = [0, 48], sizes = [1, 8], strides = [1, 1]} : vector<1x128xf32> to vector<1x8xf32>
    %234 = arith.addf %230, %233 : vector<1x8xf32>
    %235 = vector.extract_strided_slice %205 {offsets = [0, 56], sizes = [1, 8], strides = [1, 1]} : vector<1x128xf32> to vector<1x8xf32>
    %236 = arith.addf %232, %235 : vector<1x8xf32>
    %237 = vector.extract_strided_slice %208 {offsets = [0, 56], sizes = [1, 8], strides = [1, 1]} : vector<1x128xf32> to vector<1x8xf32>
    %238 = arith.addf %234, %237 : vector<1x8xf32>
    %239 = vector.extract_strided_slice %205 {offsets = [0, 64], sizes = [1, 8], strides = [1, 1]} : vector<1x128xf32> to vector<1x8xf32>
    %240 = arith.addf %236, %239 : vector<1x8xf32>
    %241 = vector.extract_strided_slice %208 {offsets = [0, 64], sizes = [1, 8], strides = [1, 1]} : vector<1x128xf32> to vector<1x8xf32>
    %242 = arith.addf %238, %241 : vector<1x8xf32>
    %243 = vector.extract_strided_slice %205 {offsets = [0, 72], sizes = [1, 8], strides = [1, 1]} : vector<1x128xf32> to vector<1x8xf32>
    %244 = arith.addf %240, %243 : vector<1x8xf32>
    %245 = vector.extract_strided_slice %208 {offsets = [0, 72], sizes = [1, 8], strides = [1, 1]} : vector<1x128xf32> to vector<1x8xf32>
    %246 = arith.addf %242, %245 : vector<1x8xf32>
    %247 = vector.extract_strided_slice %205 {offsets = [0, 80], sizes = [1, 8], strides = [1, 1]} : vector<1x128xf32> to vector<1x8xf32>
    %248 = arith.addf %244, %247 : vector<1x8xf32>
    %249 = vector.extract_strided_slice %208 {offsets = [0, 80], sizes = [1, 8], strides = [1, 1]} : vector<1x128xf32> to vector<1x8xf32>
    %250 = arith.addf %246, %249 : vector<1x8xf32>
    %251 = vector.extract_strided_slice %205 {offsets = [0, 88], sizes = [1, 8], strides = [1, 1]} : vector<1x128xf32> to vector<1x8xf32>
    %252 = arith.addf %248, %251 : vector<1x8xf32>
    %253 = vector.extract_strided_slice %208 {offsets = [0, 88], sizes = [1, 8], strides = [1, 1]} : vector<1x128xf32> to vector<1x8xf32>
    %254 = arith.addf %250, %253 : vector<1x8xf32>
    %255 = vector.extract_strided_slice %205 {offsets = [0, 96], sizes = [1, 8], strides = [1, 1]} : vector<1x128xf32> to vector<1x8xf32>
    %256 = arith.addf %252, %255 : vector<1x8xf32>
    %257 = vector.extract_strided_slice %208 {offsets = [0, 96], sizes = [1, 8], strides = [1, 1]} : vector<1x128xf32> to vector<1x8xf32>
    %258 = arith.addf %254, %257 : vector<1x8xf32>
    %259 = vector.extract_strided_slice %205 {offsets = [0, 104], sizes = [1, 8], strides = [1, 1]} : vector<1x128xf32> to vector<1x8xf32>
    %260 = arith.addf %256, %259 : vector<1x8xf32>
    %261 = vector.extract_strided_slice %208 {offsets = [0, 104], sizes = [1, 8], strides = [1, 1]} : vector<1x128xf32> to vector<1x8xf32>
    %262 = arith.addf %258, %261 : vector<1x8xf32>
    %263 = vector.extract_strided_slice %205 {offsets = [0, 112], sizes = [1, 8], strides = [1, 1]} : vector<1x128xf32> to vector<1x8xf32>
    %264 = arith.addf %260, %263 : vector<1x8xf32>
    %265 = vector.extract_strided_slice %208 {offsets = [0, 112], sizes = [1, 8], strides = [1, 1]} : vector<1x128xf32> to vector<1x8xf32>
    %266 = arith.addf %262, %265 : vector<1x8xf32>
    %267 = vector.extract_strided_slice %205 {offsets = [0, 120], sizes = [1, 8], strides = [1, 1]} : vector<1x128xf32> to vector<1x8xf32>
    %268 = arith.addf %264, %267 : vector<1x8xf32>
    %269 = vector.extract_strided_slice %208 {offsets = [0, 120], sizes = [1, 8], strides = [1, 1]} : vector<1x128xf32> to vector<1x8xf32>
    %270 = arith.addf %266, %269 : vector<1x8xf32>
    %cst_62 = arith.constant 0.001953125 : f32
    %271 = vector.broadcast %cst_62 : f32 to vector<1x8xf32>
    %272 = arith.mulf %268, %271 : vector<1x8xf32>
    %cst_63 = arith.constant 0.001953125 : f32
    %273 = vector.broadcast %cst_63 : f32 to vector<1x8xf32>
    %274 = arith.mulf %270, %273 : vector<1x8xf32>
    %275 = arith.mulf %272, %272 : vector<1x8xf32>
    %276 = arith.subf %274, %275 : vector<1x8xf32>
    %cst_64 = arith.constant 9.99999974E-6 : f32
    %277 = vector.broadcast %cst_64 : f32 to vector<1x8xf32>
    %278 = arith.addf %276, %277 : vector<1x8xf32>
    %279 = math.rsqrt %278 : vector<1x8xf32>
    %c0_65 = arith.constant 0 : index
    %c0_66 = arith.constant 0 : index
    %280 = vector.load %arg12[%c0_65, %c0_66] : memref<1x8xf32, #tpu.memory_space<vmem>>, vector<1x8xf32>
    %281 = arith.mulf %280, %279 : vector<1x8xf32>
    %c0_67 = arith.constant 0 : index
    %c0_68 = arith.constant 0 : index
    %282 = vector.load %arg13[%c0_67, %c0_68] : memref<1x8xf32, #tpu.memory_space<vmem>>, vector<1x8xf32>
    %283 = arith.mulf %272, %281 : vector<1x8xf32>
    %284 = arith.subf %282, %283 : vector<1x8xf32>
    %285 = tpu.concatenate %281, %281, %281, %281, %281, %281, %281, %281, %281, %281, %281, %281, %281, %281, %281, %281 in 1 : vector<1x8xf32>, vector<1x8xf32>, vector<1x8xf32>, vector<1x8xf32>, vector<1x8xf32>, vector<1x8xf32>, vector<1x8xf32>, vector<1x8xf32>, vector<1x8xf32>, vector<1x8xf32>, vector<1x8xf32>, vector<1x8xf32>, vector<1x8xf32>, vector<1x8xf32>, vector<1x8xf32>, vector<1x8xf32> -> vector<1x128xf32>
    %286 = tpu.concatenate %284, %284, %284, %284, %284, %284, %284, %284, %284, %284, %284, %284, %284, %284, %284, %284 in 1 : vector<1x8xf32>, vector<1x8xf32>, vector<1x8xf32>, vector<1x8xf32>, vector<1x8xf32>, vector<1x8xf32>, vector<1x8xf32>, vector<1x8xf32>, vector<1x8xf32>, vector<1x8xf32>, vector<1x8xf32>, vector<1x8xf32>, vector<1x8xf32>, vector<1x8xf32>, vector<1x8xf32>, vector<1x8xf32> -> vector<1x128xf32>
    %287 = vector.broadcast %285 : vector<1x128xf32> to vector<32x128xf32>
    %288 = arith.mulf %203, %287 : vector<32x128xf32>
    %289 = vector.broadcast %286 : vector<1x128xf32> to vector<32x128xf32>
    %290 = arith.addf %288, %289 : vector<32x128xf32>
    %291 = arith.negf %290 : vector<32x128xf32>
    %292 = math.exp %291 : vector<32x128xf32>
    %cst_69 = arith.constant 1.000000e+00 : f32
    %293 = vector.broadcast %cst_69 : f32 to vector<32x128xf32>
    %294 = arith.addf %293, %292 : vector<32x128xf32>
    %295 = arith.divf %293, %294 : vector<32x128xf32>
    %c0_70 = arith.constant 0 : index
    %c0_71 = arith.constant 0 : index
    %296 = vector.load %arg14[%c0_70, %c0_71] : memref<32x128xf32, #tpu.memory_space<vmem>>, vector<32x128xf32>
    tpu.vector_store %arg14[%c0_70, %c0_71], %295 {strides = array<i32>} : memref<32x128xf32, #tpu.memory_space<vmem>>, vector<32x128xf32>,
    return
  }
  func.func @transform_0(%arg0: i32) -> (i32, i32) {
    %c0_i32 = arith.constant 0 : i32
    %c0_i32_0 = arith.constant 0 : i32
    %c0_i32_1 = arith.constant 0 : i32
    return %c0_i32, %c0_i32_0 : i32, i32
  }
  func.func @transform_1(%arg0: i32) -> (i32, i32) {
    %c0_i32 = arith.constant 0 : i32
    %c0_i32_0 = arith.constant 0 : i32
    %c0_i32_1 = arith.constant 0 : i32
    return %c0_i32, %c0_i32_0 : i32, i32
  }
  func.func @transform_2(%arg0: i32) -> (i32, i32) {
    %c0_i32 = arith.constant 0 : i32
    %c0_i32_0 = arith.constant 0 : i32
    %c0_i32_1 = arith.constant 0 : i32
    return %c0_i32, %c0_i32_0 : i32, i32
  }
  func.func @transform_3(%arg0: i32) -> (i32, i32) {
    %c0_i32 = arith.constant 0 : i32
    %c0_i32_0 = arith.constant 0 : i32
    %c0_i32_1 = arith.constant 0 : i32
    return %c0_i32, %c0_i32_0 : i32, i32
  }
  func.func @transform_4(%arg0: i32) -> (i32, i32) {
    %c0_i32 = arith.constant 0 : i32
    %c0_i32_0 = arith.constant 0 : i32
    %c0_i32_1 = arith.constant 0 : i32
    return %c0_i32, %c0_i32_0 : i32, i32
  }
  func.func @transform_5(%arg0: i32) -> (i32, i32) {
    %c0_i32 = arith.constant 0 : i32
    %c0_i32_0 = arith.constant 0 : i32
    %c0_i32_1 = arith.constant 0 : i32
    return %c0_i32, %c0_i32_0 : i32, i32
  }
  func.func @transform_6(%arg0: i32) -> (i32, i32) {
    %c0_i32 = arith.constant 0 : i32
    %c0_i32_0 = arith.constant 0 : i32
    %c0_i32_1 = arith.constant 0 : i32
    return %c0_i32, %c0_i32_0 : i32, i32
  }
  func.func @transform_7(%arg0: i32) -> (i32, i32) {
    %c0_i32 = arith.constant 0 : i32
    %c0_i32_0 = arith.constant 0 : i32
    %c0_i32_1 = arith.constant 0 : i32
    return %c0_i32, %c0_i32_0 : i32, i32
  }
  func.func @transform_8(%arg0: i32) -> (i32, i32) {
    %c0_i32 = arith.constant 0 : i32
    %c0_i32_0 = arith.constant 0 : i32
    %c0_i32_1 = arith.constant 0 : i32
    return %c0_i32, %c0_i32_0 : i32, i32
  }
  func.func @transform_9(%arg0: i32) -> (i32, i32) {
    %c0_i32 = arith.constant 0 : i32
    %c0_i32_0 = arith.constant 0 : i32
    %c0_i32_1 = arith.constant 0 : i32
    return %c0_i32, %c0_i32_0 : i32, i32
  }
  func.func @transform_10(%arg0: i32) -> (i32, i32) {
    %c0_i32 = arith.constant 0 : i32
    %c0_i32_0 = arith.constant 0 : i32
    %c0_i32_1 = arith.constant 0 : i32
    return %c0_i32, %c0_i32_0 : i32, i32
  }
  func.func @transform_11(%arg0: i32) -> (i32, i32) {
    %c0_i32 = arith.constant 0 : i32
    %c0_i32_0 = arith.constant 0 : i32
    %c0_i32_1 = arith.constant 0 : i32
    return %c0_i32, %c0_i32_0 : i32, i32
  }
  func.func @transform_12(%arg0: i32) -> (i32, i32) {
    %c0_i32 = arith.constant 0 : i32
    %c0_i32_0 = arith.constant 0 : i32
    %c0_i32_1 = arith.constant 0 : i32
    return %c0_i32, %c0_i32_0 : i32, i32
  }
  func.func @transform_13(%arg0: i32) -> (i32, i32) {
    %c0_i32 = arith.constant 0 : i32
    %c0_i32_0 = arith.constant 0 : i32
    %c0_i32_1 = arith.constant 0 : i32
    return %c0_i32, %c0_i32_0 : i32, i32
  }
}

</mosaic_0001>

<llo_original>
// kernel: forward.1
$region0: #{forward.1}
  #allocation0 [shape = 'u32[]', space=smem, size = 0x4, offset = 0x4, fixed_abs, tag = 'smem constant byte address 0x4 - core index']
  #allocation1 [shape = 'u32[144,128]{1,0:T(1,128)}', space=vmem, size = 0x12000, scoped, tag = 'internal scratch']
  %s0 = inlined_call_operand.vmem [shape: f32[32,256], index: 0, kind: input, shape index: {}]
  %s1 = inlined_call_operand.vmem [shape: f32[256,128], index: 1, kind: input, shape index: {}]
  %s2 = inlined_call_operand.vmem [shape: f32[1,128], index: 2, kind: input, shape index: {}]
  %s3 = inlined_call_operand.vmem [shape: f32[1,128], index: 3, kind: input, shape index: {}]
  %s4 = inlined_call_operand.vmem [shape: f32[128,256], index: 4, kind: input, shape index: {}]
  %s5 = inlined_call_operand.vmem [shape: f32[1,64], index: 5, kind: input, shape index: {}]
  %s6 = inlined_call_operand.vmem [shape: f32[1,64], index: 6, kind: input, shape index: {}]
  %s7 = inlined_call_operand.vmem [shape: f32[64,128], index: 7, kind: input, shape index: {}]
  %s8 = inlined_call_operand.vmem [shape: f32[1,32], index: 8, kind: input, shape index: {}]
  %s9 = inlined_call_operand.vmem [shape: f32[1,32], index: 9, kind: input, shape index: {}]
  %s10 = inlined_call_operand.vmem [shape: f32[32,8], index: 10, kind: input, shape index: {}]
  %s11 = inlined_call_operand.vmem [shape: f32[1,8], index: 11, kind: input, shape index: {}]
  %s12 = inlined_call_operand.vmem [shape: f32[1,8], index: 12, kind: input, shape index: {}]
  %s13 = inlined_call_operand.vmem [shape: f32[32,128], index: 13, kind: output, shape index: {}]
  %s14 = sld [smem:[#allocation0]]
  $region62: #{forward.1} parent=0
    _
  %s16 = ssub.s32 1, %s14
  %s17 = scalar_select 0, %s16, %s14
  // Predicated region
  $region2: #{forward.1} parent=0 // pred_check
    _
  $region3: #{forward.1} parent=0 // pred_check_branch
    %19 = sbr.rel (0) target = $region5
  $region4: #{forward.1} parent=0 // pred_region
    _
  $region5: #{forward.1} parent=0 // pred_fallthru
    _
  // Predicated region
  $region6: #{forward.1} parent=0 // pred_check
    _
  $region7: #{forward.1} parent=0 // pred_check_branch
    %21 = sbr.rel (0) target = $region9
  $region8: #{forward.1} parent=0 // pred_region
    _
  $region9: #{forward.1} parent=0 // pred_fallthru
    _
  // Predicated region
  $region10: #{forward.1} parent=0 // pred_check
    _
  $region11: #{forward.1} parent=0 // pred_check_branch
    %23 = sbr.rel (0) target = $region13
  $region12: #{forward.1} parent=0 // pred_region
    _
  $region13: #{forward.1} parent=0 // pred_fallthru
    _
  // Predicated region
  $region14: #{forward.1} parent=0 // pred_check
    _
  $region15: #{forward.1} parent=0 // pred_check_branch
    %25 = sbr.rel (0) target = $region17
  $region16: #{forward.1} parent=0 // pred_region
    _
  $region17: #{forward.1} parent=0 // pred_fallthru
    _
  // Predicated region
  $region18: #{forward.1} parent=0 // pred_check
    _
  $region19: #{forward.1} parent=0 // pred_check_branch
    %27 = sbr.rel (0) target = $region21
  $region20: #{forward.1} parent=0 // pred_region
    _
  $region21: #{forward.1} parent=0 // pred_fallthru
    _
  // Predicated region
  $region22: #{forward.1} parent=0 // pred_check
    _
  $region23: #{forward.1} parent=0 // pred_check_branch
    %29 = sbr.rel (0) target = $region25
  $region24: #{forward.1} parent=0 // pred_region
    _
  $region25: #{forward.1} parent=0 // pred_fallthru
    _
  // Predicated region
  $region26: #{forward.1} parent=0 // pred_check
    _
  $region27: #{forward.1} parent=0 // pred_check_branch
    %31 = sbr.rel (0) target = $region29
  $region28: #{forward.1} parent=0 // pred_region
    _
  $region29: #{forward.1} parent=0 // pred_fallthru
    _
  // Predicated region
  $region30: #{forward.1} parent=0 // pred_check
    _
  $region31: #{forward.1} parent=0 // pred_check_branch
    %33 = sbr.rel (0) target = $region33
  $region32: #{forward.1} parent=0 // pred_region
    _
  $region33: #{forward.1} parent=0 // pred_fallthru
    _
  // Predicated region
  $region34: #{forward.1} parent=0 // pred_check
    _
  $region35: #{forward.1} parent=0 // pred_check_branch
    %35 = sbr.rel (0) target = $region37
  $region36: #{forward.1} parent=0 // pred_region
    _
  $region37: #{forward.1} parent=0 // pred_fallthru
    _
  // Predicated region
  $region38: #{forward.1} parent=0 // pred_check
    _
  $region39: #{forward.1} parent=0 // pred_check_branch
    %37 = sbr.rel (0) target = $region41
  $region40: #{forward.1} parent=0 // pred_region
    _
  $region41: #{forward.1} parent=0 // pred_fallthru
    _
  // Predicated region
  $region42: #{forward.1} parent=0 // pred_check
    _
  $region43: #{forward.1} parent=0 // pred_check_branch
    %39 = sbr.rel (0) target = $region45
  $region44: #{forward.1} parent=0 // pred_region
    _
  $region45: #{forward.1} parent=0 // pred_fallthru
    _
  // Predicated region
  $region46: #{forward.1} parent=0 // pred_check
    _
  $region47: #{forward.1} parent=0 // pred_check_branch
    %41 = sbr.rel (0) target = $region49
  $region48: #{forward.1} parent=0 // pred_region
    _
  $region49: #{forward.1} parent=0 // pred_fallthru
    _
  // Predicated region
  $region50: #{forward.1} parent=0 // pred_check
    _
  $region51: #{forward.1} parent=0 // pred_check_branch
    %43 = sbr.rel (0) target = $region53
  $region52: #{forward.1} parent=0 // pred_region
    _
  $region53: #{forward.1} parent=0 // pred_fallthru
    _
  %v44 = vld [vmem:[%s0] sm:$0xff]
  %v45 = vld [vmem:[%s0 + $0x8] sm:$0xff]
  %v46 = vld [vmem:[%s0 + $0x10] sm:$0xff]
  %v47 = vld [vmem:[%s0 + $0x18] sm:$0xff]
  %v48 = vld [vmem:[%s0 + $0x20] sm:$0xff]
  %v49 = vld [vmem:[%s0 + $0x28] sm:$0xff]
  %v50 = vld [vmem:[%s0 + $0x30] sm:$0xff]
  %v51 = vld [vmem:[%s0 + $0x38] sm:$0xff]
  %v52 = vld [vmem:[%s1] sm:$0xff]
  %v53 = vld [vmem:[%s1 + $0x8] sm:$0xff]
  %v54 = vld [vmem:[%s1 + $0x10] sm:$0xff]
  %v55 = vld [vmem:[%s1 + $0x18] sm:$0xff]
  %v56 = vld [vmem:[%s1 + $0x20] sm:$0xff]
  %v57 = vld [vmem:[%s1 + $0x28] sm:$0xff]
  %v58 = vld [vmem:[%s1 + $0x30] sm:$0xff]
  %v59 = vld [vmem:[%s1 + $0x38] sm:$0xff]
  %v60 = vld [vmem:[%s1 + $0x40] sm:$0xff]
  %v61 = vld [vmem:[%s1 + $0x48] sm:$0xff]
  %v62 = vld [vmem:[%s1 + $0x50] sm:$0xff]
  %v63 = vld [vmem:[%s1 + $0x58] sm:$0xff]
  %v64 = vld [vmem:[%s1 + $0x60] sm:$0xff]
  %v65 = vld [vmem:[%s1 + $0x68] sm:$0xff]
  %v66 = vld [vmem:[%s1 + $0x70] sm:$0xff]
  %v67 = vld [vmem:[%s1 + $0x78] sm:$0xff]
  %v68 = vld [vmem:[%s1 + $0x80] sm:$0xff]
  %v69 = vld [vmem:[%s1 + $0x88] sm:$0xff]
  %v70 = vld [vmem:[%s1 + $0x90] sm:$0xff]
  %v71 = vld [vmem:[%s1 + $0x98] sm:$0xff]
  %v72 = vld [vmem:[%s1 + $0xa0] sm:$0xff]
  %v73 = vld [vmem:[%s1 + $0xa8] sm:$0xff]
  %v74 = vld [vmem:[%s1 + $0xb0] sm:$0xff]
  %v75 = vld [vmem:[%s1 + $0xb8] sm:$0xff]
  %v76 = vld [vmem:[%s1 + $0xc0] sm:$0xff]
  %v77 = vld [vmem:[%s1 + $0xc8] sm:$0xff]
  %v78 = vld [vmem:[%s1 + $0xd0] sm:$0xff]
  %v79 = vld [vmem:[%s1 + $0xd8] sm:$0xff]
  %v80 = vld [vmem:[%s1 + $0xe0] sm:$0xff]
  %v81 = vld [vmem:[%s1 + $0xe8] sm:$0xff]
  %v82 = vld [vmem:[%s1 + $0xf0] sm:$0xff]
  %v83 = vld [vmem:[%s1 + $0xf8] sm:$0xff]
  %84 = vmatprep.subr.mxu0 0.0
  %85 = vmatpush1.msra.mxu0 %v52
  %86 = vmatprep.subr.mxu0 0.0
  %87 = vmatpush1.msra.mxu0 %v53
  %88 = vmatprep.subr.mxu0 0.0
  %89 = vmatpush1.msra.mxu0 %v54
  %90 = vmatprep.subr.mxu0 0.0
  %91 = vmatpush1.msra.mxu0 %v55
  %92 = vmatprep.subr.mxu0 0.0
  %93 = vmatpush1.msra.mxu0 %v56
  %94 = vmatprep.subr.mxu0 0.0
  %95 = vmatpush1.msra.mxu0 %v57
  %96 = vmatprep.subr.mxu0 0.0
  %97 = vmatpush1.msra.mxu0 %v58
  %98 = vmatprep.subr.mxu0 0.0
  %99 = vmatpush1.msra.mxu0 %v59
  %100 = vmatprep.subr.mxu0 0.0
  %101 = vmatpush1.msra.mxu0 %v60
  %102 = vmatprep.subr.mxu0 0.0
  %103 = vmatpush1.msra.mxu0 %v61
  %104 = vmatprep.subr.mxu0 0.0
  %105 = vmatpush1.msra.mxu0 %v62
  %106 = vmatprep.subr.mxu0 0.0
  %107 = vmatpush1.msra.mxu0 %v63
  %108 = vmatprep.subr.mxu0 0.0
  %109 = vmatpush1.msra.mxu0 %v64
  %110 = vmatprep.subr.mxu0 0.0
  %111 = vmatpush1.msra.mxu0 %v65
  %112 = vmatprep.subr.mxu0 0.0
  %113 = vmatpush1.msra.mxu0 %v66
  %114 = vmatprep.subr.mxu0 0.0
  %115 = vmatpush1.msra.mxu0 %v67
  %116 = vmatprep.subr.mxu0 0.0
  %117 = vmatpush1.msra.mxu0 %v68
  %118 = vmatprep.subr.mxu0 0.0
  %119 = vmatpush1.msra.mxu0 %v69
  %120 = vmatprep.subr.mxu0 0.0
  %121 = vmatpush1.msra.mxu0 %v70
  %122 = vmatprep.subr.mxu0 0.0
  %123 = vmatpush1.msra.mxu0 %v71
  %124 = vmatprep.subr.mxu0 0.0
  %125 = vmatpush1.msra.mxu0 %v72
  %126 = vmatprep.subr.mxu0 0.0
  %127 = vmatpush1.msra.mxu0 %v73
  %128 = vmatprep.subr.mxu0 0.0
  %129 = vmatpush1.msra.mxu0 %v74
  %130 = vmatprep.subr.mxu0 0.0
  %131 = vmatpush1.msra.mxu0 %v75
  %132 = vmatprep.subr.mxu0 0.0
  %133 = vmatpush1.msra.mxu0 %v76
  %134 = vmatprep.subr.mxu0 0.0
  %135 = vmatpush1.msra.mxu0 %v77
  %136 = vmatprep.subr.mxu0 0.0
  %137 = vmatpush1.msra.mxu0 %v78
  %138 = vmatprep.subr.mxu0 0.0
  %139 = vmatpush1.msra.mxu0 %v79
  %140 = vmatprep.subr.mxu0 0.0
  %141 = vmatpush1.msra.mxu0 %v80
  %142 = vmatprep.subr.mxu0 0.0
  %143 = vmatpush1.msra.mxu0 %v81
  %144 = vmatprep.subr.mxu0 0.0
  %145 = vmatpush1.msra.mxu0 %v82
  %146 = vmatprep.subr.mxu0 0.0
  %147 = vmatpush1.msra.mxu0 %v83
  %148 = vmatprep.mubr.f32.mxu0 %v45
  %149 = vmatmul.mubr.f32.gmra.mrb[0].mxu0 %v44
  %v150 = vpop.f32.mrb[0].mxu0
  %v151 = vadd.f32 0.0, %v150
  %v152 = vpop.f32.mrb[0].mxu0
  %153 = vmatprep.mubr.f32.mxu0 %v47
  %154 = vmatmul.mubr.f32.gmra.mrb[0].mxu0 %v46
  %v155 = vpop.f32.mrb[0].mxu0
  %v156 = vadd.f32 0.0, %v155
  %v157 = vpop.f32.mrb[0].mxu0
  %158 = vmatprep.mubr.f32.mxu0 %v49
  %159 = vmatmul.mubr.f32.gmra.mrb[0].mxu0 %v48
  %v160 = vpop.f32.mrb[0].mxu0
  %v161 = vadd.f32 0.0, %v160
  %v162 = vpop.f32.mrb[0].mxu0
  %163 = vmatprep.mubr.f32.mxu0 %v51
  %164 = vmatmul.mubr.f32.gmra.mrb[0].mxu0 %v50
  %v165 = vpop.f32.mrb[0].mxu0
  %v166 = vadd.f32 0.0, %v165
  %v167 = vpop.f32.mrb[0].mxu0
  %168 = vdwg.mxu0
  %v169 = vadd.f32 %v151, %v156
  %v170 = vadd.f32 %v169, %v161
  %v171 = vadd.f32 %v170, %v166
  %v172 = vrot.slane %v171, 4
  %v173 = vadd.f32 %v171, %v172
  %v174 = vrot.slane %v173, 2
  %v175 = vadd.f32 %v173, %v174
  %v176 = vrot.slane %v175, 1
  %v177 = vadd.f32 %v175, %v176
  %v178 = vmul.f32 %v151, %v151
  %v179 = vmul.f32 %v156, %v156
  %v180 = vmul.f32 %v161, %v161
  %v181 = vmul.f32 %v166, %v166
  %v182 = vadd.f32 %v178, %v179
  %v183 = vadd.f32 %v182, %v180
  %v184 = vadd.f32 %v183, %v181
  %v185 = vrot.slane %v184, 4
  %v186 = vadd.f32 %v184, %v185
  %v187 = vrot.slane %v186, 2
  %v188 = vadd.f32 %v186, %v187
  %v189 = vrot.slane %v188, 1
  %v190 = vadd.f32 %v188, %v189
  %v191 = vmul.f32 %v177, 0.03125
  %v192 = vmul.f32 %v190, 0.03125
  %v193 = vmul.f32 %v191, %v191
  %v194 = vsub.f32 %v192, %v193
  %v195 = vadd.f32 %v194, 1e-05
  %v196 = vrsqrt.pop %v195
  %v197 = vld [vmem:[%s2] sm:$0x1]
  %v198 = vmul.f32 %v197, %v196
  %v199 = vld [vmem:[%s3] sm:$0x1]
  %v200 = vmul.f32 %v191, %v198
  %v201 = vsub.f32 %v199, %v200
  %v203 = vlaneseq
  %v204 = vshrl.u32 %v203, 7
  %v205 = vsub.s32 0, %v204
  %v206 = vrot.slane %v198, %v205
  %v208 = vmul.f32 %v151, %v206
  %v209 = vmul.f32 %v156, %v206
  %v210 = vmul.f32 %v161, %v206
  %v211 = vmul.f32 %v166, %v206
  %v213 = vlaneseq
  %v214 = vshrl.u32 %v213, 7
  %v215 = vsub.s32 0, %v214
  %v216 = vrot.slane %v201, %v215
  %v218 = vadd.f32 %v208, %v216
  %v219 = vadd.f32 %v209, %v216
  %v220 = vadd.f32 %v210, %v216
  %v221 = vadd.f32 %v211, %v216
  %v222 = vmax.f32 %v218, 0.0
  %v223 = vmax.f32 %v219, 0.0
  %v224 = vmax.f32 %v220, 0.0
  %v225 = vmax.f32 %v221, 0.0
  %v226 = vld [vmem:[%s4] sm:$0xff]
  %v227 = vld [vmem:[%s4 + $0x8] sm:$0xff]
  %v228 = vld [vmem:[%s4 + $0x10] sm:$0xff]
  %v229 = vld [vmem:[%s4 + $0x18] sm:$0xff]
  %v230 = vld [vmem:[%s4 + $0x20] sm:$0xff]
  %v231 = vld [vmem:[%s4 + $0x28] sm:$0xff]
  %v232 = vld [vmem:[%s4 + $0x30] sm:$0xff]
  %v233 = vld [vmem:[%s4 + $0x38] sm:$0xff]
  %v234 = vld [vmem:[%s4 + $0x40] sm:$0xff]
  %v235 = vld [vmem:[%s4 + $0x48] sm:$0xff]
  %v236 = vld [vmem:[%s4 + $0x50] sm:$0xff]
  %v237 = vld [vmem:[%s4 + $0x58] sm:$0xff]
  %v238 = vld [vmem:[%s4 + $0x60] sm:$0xff]
  %v239 = vld [vmem:[%s4 + $0x68] sm:$0xff]
  %v240 = vld [vmem:[%s4 + $0x70] sm:$0xff]
  %v241 = vld [vmem:[%s4 + $0x78] sm:$0xff]
  %v242 = vld [vmem:[%s4 + $0x80] sm:$0xff]
  %v243 = vld [vmem:[%s4 + $0x88] sm:$0xff]
  %v244 = vld [vmem:[%s4 + $0x90] sm:$0xff]
  %v245 = vld [vmem:[%s4 + $0x98] sm:$0xff]
  %v246 = vld [vmem:[%s4 + $0xa0] sm:$0xff]
  %v247 = vld [vmem:[%s4 + $0xa8] sm:$0xff]
  %v248 = vld [vmem:[%s4 + $0xb0] sm:$0xff]
  %v249 = vld [vmem:[%s4 + $0xb8] sm:$0xff]
  %v250 = vld [vmem:[%s4 + $0xc0] sm:$0xff]
  %v251 = vld [vmem:[%s4 + $0xc8] sm:$0xff]
  %v252 = vld [vmem:[%s4 + $0xd0] sm:$0xff]
  %v253 = vld [vmem:[%s4 + $0xd8] sm:$0xff]
  %v254 = vld [vmem:[%s4 + $0xe0] sm:$0xff]
  %v255 = vld [vmem:[%s4 + $0xe8] sm:$0xff]
  %v256 = vld [vmem:[%s4 + $0xf0] sm:$0xff]
  %v257 = vld [vmem:[%s4 + $0xf8] sm:$0xff]
  %258 = vmatprep.subr.mxu0 %v227
  %259 = vmatpush1.msra.mxu0 %v226
  %260 = vmatprep.subr.mxu0 %v229
  %261 = vmatpush1.msra.mxu0 %v228
  %262 = vmatprep.subr.mxu0 %v231
  %263 = vmatpush1.msra.mxu0 %v230
  %264 = vmatprep.subr.mxu0 %v233
  %265 = vmatpush1.msra.mxu0 %v232
  %266 = vmatprep.subr.mxu0 %v235
  %267 = vmatpush1.msra.mxu0 %v234
  %268 = vmatprep.subr.mxu0 %v237
  %269 = vmatpush1.msra.mxu0 %v236
  %270 = vmatprep.subr.mxu0 %v239
  %271 = vmatpush1.msra.mxu0 %v238
  %272 = vmatprep.subr.mxu0 %v241
  %273 = vmatpush1.msra.mxu0 %v240
  %274 = vmatprep.subr.mxu0 %v243
  %275 = vmatpush1.msra.mxu0 %v242
  %276 = vmatprep.subr.mxu0 %v245
  %277 = vmatpush1.msra.mxu0 %v244
  %278 = vmatprep.subr.mxu0 %v247
  %279 = vmatpush1.msra.mxu0 %v246
  %280 = vmatprep.subr.mxu0 %v249
  %281 = vmatpush1.msra.mxu0 %v248
  %282 = vmatprep.subr.mxu0 %v251
  %283 = vmatpush1.msra.mxu0 %v250
  %284 = vmatprep.subr.mxu0 %v253
  %285 = vmatpush1.msra.mxu0 %v252
  %286 = vmatprep.subr.mxu0 %v255
  %287 = vmatpush1.msra.mxu0 %v254
  %288 = vmatprep.subr.mxu0 %v257
  %289 = vmatpush1.msra.mxu0 %v256
  %290 = vmatprep.subr.mxu0 0.0
  %291 = vmatpush1.msra.mxu0 0.0
  %292 = vmatprep.subr.mxu0 0.0
  %293 = vmatpush1.msra.mxu0 0.0
  %294 = vmatprep.subr.mxu0 0.0
  %295 = vmatpush1.msra.mxu0 0.0
  %296 = vmatprep.subr.mxu0 0.0
  %297 = vmatpush1.msra.mxu0 0.0
  %298 = vmatprep.subr.mxu0 0.0
  %299 = vmatpush1.msra.mxu0 0.0
  %300 = vmatprep.subr.mxu0 0.0
  %301 = vmatpush1.msra.mxu0 0.0
  %302 = vmatprep.subr.mxu0 0.0
  %303 = vmatpush1.msra.mxu0 0.0
  %304 = vmatprep.subr.mxu0 0.0
  %305 = vmatpush1.msra.mxu0 0.0
  %306 = vmatprep.subr.mxu0 0.0
  %307 = vmatpush1.msra.mxu0 0.0
  %308 = vmatprep.subr.mxu0 0.0
  %309 = vmatpush1.msra.mxu0 0.0
  %310 = vmatprep.subr.mxu0 0.0
  %311 = vmatpush1.msra.mxu0 0.0
  %312 = vmatprep.subr.mxu0 0.0
  %313 = vmatpush1.msra.mxu0 0.0
  %314 = vmatprep.subr.mxu0 0.0
  %315 = vmatpush1.msra.mxu0 0.0
  %316 = vmatprep.subr.mxu0 0.0
  %317 = vmatpush1.msra.mxu0 0.0
  %318 = vmatprep.subr.mxu0 0.0
  %319 = vmatpush1.msra.mxu0 0.0
  %320 = vmatprep.subr.mxu0 0.0
  %321 = vmatpush1.msra.mxu0 0.0
  %322 = vmatprep.mubr.f32.mxu0 0.0
  %323 = vmatmul.mubr.f32.gmra.mrb[0].mxu0 %v222
  %v324 = vpop.f32.mrb[0].mxu0
  %v325 = vadd.f32 0.0, %v324
  %v326 = vpop.f32.mrb[0].mxu0
  %v327 = vadd.f32 0.0, %v326
  %328 = vmatprep.mubr.f32.mxu0 0.0
  %329 = vmatmul.mubr.f32.gmra.mrb[0].mxu0 %v223
  %v330 = vpop.f32.mrb[0].mxu0
  %v331 = vadd.f32 0.0, %v330
  %v332 = vpop.f32.mrb[0].mxu0
  %v333 = vadd.f32 0.0, %v332
  %334 = vmatprep.mubr.f32.mxu0 0.0
  %335 = vmatmul.mubr.f32.gmra.mrb[0].mxu0 %v224
  %v336 = vpop.f32.mrb[0].mxu0
  %v337 = vadd.f32 0.0, %v336
  %v338 = vpop.f32.mrb[0].mxu0
  %v339 = vadd.f32 0.0, %v338
  %340 = vmatprep.mubr.f32.mxu0 0.0
  %341 = vmatmul.mubr.f32.gmra.mrb[0].mxu0 %v225
  %v342 = vpop.f32.mrb[0].mxu0
  %v343 = vadd.f32 0.0, %v342
  %v344 = vpop.f32.mrb[0].mxu0
  %v345 = vadd.f32 0.0, %v344
  %346 = vdwg.mxu0
  %v347 = vadd.f32 %v325, %v331
  %v348 = vadd.f32 %v347, %v337
  %v349 = vadd.f32 %v348, %v343
  %v350 = vrot.slane %v349, 4
  %v351 = vadd.f32 %v349, %v350
  %v352 = vrot.slane %v351, 2
  %v353 = vadd.f32 %v351, %v352
  %v354 = vrot.slane %v353, 1
  %v355 = vadd.f32 %v353, %v354
  %v356 = vadd.f32 %v327, %v333
  %v357 = vadd.f32 %v356, %v339
  %v358 = vadd.f32 %v357, %v345
  %v359 = vrot.slane %v358, 4
  %v360 = vadd.f32 %v358, %v359
  %v361 = vrot.slane %v360, 2
  %v362 = vadd.f32 %v360, %v361
  %v363 = vrot.slane %v362, 1
  %v364 = vadd.f32 %v362, %v363
  %v365 = vmul.f32 %v325, %v325
  %v366 = vmul.f32 %v327, %v327
  %v367 = vmul.f32 %v331, %v331
  %v368 = vmul.f32 %v333, %v333
  %v369 = vmul.f32 %v337, %v337
  %v370 = vmul.f32 %v339, %v339
  %v371 = vmul.f32 %v343, %v343
  %v372 = vmul.f32 %v345, %v345
  %v373 = vadd.f32 %v365, %v367
  %v374 = vadd.f32 %v373, %v369
  %v375 = vadd.f32 %v374, %v371
  %v376 = vrot.slane %v375, 4
  %v377 = vadd.f32 %v375, %v376
  %v378 = vrot.slane %v377, 2
  %v379 = vadd.f32 %v377, %v378
  %v380 = vrot.slane %v379, 1
  %v381 = vadd.f32 %v379, %v380
  %v382 = vadd.f32 %v366, %v368
  %v383 = vadd.f32 %v382, %v370
  %v384 = vadd.f32 %v383, %v372
  %v385 = vrot.slane %v384, 4
  %v386 = vadd.f32 %v384, %v385
  %v387 = vrot.slane %v386, 2
  %v388 = vadd.f32 %v386, %v387
  %v389 = vrot.slane %v388, 1
  %v390 = vadd.f32 %v388, %v389
  %392 = vrot.lane.b32.xlu0 %v355, 64
  %v393 = vpop.permute.xlu0 %392
  %v395 = vadd.f32 %v355, %v393
  %397 = vrot.lane.b32.xlu0 %v381, 64
  %v398 = vpop.permute.xlu0 %397
  %v400 = vadd.f32 %v381, %v398
  %v401 = vadd.f32 %v395, %v364
  %v402 = vadd.f32 %v400, %v390
  %404 = vrot.lane.b32.xlu0 %v364, 64
  %v405 = vpop.permute.xlu0 %404
  %v407 = vadd.f32 %v401, %v405
  %409 = vrot.lane.b32.xlu0 %v390, 64
  %v410 = vpop.permute.xlu0 %409
  %v412 = vadd.f32 %v402, %v410
  %v413 = vmul.f32 %v407, 0.0078125
  %v414 = vmul.f32 %v412, 0.0078125
  %v415 = vmul.f32 %v413, %v413
  %v416 = vsub.f32 %v414, %v415
  %v417 = vadd.f32 %v416, 1e-05
  %v418 = vrsqrt.pop %v417
  %v419 = vld [vmem:[%s5] sm:$0x1]
  %v420 = vmul.f32 %v419, %v418
  %v421 = vld [vmem:[%s6] sm:$0x1]
  %v422 = vmul.f32 %v413, %v420
  %v423 = vsub.f32 %v421, %v422
  %v425 = vlaneseq
  %v426 = vshrl.u32 %v425, 7
  %v427 = vsub.s32 0, %v426
  %v428 = vrot.slane %v420, %v427
  %429 = vrot.lane.b32.xlu0 %v428, 64
  %v430 = vpop.permute.xlu0 %429
  %vm432 = vcmask 523264
  %v433 = vsel %vm432, %v420, %v430
  %v435 = vlaneseq
  %v436 = vshrl.u32 %v435, 7
  %v437 = vsub.s32 0, %v436
  %v438 = vrot.slane %v423, %v437
  %439 = vrot.lane.b32.xlu0 %v438, 64
  %v440 = vpop.permute.xlu0 %439
  %v442 = vsel %vm432, %v423, %v440
  %v443 = vlaneseq
  %v444 = vshrl.u32 %v443, 7
  %v445 = vsub.s32 0, %v444
  %v446 = vrot.slane %v433, %v445
  %v447 = vmul.f32 %v325, %v446
  %v448 = vmul.f32 %v327, %v446
  %v449 = vmul.f32 %v331, %v446
  %v450 = vmul.f32 %v333, %v446
  %v451 = vmul.f32 %v337, %v446
  %v452 = vmul.f32 %v339, %v446
  %v453 = vmul.f32 %v343, %v446
  %v454 = vmul.f32 %v345, %v446
  %v455 = vlaneseq
  %v456 = vshrl.u32 %v455, 7
  %v457 = vsub.s32 0, %v456
  %v458 = vrot.slane %v442, %v457
  %v459 = vadd.f32 %v447, %v458
  %v460 = vadd.f32 %v448, %v458
  %v461 = vadd.f32 %v449, %v458
  %v462 = vadd.f32 %v450, %v458
  %v463 = vadd.f32 %v451, %v458
  %v464 = vadd.f32 %v452, %v458
  %v465 = vadd.f32 %v453, %v458
  %v466 = vadd.f32 %v454, %v458
  %v467 = vmax.f32 %v459, 0.0
  %v468 = vmax.f32 %v460, 0.0
  %v469 = vmax.f32 %v461, 0.0
  %v470 = vmax.f32 %v462, 0.0
  %v471 = vmax.f32 %v463, 0.0
  %v472 = vmax.f32 %v464, 0.0
  %v473 = vmax.f32 %v465, 0.0
  %v474 = vmax.f32 %v466, 0.0
  %v475 = vld [vmem:[%s7] sm:$0xff]
  %v476 = vld [vmem:[%s7 + $0x8] sm:$0xff]
  %v477 = vld [vmem:[%s7 + $0x10] sm:$0xff]
  %v478 = vld [vmem:[%s7 + $0x18] sm:$0xff]
  %v479 = vld [vmem:[%s7 + $0x20] sm:$0xff]
  %v480 = vld [vmem:[%s7 + $0x28] sm:$0xff]
  %v481 = vld [vmem:[%s7 + $0x30] sm:$0xff]
  %v482 = vld [vmem:[%s7 + $0x38] sm:$0xff]
  %v484 = vsel %vm432, %v467, 0
  %v487 = vsel %vm432, %v469, 0
  %v490 = vsel %vm432, %v471, 0
  %v493 = vsel %vm432, %v473, 0
  %495 = vmatprep.subr.mxu0 0.0
  %496 = vmatpush1.msra.mxu0 %v475
  %497 = vmatprep.subr.mxu0 0.0
  %498 = vmatpush1.msra.mxu0 %v476
  %499 = vmatprep.subr.mxu0 0.0
  %500 = vmatpush1.msra.mxu0 %v477
  %501 = vmatprep.subr.mxu0 0.0
  %502 = vmatpush1.msra.mxu0 %v478
  %503 = vmatprep.subr.mxu0 0.0
  %504 = vmatpush1.msra.mxu0 %v479
  %505 = vmatprep.subr.mxu0 0.0
  %506 = vmatpush1.msra.mxu0 %v480
  %507 = vmatprep.subr.mxu0 0.0
  %508 = vmatpush1.msra.mxu0 %v481
  %509 = vmatprep.subr.mxu0 0.0
  %510 = vmatpush1.msra.mxu0 %v482
  %511 = vmatprep.subr.mxu0 0.0
  %512 = vmatpush1.msra.mxu0 0.0
  %513 = vmatprep.subr.mxu0 0.0
  %514 = vmatpush1.msra.mxu0 0.0
  %515 = vmatprep.subr.mxu0 0.0
  %516 = vmatpush1.msra.mxu0 0.0
  %517 = vmatprep.subr.mxu0 0.0
  %518 = vmatpush1.msra.mxu0 0.0
  %519 = vmatprep.subr.mxu0 0.0
  %520 = vmatpush1.msra.mxu0 0.0
  %521 = vmatprep.subr.mxu0 0.0
  %522 = vmatpush1.msra.mxu0 0.0
  %523 = vmatprep.subr.mxu0 0.0
  %524 = vmatpush1.msra.mxu0 0.0
  %525 = vmatprep.subr.mxu0 0.0
  %526 = vmatpush1.msra.mxu0 0.0
  %527 = vmatprep.subr.mxu0 0.0
  %528 = vmatpush1.msra.mxu0 0.0
  %529 = vmatprep.subr.mxu0 0.0
  %530 = vmatpush1.msra.mxu0 0.0
  %531 = vmatprep.subr.mxu0 0.0
  %532 = vmatpush1.msra.mxu0 0.0
  %533 = vmatprep.subr.mxu0 0.0
  %534 = vmatpush1.msra.mxu0 0.0
  %535 = vmatprep.subr.mxu0 0.0
  %536 = vmatpush1.msra.mxu0 0.0
  %537 = vmatprep.subr.mxu0 0.0
  %538 = vmatpush1.msra.mxu0 0.0
  %539 = vmatprep.subr.mxu0 0.0
  %540 = vmatpush1.msra.mxu0 0.0
  %541 = vmatprep.subr.mxu0 0.0
  %542 = vmatpush1.msra.mxu0 0.0
  %543 = vmatprep.subr.mxu0 0.0
  %544 = vmatpush1.msra.mxu0 0.0
  %545 = vmatprep.subr.mxu0 0.0
  %546 = vmatpush1.msra.mxu0 0.0
  %547 = vmatprep.subr.mxu0 0.0
  %548 = vmatpush1.msra.mxu0 0.0
  %549 = vmatprep.subr.mxu0 0.0
  %550 = vmatpush1.msra.mxu0 0.0
  %551 = vmatprep.subr.mxu0 0.0
  %552 = vmatpush1.msra.mxu0 0.0
  %553 = vmatprep.subr.mxu0 0.0
  %554 = vmatpush1.msra.mxu0 0.0
  %555 = vmatprep.subr.mxu0 0.0
  %556 = vmatpush1.msra.mxu0 0.0
  %557 = vmatprep.subr.mxu0 0.0
  %558 = vmatpush1.msra.mxu0 0.0
  %559 = vmatprep.mubr.f32.mxu0 0.0
  %560 = vmatmul.mubr.f32.gmra.mrb[0].mxu0 %v484
  %v561 = vpop.f32.mrb[0].mxu0
  %v562 = vadd.f32 0.0, %v561
  %v563 = vpop.f32.mrb[0].mxu0
  %564 = vmatprep.mubr.f32.mxu0 0.0
  %565 = vmatmul.mubr.f32.gmra.mrb[0].mxu0 %v487
  %v566 = vpop.f32.mrb[0].mxu0
  %v567 = vadd.f32 0.0, %v566
  %v568 = vpop.f32.mrb[0].mxu0
  %569 = vmatprep.mubr.f32.mxu0 0.0
  %570 = vmatmul.mubr.f32.gmra.mrb[0].mxu0 %v490
  %v571 = vpop.f32.mrb[0].mxu0
  %v572 = vadd.f32 0.0, %v571
  %v573 = vpop.f32.mrb[0].mxu0
  %574 = vmatprep.mubr.f32.mxu0 0.0
  %575 = vmatmul.mubr.f32.gmra.mrb[0].mxu0 %v493
  %v576 = vpop.f32.mrb[0].mxu0
  %v577 = vadd.f32 0.0, %v576
  %v578 = vpop.f32.mrb[0].mxu0
  %579 = vdwg.mxu0
  %580 = vrot.lane.b32.xlu0 %v467, 64
  %v581 = vpop.permute.xlu0 %580
  %582 = vrot.lane.b32.xlu0 %v469, 64
  %v583 = vpop.permute.xlu0 %582
  %584 = vrot.lane.b32.xlu0 %v471, 64
  %v585 = vpop.permute.xlu0 %584
  %586 = vrot.lane.b32.xlu0 %v473, 64
  %v587 = vpop.permute.xlu0 %586
  %v588 = vsel %vm432, %v581, 0
  %v590 = vsel %vm432, %v583, 0
  %v592 = vsel %vm432, %v585, 0
  %v594 = vsel %vm432, %v587, 0
  %596 = vmatprep.subr.mxu0 0.0
  %597 = vmatpush1.msra.mxu0 %v475
  %598 = vmatprep.subr.mxu0 0.0
  %599 = vmatpush1.msra.mxu0 %v476
  %600 = vmatprep.subr.mxu0 0.0
  %601 = vmatpush1.msra.mxu0 %v477
  %602 = vmatprep.subr.mxu0 0.0
  %603 = vmatpush1.msra.mxu0 %v478
  %604 = vmatprep.subr.mxu0 0.0
  %605 = vmatpush1.msra.mxu0 %v479
  %606 = vmatprep.subr.mxu0 0.0
  %607 = vmatpush1.msra.mxu0 %v480
  %608 = vmatprep.subr.mxu0 0.0
  %609 = vmatpush1.msra.mxu0 %v481
  %610 = vmatprep.subr.mxu0 0.0
  %611 = vmatpush1.msra.mxu0 %v482
  %612 = vmatprep.subr.mxu0 0.0
  %613 = vmatpush1.msra.mxu0 0.0
  %614 = vmatprep.subr.mxu0 0.0
  %615 = vmatpush1.msra.mxu0 0.0
  %616 = vmatprep.subr.mxu0 0.0
  %617 = vmatpush1.msra.mxu0 0.0
  %618 = vmatprep.subr.mxu0 0.0
  %619 = vmatpush1.msra.mxu0 0.0
  %620 = vmatprep.subr.mxu0 0.0
  %621 = vmatpush1.msra.mxu0 0.0
  %622 = vmatprep.subr.mxu0 0.0
  %623 = vmatpush1.msra.mxu0 0.0
  %624 = vmatprep.subr.mxu0 0.0
  %625 = vmatpush1.msra.mxu0 0.0
  %626 = vmatprep.subr.mxu0 0.0
  %627 = vmatpush1.msra.mxu0 0.0
  %628 = vmatprep.subr.mxu0 0.0
  %629 = vmatpush1.msra.mxu0 0.0
  %630 = vmatprep.subr.mxu0 0.0
  %631 = vmatpush1.msra.mxu0 0.0
  %632 = vmatprep.subr.mxu0 0.0
  %633 = vmatpush1.msra.mxu0 0.0
  %634 = vmatprep.subr.mxu0 0.0
  %635 = vmatpush1.msra.mxu0 0.0
  %636 = vmatprep.subr.mxu0 0.0
  %637 = vmatpush1.msra.mxu0 0.0
  %638 = vmatprep.subr.mxu0 0.0
  %639 = vmatpush1.msra.mxu0 0.0
  %640 = vmatprep.subr.mxu0 0.0
  %641 = vmatpush1.msra.mxu0 0.0
  %642 = vmatprep.subr.mxu0 0.0
  %643 = vmatpush1.msra.mxu0 0.0
  %644 = vmatprep.subr.mxu0 0.0
  %645 = vmatpush1.msra.mxu0 0.0
  %646 = vmatprep.subr.mxu0 0.0
  %647 = vmatpush1.msra.mxu0 0.0
  %648 = vmatprep.subr.mxu0 0.0
  %649 = vmatpush1.msra.mxu0 0.0
  %650 = vmatprep.subr.mxu0 0.0
  %651 = vmatpush1.msra.mxu0 0.0
  %652 = vmatprep.subr.mxu0 0.0
  %653 = vmatpush1.msra.mxu0 0.0
  %654 = vmatprep.subr.mxu0 0.0
  %655 = vmatpush1.msra.mxu0 0.0
  %656 = vmatprep.subr.mxu0 0.0
  %657 = vmatpush1.msra.mxu0 0.0
  %658 = vmatprep.subr.mxu0 0.0
  %659 = vmatpush1.msra.mxu0 0.0
  %660 = vmatprep.mubr.f32.mxu0 0.0
  %661 = vmatmul.mubr.f32.gmra.mrb[0].mxu0 %v588
  %v662 = vpop.f32.mrb[0].mxu0
  %v663 = vadd.f32 0.0, %v662
  %v664 = vpop.f32.mrb[0].mxu0
  %665 = vmatprep.mubr.f32.mxu0 0.0
  %666 = vmatmul.mubr.f32.gmra.mrb[0].mxu0 %v590
  %v667 = vpop.f32.mrb[0].mxu0
  %v668 = vadd.f32 0.0, %v667
  %v669 = vpop.f32.mrb[0].mxu0
  %670 = vmatprep.mubr.f32.mxu0 0.0
  %671 = vmatmul.mubr.f32.gmra.mrb[0].mxu0 %v592
  %v672 = vpop.f32.mrb[0].mxu0
  %v673 = vadd.f32 0.0, %v672
  %v674 = vpop.f32.mrb[0].mxu0
  %675 = vmatprep.mubr.f32.mxu0 0.0
  %676 = vmatmul.mubr.f32.gmra.mrb[0].mxu0 %v594
  %v677 = vpop.f32.mrb[0].mxu0
  %v678 = vadd.f32 0.0, %v677
  %v679 = vpop.f32.mrb[0].mxu0
  %680 = vdwg.mxu0
  %v682 = vsel %vm432, %v468, 0
  %v685 = vsel %vm432, %v470, 0
  %v688 = vsel %vm432, %v472, 0
  %v691 = vsel %vm432, %v474, 0
  %693 = vmatprep.subr.mxu0 0.0
  %694 = vmatpush1.msra.mxu0 %v475
  %695 = vmatprep.subr.mxu0 0.0
  %696 = vmatpush1.msra.mxu0 %v476
  %697 = vmatprep.subr.mxu0 0.0
  %698 = vmatpush1.msra.mxu0 %v477
  %699 = vmatprep.subr.mxu0 0.0
  %700 = vmatpush1.msra.mxu0 %v478
  %701 = vmatprep.subr.mxu0 0.0
  %702 = vmatpush1.msra.mxu0 %v479
  %703 = vmatprep.subr.mxu0 0.0
  %704 = vmatpush1.msra.mxu0 %v480
  %705 = vmatprep.subr.mxu0 0.0
  %706 = vmatpush1.msra.mxu0 %v481
  %707 = vmatprep.subr.mxu0 0.0
  %708 = vmatpush1.msra.mxu0 %v482
  %709 = vmatprep.subr.mxu0 0.0
  %710 = vmatpush1.msra.mxu0 0.0
  %711 = vmatprep.subr.mxu0 0.0
  %712 = vmatpush1.msra.mxu0 0.0
  %713 = vmatprep.subr.mxu0 0.0
  %714 = vmatpush1.msra.mxu0 0.0
  %715 = vmatprep.subr.mxu0 0.0
  %716 = vmatpush1.msra.mxu0 0.0
  %717 = vmatprep.subr.mxu0 0.0
  %718 = vmatpush1.msra.mxu0 0.0
  %719 = vmatprep.subr.mxu0 0.0
  %720 = vmatpush1.msra.mxu0 0.0
  %721 = vmatprep.subr.mxu0 0.0
  %722 = vmatpush1.msra.mxu0 0.0
  %723 = vmatprep.subr.mxu0 0.0
  %724 = vmatpush1.msra.mxu0 0.0
  %725 = vmatprep.subr.mxu0 0.0
  %726 = vmatpush1.msra.mxu0 0.0
  %727 = vmatprep.subr.mxu0 0.0
  %728 = vmatpush1.msra.mxu0 0.0
  %729 = vmatprep.subr.mxu0 0.0
  %730 = vmatpush1.msra.mxu0 0.0
  %731 = vmatprep.subr.mxu0 0.0
  %732 = vmatpush1.msra.mxu0 0.0
  %733 = vmatprep.subr.mxu0 0.0
  %734 = vmatpush1.msra.mxu0 0.0
  %735 = vmatprep.subr.mxu0 0.0
  %736 = vmatpush1.msra.mxu0 0.0
  %737 = vmatprep.subr.mxu0 0.0
  %738 = vmatpush1.msra.mxu0 0.0
  %739 = vmatprep.subr.mxu0 0.0
  %740 = vmatpush1.msra.mxu0 0.0
  %741 = vmatprep.subr.mxu0 0.0
  %742 = vmatpush1.msra.mxu0 0.0
  %743 = vmatprep.subr.mxu0 0.0
  %744 = vmatpush1.msra.mxu0 0.0
  %745 = vmatprep.subr.mxu0 0.0
  %746 = vmatpush1.msra.mxu0 0.0
  %747 = vmatprep.subr.mxu0 0.0
  %748 = vmatpush1.msra.mxu0 0.0
  %749 = vmatprep.subr.mxu0 0.0
  %750 = vmatpush1.msra.mxu0 0.0
  %751 = vmatprep.subr.mxu0 0.0
  %752 = vmatpush1.msra.mxu0 0.0
  %753 = vmatprep.subr.mxu0 0.0
  %754 = vmatpush1.msra.mxu0 0.0
  %755 = vmatprep.subr.mxu0 0.0
  %756 = vmatpush1.msra.mxu0 0.0
  %757 = vmatprep.mubr.f32.mxu0 0.0
  %758 = vmatmul.mubr.f32.gmra.mrb[0].mxu0 %v682
  %v759 = vpop.f32.mrb[0].mxu0
  %v760 = vadd.f32 0.0, %v759
  %v761 = vpop.f32.mrb[0].mxu0
  %762 = vmatprep.mubr.f32.mxu0 0.0
  %763 = vmatmul.mubr.f32.gmra.mrb[0].mxu0 %v685
  %v764 = vpop.f32.mrb[0].mxu0
  %v765 = vadd.f32 0.0, %v764
  %v766 = vpop.f32.mrb[0].mxu0
  %767 = vmatprep.mubr.f32.mxu0 0.0
  %768 = vmatmul.mubr.f32.gmra.mrb[0].mxu0 %v688
  %v769 = vpop.f32.mrb[0].mxu0
  %v770 = vadd.f32 0.0, %v769
  %v771 = vpop.f32.mrb[0].mxu0
  %772 = vmatprep.mubr.f32.mxu0 0.0
  %773 = vmatmul.mubr.f32.gmra.mrb[0].mxu0 %v691
  %v774 = vpop.f32.mrb[0].mxu0
  %v775 = vadd.f32 0.0, %v774
  %v776 = vpop.f32.mrb[0].mxu0
  %777 = vdwg.mxu0
  %778 = vrot.lane.b32.xlu0 %v468, 64
  %v779 = vpop.permute.xlu0 %778
  %780 = vrot.lane.b32.xlu0 %v470, 64
  %v781 = vpop.permute.xlu0 %780
  %782 = vrot.lane.b32.xlu0 %v472, 64
  %v783 = vpop.permute.xlu0 %782
  %784 = vrot.lane.b32.xlu0 %v474, 64
  %v785 = vpop.permute.xlu0 %784
  %v786 = vsel %vm432, %v779, 0
  %v788 = vsel %vm432, %v781, 0
  %v790 = vsel %vm432, %v783, 0
  %v792 = vsel %vm432, %v785, 0
  %794 = vmatprep.subr.mxu0 0.0
  %795 = vmatpush1.msra.mxu0 %v475
  %796 = vmatprep.subr.mxu0 0.0
  %797 = vmatpush1.msra.mxu0 %v476
  %798 = vmatprep.subr.mxu0 0.0
  %799 = vmatpush1.msra.mxu0 %v477
  %800 = vmatprep.subr.mxu0 0.0
  %801 = vmatpush1.msra.mxu0 %v478
  %802 = vmatprep.subr.mxu0 0.0
  %803 = vmatpush1.msra.mxu0 %v479
  %804 = vmatprep.subr.mxu0 0.0
  %805 = vmatpush1.msra.mxu0 %v480
  %806 = vmatprep.subr.mxu0 0.0
  %807 = vmatpush1.msra.mxu0 %v481
  %808 = vmatprep.subr.mxu0 0.0
  %809 = vmatpush1.msra.mxu0 %v482
  %810 = vmatprep.subr.mxu0 0.0
  %811 = vmatpush1.msra.mxu0 0.0
  %812 = vmatprep.subr.mxu0 0.0
  %813 = vmatpush1.msra.mxu0 0.0
  %814 = vmatprep.subr.mxu0 0.0
  %815 = vmatpush1.msra.mxu0 0.0
  %816 = vmatprep.subr.mxu0 0.0
  %817 = vmatpush1.msra.mxu0 0.0
  %818 = vmatprep.subr.mxu0 0.0
  %819 = vmatpush1.msra.mxu0 0.0
  %820 = vmatprep.subr.mxu0 0.0
  %821 = vmatpush1.msra.mxu0 0.0
  %822 = vmatprep.subr.mxu0 0.0
  %823 = vmatpush1.msra.mxu0 0.0
  %824 = vmatprep.subr.mxu0 0.0
  %825 = vmatpush1.msra.mxu0 0.0
  %826 = vmatprep.subr.mxu0 0.0
  %827 = vmatpush1.msra.mxu0 0.0
  %828 = vmatprep.subr.mxu0 0.0
  %829 = vmatpush1.msra.mxu0 0.0
  %830 = vmatprep.subr.mxu0 0.0
  %831 = vmatpush1.msra.mxu0 0.0
  %832 = vmatprep.subr.mxu0 0.0
  %833 = vmatpush1.msra.mxu0 0.0
  %834 = vmatprep.subr.mxu0 0.0
  %835 = vmatpush1.msra.mxu0 0.0
  %836 = vmatprep.subr.mxu0 0.0
  %837 = vmatpush1.msra.mxu0 0.0
  %838 = vmatprep.subr.mxu0 0.0
  %839 = vmatpush1.msra.mxu0 0.0
  %840 = vmatprep.subr.mxu0 0.0
  %841 = vmatpush1.msra.mxu0 0.0
  %842 = vmatprep.subr.mxu0 0.0
  %843 = vmatpush1.msra.mxu0 0.0
  %844 = vmatprep.subr.mxu0 0.0
  %845 = vmatpush1.msra.mxu0 0.0
  %846 = vmatprep.subr.mxu0 0.0
  %847 = vmatpush1.msra.mxu0 0.0
  %848 = vmatprep.subr.mxu0 0.0
  %849 = vmatpush1.msra.mxu0 0.0
  %850 = vmatprep.subr.mxu0 0.0
  %851 = vmatpush1.msra.mxu0 0.0
  %852 = vmatprep.subr.mxu0 0.0
  %853 = vmatpush1.msra.mxu0 0.0
  %854 = vmatprep.subr.mxu0 0.0
  %855 = vmatpush1.msra.mxu0 0.0
  %856 = vmatprep.subr.mxu0 0.0
  %857 = vmatpush1.msra.mxu0 0.0
  %858 = vmatprep.mubr.f32.mxu0 0.0
  %859 = vmatmul.mubr.f32.gmra.mrb[0].mxu0 %v786
  %v860 = vpop.f32.mrb[0].mxu0
  %v861 = vadd.f32 0.0, %v860
  %v862 = vpop.f32.mrb[0].mxu0
  %863 = vmatprep.mubr.f32.mxu0 0.0
  %864 = vmatmul.mubr.f32.gmra.mrb[0].mxu0 %v788
  %v865 = vpop.f32.mrb[0].mxu0
  %v866 = vadd.f32 0.0, %v865
  %v867 = vpop.f32.mrb[0].mxu0
  %868 = vmatprep.mubr.f32.mxu0 0.0
  %869 = vmatmul.mubr.f32.gmra.mrb[0].mxu0 %v790
  %v870 = vpop.f32.mrb[0].mxu0
  %v871 = vadd.f32 0.0, %v870
  %v872 = vpop.f32.mrb[0].mxu0
  %873 = vmatprep.mubr.f32.mxu0 0.0
  %874 = vmatmul.mubr.f32.gmra.mrb[0].mxu0 %v792
  %v875 = vpop.f32.mrb[0].mxu0
  %v876 = vadd.f32 0.0, %v875
  %v877 = vpop.f32.mrb[0].mxu0
  %878 = vdwg.mxu0
  %v879 = vadd.f32 %v562, %v567
  %v880 = vadd.f32 %v879, %v572
  %v881 = vadd.f32 %v880, %v577
  %v882 = vrot.slane %v881, 4
  %v883 = vadd.f32 %v881, %v882
  %v884 = vrot.slane %v883, 2
  %v885 = vadd.f32 %v883, %v884
  %v886 = vrot.slane %v885, 1
  %v887 = vadd.f32 %v885, %v886
  %v888 = vadd.f32 %v663, %v668
  %v889 = vadd.f32 %v888, %v673
  %v890 = vadd.f32 %v889, %v678
  %v891 = vrot.slane %v890, 4
  %v892 = vadd.f32 %v890, %v891
  %v893 = vrot.slane %v892, 2
  %v894 = vadd.f32 %v892, %v893
  %v895 = vrot.slane %v894, 1
  %v896 = vadd.f32 %v894, %v895
  %v897 = vadd.f32 %v760, %v765
  %v898 = vadd.f32 %v897, %v770
  %v899 = vadd.f32 %v898, %v775
  %v900 = vrot.slane %v899, 4
  %v901 = vadd.f32 %v899, %v900
  %v902 = vrot.slane %v901, 2
  %v903 = vadd.f32 %v901, %v902
  %v904 = vrot.slane %v903, 1
  %v905 = vadd.f32 %v903, %v904
  %v906 = vadd.f32 %v861, %v866
  %v907 = vadd.f32 %v906, %v871
  %v908 = vadd.f32 %v907, %v876
  %v909 = vrot.slane %v908, 4
  %v910 = vadd.f32 %v908, %v909
  %v911 = vrot.slane %v910, 2
  %v912 = vadd.f32 %v910, %v911
  %v913 = vrot.slane %v912, 1
  %v914 = vadd.f32 %v912, %v913
  %v915 = vmul.f32 %v562, %v562
  %v916 = vmul.f32 %v663, %v663
  %v917 = vmul.f32 %v760, %v760
  %v918 = vmul.f32 %v861, %v861
  %v919 = vmul.f32 %v567, %v567
  %v920 = vmul.f32 %v668, %v668
  %v921 = vmul.f32 %v765, %v765
  %v922 = vmul.f32 %v866, %v866
  %v923 = vmul.f32 %v572, %v572
  %v924 = vmul.f32 %v673, %v673
  %v925 = vmul.f32 %v770, %v770
  %v926 = vmul.f32 %v871, %v871
  %v927 = vmul.f32 %v577, %v577
  %v928 = vmul.f32 %v678, %v678
  %v929 = vmul.f32 %v775, %v775
  %v930 = vmul.f32 %v876, %v876
  %v931 = vadd.f32 %v915, %v919
  %v932 = vadd.f32 %v931, %v923
  %v933 = vadd.f32 %v932, %v927
  %v934 = vrot.slane %v933, 4
  %v935 = vadd.f32 %v933, %v934
  %v936 = vrot.slane %v935, 2
  %v937 = vadd.f32 %v935, %v936
  %v938 = vrot.slane %v937, 1
  %v939 = vadd.f32 %v937, %v938
  %v940 = vadd.f32 %v916, %v920
  %v941 = vadd.f32 %v940, %v924
  %v942 = vadd.f32 %v941, %v928
  %v943 = vrot.slane %v942, 4
  %v944 = vadd.f32 %v942, %v943
  %v945 = vrot.slane %v944, 2
  %v946 = vadd.f32 %v944, %v945
  %v947 = vrot.slane %v946, 1
  %v948 = vadd.f32 %v946, %v947
  %v949 = vadd.f32 %v917, %v921
  %v950 = vadd.f32 %v949, %v925
  %v951 = vadd.f32 %v950, %v929
  %v952 = vrot.slane %v951, 4
  %v953 = vadd.f32 %v951, %v952
  %v954 = vrot.slane %v953, 2
  %v955 = vadd.f32 %v953, %v954
  %v956 = vrot.slane %v955, 1
  %v957 = vadd.f32 %v955, %v956
  %v958 = vadd.f32 %v918, %v922
  %v959 = vadd.f32 %v958, %v926
  %v960 = vadd.f32 %v959, %v930
  %v961 = vrot.slane %v960, 4
  %v962 = vadd.f32 %v960, %v961
  %v963 = vrot.slane %v962, 2
  %v964 = vadd.f32 %v962, %v963
  %v965 = vrot.slane %v964, 1
  %v966 = vadd.f32 %v964, %v965
  %968 = vrot.lane.b32.xlu0 %v887, 96
  %v969 = vpop.permute.xlu0 %968
  %v971 = vadd.f32 %v887, %v969
  %973 = vrot.lane.b32.xlu0 %v939, 96
  %v974 = vpop.permute.xlu0 %973
  %v976 = vadd.f32 %v939, %v974
  %977 = vrot.lane.b32.xlu0 %v887, 64
  %v978 = vpop.permute.xlu0 %977
  %v980 = vadd.f32 %v971, %v978
  %981 = vrot.lane.b32.xlu0 %v939, 64
  %v982 = vpop.permute.xlu0 %981
  %v984 = vadd.f32 %v976, %v982
  %985 = vrot.lane.b32.xlu0 %v887, 32
  %v986 = vpop.permute.xlu0 %985
  %v988 = vadd.f32 %v980, %v986
  %989 = vrot.lane.b32.xlu0 %v939, 32
  %v990 = vpop.permute.xlu0 %989
  %v992 = vadd.f32 %v984, %v990
  %v993 = vadd.f32 %v988, %v896
  %v994 = vadd.f32 %v992, %v948
  %996 = vrot.lane.b32.xlu0 %v896, 96
  %v997 = vpop.permute.xlu0 %996
  %v999 = vadd.f32 %v993, %v997
  %1001 = vrot.lane.b32.xlu0 %v948, 96
  %v1002 = vpop.permute.xlu0 %1001
  %v1004 = vadd.f32 %v994, %v1002
  %1005 = vrot.lane.b32.xlu0 %v896, 64
  %v1006 = vpop.permute.xlu0 %1005
  %v1008 = vadd.f32 %v999, %v1006
  %1009 = vrot.lane.b32.xlu0 %v948, 64
  %v1010 = vpop.permute.xlu0 %1009
  %v1012 = vadd.f32 %v1004, %v1010
  %1013 = vrot.lane.b32.xlu0 %v896, 32
  %v1014 = vpop.permute.xlu0 %1013
  %v1016 = vadd.f32 %v1008, %v1014
  %1017 = vrot.lane.b32.xlu0 %v948, 32
  %v1018 = vpop.permute.xlu0 %1017
  %v1020 = vadd.f32 %v1012, %v1018
  %v1021 = vadd.f32 %v1016, %v905
  %v1022 = vadd.f32 %v1020, %v957
  %1024 = vrot.lane.b32.xlu0 %v905, 96
  %v1025 = vpop.permute.xlu0 %1024
  %v1027 = vadd.f32 %v1021, %v1025
  %1029 = vrot.lane.b32.xlu0 %v957, 96
  %v1030 = vpop.permute.xlu0 %1029
  %v1032 = vadd.f32 %v1022, %v1030
  %1033 = vrot.lane.b32.xlu0 %v905, 64
  %v1034 = vpop.permute.xlu0 %1033
  %v1036 = vadd.f32 %v1027, %v1034
  %1037 = vrot.lane.b32.xlu0 %v957, 64
  %v1038 = vpop.permute.xlu0 %1037
  %v1040 = vadd.f32 %v1032, %v1038
  %1041 = vrot.lane.b32.xlu0 %v905, 32
  %v1042 = vpop.permute.xlu0 %1041
  %v1044 = vadd.f32 %v1036, %v1042
  %1045 = vrot.lane.b32.xlu0 %v957, 32
  %v1046 = vpop.permute.xlu0 %1045
  %v1048 = vadd.f32 %v1040, %v1046
  %v1049 = vadd.f32 %v1044, %v914
  %v1050 = vadd.f32 %v1048, %v966
  %1052 = vrot.lane.b32.xlu0 %v914, 96
  %v1053 = vpop.permute.xlu0 %1052
  %v1055 = vadd.f32 %v1049, %v1053
  %1057 = vrot.lane.b32.xlu0 %v966, 96
  %v1058 = vpop.permute.xlu0 %1057
  %v1060 = vadd.f32 %v1050, %v1058
  %1061 = vrot.lane.b32.xlu0 %v914, 64
  %v1062 = vpop.permute.xlu0 %1061
  %v1064 = vadd.f32 %v1055, %v1062
  %1065 = vrot.lane.b32.xlu0 %v966, 64
  %v1066 = vpop.permute.xlu0 %1065
  %v1068 = vadd.f32 %v1060, %v1066
  %1069 = vrot.lane.b32.xlu0 %v914, 32
  %v1070 = vpop.permute.xlu0 %1069
  %v1072 = vadd.f32 %v1064, %v1070
  %1073 = vrot.lane.b32.xlu0 %v966, 32
  %v1074 = vpop.permute.xlu0 %1073
  %v1076 = vadd.f32 %v1068, %v1074
  %v1077 = vmul.f32 %v1072, 0.001953125
  %v1078 = vmul.f32 %v1076, 0.001953125
  %v1079 = vmul.f32 %v1077, %v1077
  %v1080 = vsub.f32 %v1078, %v1079
  %v1081 = vadd.f32 %v1080, 1e-05
  %v1082 = vrsqrt.pop %v1081
  %v1083 = vld [vmem:[%s8] sm:$0x1]
  %v1084 = vmul.f32 %v1083, %v1082
  %v1085 = vld [vmem:[%s9] sm:$0x1]
  %v1086 = vmul.f32 %v1077, %v1084
  %v1087 = vsub.f32 %v1085, %v1086
  %v1089 = vlaneseq
  %v1090 = vshrl.u32 %v1089, 7
  %v1091 = vsub.s32 0, %v1090
  %v1092 = vrot.slane %v1084, %v1091
  %1093 = vrot.lane.b32.xlu0 %v1092, 32
  %v1094 = vpop.permute.xlu0 %1093
  %1096 = vrot.lane.b32.xlu0 %v1092, 64
  %v1097 = vpop.permute.xlu0 %1096
  %1099 = vrot.lane.b32.xlu0 %v1092, 96
  %v1100 = vpop.permute.xlu0 %1099
  %vm1102 = vcmask 261120
  %v1103 = vsel %vm1102, %v1084, %v1094
  %v1104 = vsel %vm432, %v1103, %v1097
  %vm1105 = vcmask 785408
  %v1106 = vsel %vm1105, %v1104, %v1100
  %v1108 = vlaneseq
  %v1109 = vshrl.u32 %v1108, 7
  %v1110 = vsub.s32 0, %v1109
  %v1111 = vrot.slane %v1087, %v1110
  %1112 = vrot.lane.b32.xlu0 %v1111, 32
  %v1113 = vpop.permute.xlu0 %1112
  %1115 = vrot.lane.b32.xlu0 %v1111, 64
  %v1116 = vpop.permute.xlu0 %1115
  %1118 = vrot.lane.b32.xlu0 %v1111, 96
  %v1119 = vpop.permute.xlu0 %1118
  %v1121 = vsel %vm1102, %v1087, %v1113
  %v1122 = vsel %vm432, %v1121, %v1116
  %v1123 = vsel %vm1105, %v1122, %v1119
  %v1124 = vlaneseq
  %v1125 = vshrl.u32 %v1124, 7
  %v1126 = vsub.s32 0, %v1125
  %v1127 = vrot.slane %v1106, %v1126
  %v1128 = vmul.f32 %v562, %v1127
  %v1129 = vmul.f32 %v663, %v1127
  %v1130 = vmul.f32 %v760, %v1127
  %v1131 = vmul.f32 %v861, %v1127
  %v1132 = vmul.f32 %v567, %v1127
  %v1133 = vmul.f32 %v668, %v1127
  %v1134 = vmul.f32 %v765, %v1127
  %v1135 = vmul.f32 %v866, %v1127
  %v1136 = vmul.f32 %v572, %v1127
  %v1137 = vmul.f32 %v673, %v1127
  %v1138 = vmul.f32 %v770, %v1127
  %v1139 = vmul.f32 %v871, %v1127
  %v1140 = vmul.f32 %v577, %v1127
  %v1141 = vmul.f32 %v678, %v1127
  %v1142 = vmul.f32 %v775, %v1127
  %v1143 = vmul.f32 %v876, %v1127
  %v1144 = vlaneseq
  %v1145 = vshrl.u32 %v1144, 7
  %v1146 = vsub.s32 0, %v1145
  %v1147 = vrot.slane %v1123, %v1146
  %v1148 = vadd.f32 %v1128, %v1147
  %v1149 = vadd.f32 %v1129, %v1147
  %v1150 = vadd.f32 %v1130, %v1147
  %v1151 = vadd.f32 %v1131, %v1147
  %v1152 = vadd.f32 %v1132, %v1147
  %v1153 = vadd.f32 %v1133, %v1147
  %v1154 = vadd.f32 %v1134, %v1147
  %v1155 = vadd.f32 %v1135, %v1147
  %v1156 = vadd.f32 %v1136, %v1147
  %v1157 = vadd.f32 %v1137, %v1147
  %v1158 = vadd.f32 %v1138, %v1147
  %v1159 = vadd.f32 %v1139, %v1147
  %v1160 = vadd.f32 %v1140, %v1147
  %v1161 = vadd.f32 %v1141, %v1147
  %v1162 = vadd.f32 %v1142, %v1147
  %v1163 = vadd.f32 %v1143, %v1147
  %v1164 = vmax.f32 %v1148, 0.0
  %v1165 = vmax.f32 %v1149, 0.0
  %v1166 = vmax.f32 %v1150, 0.0
  %v1167 = vmax.f32 %v1151, 0.0
  %v1168 = vmax.f32 %v1152, 0.0
  %v1169 = vmax.f32 %v1153, 0.0
  %v1170 = vmax.f32 %v1154, 0.0
  %v1171 = vmax.f32 %v1155, 0.0
  %v1172 = vmax.f32 %v1156, 0.0
  %v1173 = vmax.f32 %v1157, 0.0
  %v1174 = vmax.f32 %v1158, 0.0
  %v1175 = vmax.f32 %v1159, 0.0
  %v1176 = vmax.f32 %v1160, 0.0
  %v1177 = vmax.f32 %v1161, 0.0
  %v1178 = vmax.f32 %v1162, 0.0
  %v1179 = vmax.f32 %v1163, 0.0
  %v1180 = vld [vmem:[%s10] sm:$0xff]
  %v1181 = vld [vmem:[%s10 + $0x8] sm:$0xff]
  %v1182 = vld [vmem:[%s10 + $0x10] sm:$0xff]
  %v1183 = vld [vmem:[%s10 + $0x18] sm:$0xff]
  %v1185 = vsel %vm1102, %v1164, 0
  %v1188 = vsel %vm1102, %v1168, 0
  %v1191 = vsel %vm1102, %v1172, 0
  %v1194 = vsel %vm1102, %v1176, 0
  %1196 = vmatprep.subr.mxu0 0.0
  %1197 = vmatpush1.msra.mxu0 %v1180
  %1198 = vmatprep.subr.mxu0 0.0
  %1199 = vmatpush1.msra.mxu0 %v1181
  %1200 = vmatprep.subr.mxu0 0.0
  %1201 = vmatpush1.msra.mxu0 %v1182
  %1202 = vmatprep.subr.mxu0 0.0
  %1203 = vmatpush1.msra.mxu0 %v1183
  %1204 = vmatprep.subr.mxu0 0.0
  %1205 = vmatpush1.msra.mxu0 0.0
  %1206 = vmatprep.subr.mxu0 0.0
  %1207 = vmatpush1.msra.mxu0 0.0
  %1208 = vmatprep.subr.mxu0 0.0
  %1209 = vmatpush1.msra.mxu0 0.0
  %1210 = vmatprep.subr.mxu0 0.0
  %1211 = vmatpush1.msra.mxu0 0.0
  %1212 = vmatprep.subr.mxu0 0.0
  %1213 = vmatpush1.msra.mxu0 0.0
  %1214 = vmatprep.subr.mxu0 0.0
  %1215 = vmatpush1.msra.mxu0 0.0
  %1216 = vmatprep.subr.mxu0 0.0
  %1217 = vmatpush1.msra.mxu0 0.0
  %1218 = vmatprep.subr.mxu0 0.0
  %1219 = vmatpush1.msra.mxu0 0.0
  %1220 = vmatprep.subr.mxu0 0.0
  %1221 = vmatpush1.msra.mxu0 0.0
  %1222 = vmatprep.subr.mxu0 0.0
  %1223 = vmatpush1.msra.mxu0 0.0
  %1224 = vmatprep.subr.mxu0 0.0
  %1225 = vmatpush1.msra.mxu0 0.0
  %1226 = vmatprep.subr.mxu0 0.0
  %1227 = vmatpush1.msra.mxu0 0.0
  %1228 = vmatprep.subr.mxu0 0.0
  %1229 = vmatpush1.msra.mxu0 0.0
  %1230 = vmatprep.subr.mxu0 0.0
  %1231 = vmatpush1.msra.mxu0 0.0
  %1232 = vmatprep.subr.mxu0 0.0
  %1233 = vmatpush1.msra.mxu0 0.0
  %1234 = vmatprep.subr.mxu0 0.0
  %1235 = vmatpush1.msra.mxu0 0.0
  %1236 = vmatprep.subr.mxu0 0.0
  %1237 = vmatpush1.msra.mxu0 0.0
  %1238 = vmatprep.subr.mxu0 0.0
  %1239 = vmatpush1.msra.mxu0 0.0
  %1240 = vmatprep.subr.mxu0 0.0
  %1241 = vmatpush1.msra.mxu0 0.0
  %1242 = vmatprep.subr.mxu0 0.0
  %1243 = vmatpush1.msra.mxu0 0.0
  %1244 = vmatprep.subr.mxu0 0.0
  %1245 = vmatpush1.msra.mxu0 0.0
  %1246 = vmatprep.subr.mxu0 0.0
  %1247 = vmatpush1.msra.mxu0 0.0
  %1248 = vmatprep.subr.mxu0 0.0
  %1249 = vmatpush1.msra.mxu0 0.0
  %1250 = vmatprep.subr.mxu0 0.0
  %1251 = vmatpush1.msra.mxu0 0.0
  %1252 = vmatprep.subr.mxu0 0.0
  %1253 = vmatpush1.msra.mxu0 0.0
  %1254 = vmatprep.subr.mxu0 0.0
  %1255 = vmatpush1.msra.mxu0 0.0
  %1256 = vmatprep.subr.mxu0 0.0
  %1257 = vmatpush1.msra.mxu0 0.0
  %1258 = vmatprep.subr.mxu0 0.0
  %1259 = vmatpush1.msra.mxu0 0.0
  %1260 = vmatprep.mubr.f32.mxu0 0.0
  %1261 = vmatmul.mubr.f32.gmra.mrb[0].mxu0 %v1185
  %v1262 = vpop.f32.mrb[0].mxu0
  %v1263 = vadd.f32 0.0, %v1262
  %v1264 = vpop.f32.mrb[0].mxu0
  %1265 = vmatprep.mubr.f32.mxu0 0.0
  %1266 = vmatmul.mubr.f32.gmra.mrb[0].mxu0 %v1188
  %v1267 = vpop.f32.mrb[0].mxu0
  %v1268 = vadd.f32 0.0, %v1267
  %v1269 = vpop.f32.mrb[0].mxu0
  %1270 = vmatprep.mubr.f32.mxu0 0.0
  %1271 = vmatmul.mubr.f32.gmra.mrb[0].mxu0 %v1191
  %v1272 = vpop.f32.mrb[0].mxu0
  %v1273 = vadd.f32 0.0, %v1272
  %v1274 = vpop.f32.mrb[0].mxu0
  %1275 = vmatprep.mubr.f32.mxu0 0.0
  %1276 = vmatmul.mubr.f32.gmra.mrb[0].mxu0 %v1194
  %v1277 = vpop.f32.mrb[0].mxu0
  %v1278 = vadd.f32 0.0, %v1277
  %v1279 = vpop.f32.mrb[0].mxu0
  %1280 = vdwg.mxu0
  %1281 = vrot.lane.b32.xlu0 %v1164, 96
  %v1282 = vpop.permute.xlu0 %1281
  %1283 = vrot.lane.b32.xlu0 %v1168, 96
  %v1284 = vpop.permute.xlu0 %1283
  %1285 = vrot.lane.b32.xlu0 %v1172, 96
  %v1286 = vpop.permute.xlu0 %1285
  %1287 = vrot.lane.b32.xlu0 %v1176, 96
  %v1288 = vpop.permute.xlu0 %1287
  %v1289 = vsel %vm1102, %v1282, 0
  %v1291 = vsel %vm1102, %v1284, 0
  %v1293 = vsel %vm1102, %v1286, 0
  %v1295 = vsel %vm1102, %v1288, 0
  %1297 = vmatprep.subr.mxu0 0.0
  %1298 = vmatpush1.msra.mxu0 %v1180
  %1299 = vmatprep.subr.mxu0 0.0
  %1300 = vmatpush1.msra.mxu0 %v1181
  %1301 = vmatprep.subr.mxu0 0.0
  %1302 = vmatpush1.msra.mxu0 %v1182
  %1303 = vmatprep.subr.mxu0 0.0
  %1304 = vmatpush1.msra.mxu0 %v1183
  %1305 = vmatprep.subr.mxu0 0.0
  %1306 = vmatpush1.msra.mxu0 0.0
  %1307 = vmatprep.subr.mxu0 0.0
  %1308 = vmatpush1.msra.mxu0 0.0
  %1309 = vmatprep.subr.mxu0 0.0
  %1310 = vmatpush1.msra.mxu0 0.0
  %1311 = vmatprep.subr.mxu0 0.0
  %1312 = vmatpush1.msra.mxu0 0.0
  %1313 = vmatprep.subr.mxu0 0.0
  %1314 = vmatpush1.msra.mxu0 0.0
  %1315 = vmatprep.subr.mxu0 0.0
  %1316 = vmatpush1.msra.mxu0 0.0
  %1317 = vmatprep.subr.mxu0 0.0
  %1318 = vmatpush1.msra.mxu0 0.0
  %1319 = vmatprep.subr.mxu0 0.0
  %1320 = vmatpush1.msra.mxu0 0.0
  %1321 = vmatprep.subr.mxu0 0.0
  %1322 = vmatpush1.msra.mxu0 0.0
  %1323 = vmatprep.subr.mxu0 0.0
  %1324 = vmatpush1.msra.mxu0 0.0
  %1325 = vmatprep.subr.mxu0 0.0
  %1326 = vmatpush1.msra.mxu0 0.0
  %1327 = vmatprep.subr.mxu0 0.0
  %1328 = vmatpush1.msra.mxu0 0.0
  %1329 = vmatprep.subr.mxu0 0.0
  %1330 = vmatpush1.msra.mxu0 0.0
  %1331 = vmatprep.subr.mxu0 0.0
  %1332 = vmatpush1.msra.mxu0 0.0
  %1333 = vmatprep.subr.mxu0 0.0
  %1334 = vmatpush1.msra.mxu0 0.0
  %1335 = vmatprep.subr.mxu0 0.0
  %1336 = vmatpush1.msra.mxu0 0.0
  %1337 = vmatprep.subr.mxu0 0.0
  %1338 = vmatpush1.msra.mxu0 0.0
  %1339 = vmatprep.subr.mxu0 0.0
  %1340 = vmatpush1.msra.mxu0 0.0
  %1341 = vmatprep.subr.mxu0 0.0
  %1342 = vmatpush1.msra.mxu0 0.0
  %1343 = vmatprep.subr.mxu0 0.0
  %1344 = vmatpush1.msra.mxu0 0.0
  %1345 = vmatprep.subr.mxu0 0.0
  %1346 = vmatpush1.msra.mxu0 0.0
  %1347 = vmatprep.subr.mxu0 0.0
  %1348 = vmatpush1.msra.mxu0 0.0
  %1349 = vmatprep.subr.mxu0 0.0
  %1350 = vmatpush1.msra.mxu0 0.0
  %1351 = vmatprep.subr.mxu0 0.0
  %1352 = vmatpush1.msra.mxu0 0.0
  %1353 = vmatprep.subr.mxu0 0.0
  %1354 = vmatpush1.msra.mxu0 0.0
  %1355 = vmatprep.subr.mxu0 0.0
  %1356 = vmatpush1.msra.mxu0 0.0
  %1357 = vmatprep.subr.mxu0 0.0
  %1358 = vmatpush1.msra.mxu0 0.0
  %1359 = vmatprep.subr.mxu0 0.0
  %1360 = vmatpush1.msra.mxu0 0.0
  %1361 = vmatprep.mubr.f32.mxu0 0.0
  %1362 = vmatmul.mubr.f32.gmra.mrb[0].mxu0 %v1289
  %v1363 = vpop.f32.mrb[0].mxu0
  %v1364 = vadd.f32 0.0, %v1363
  %v1365 = vpop.f32.mrb[0].mxu0
  %1366 = vmatprep.mubr.f32.mxu0 0.0
  %1367 = vmatmul.mubr.f32.gmra.mrb[0].mxu0 %v1291
  %v1368 = vpop.f32.mrb[0].mxu0
  %v1369 = vadd.f32 0.0, %v1368
  %v1370 = vpop.f32.mrb[0].mxu0
  %1371 = vmatprep.mubr.f32.mxu0 0.0
  %1372 = vmatmul.mubr.f32.gmra.mrb[0].mxu0 %v1293
  %v1373 = vpop.f32.mrb[0].mxu0
  %v1374 = vadd.f32 0.0, %v1373
  %v1375 = vpop.f32.mrb[0].mxu0
  %1376 = vmatprep.mubr.f32.mxu0 0.0
  %1377 = vmatmul.mubr.f32.gmra.mrb[0].mxu0 %v1295
  %v1378 = vpop.f32.mrb[0].mxu0
  %v1379 = vadd.f32 0.0, %v1378
  %v1380 = vpop.f32.mrb[0].mxu0
  %1381 = vdwg.mxu0
  %1382 = vrot.lane.b32.xlu0 %v1164, 64
  %v1383 = vpop.permute.xlu0 %1382
  %1384 = vrot.lane.b32.xlu0 %v1168, 64
  %v1385 = vpop.permute.xlu0 %1384
  %1386 = vrot.lane.b32.xlu0 %v1172, 64
  %v1387 = vpop.permute.xlu0 %1386
  %1388 = vrot.lane.b32.xlu0 %v1176, 64
  %v1389 = vpop.permute.xlu0 %1388
  %v1390 = vsel %vm1102, %v1383, 0
  %v1392 = vsel %vm1102, %v1385, 0
  %v1394 = vsel %vm1102, %v1387, 0
  %v1396 = vsel %vm1102, %v1389, 0
  %1398 = vmatprep.subr.mxu0 0.0
  %1399 = vmatpush1.msra.mxu0 %v1180
  %1400 = vmatprep.subr.mxu0 0.0
  %1401 = vmatpush1.msra.mxu0 %v1181
  %1402 = vmatprep.subr.mxu0 0.0
  %1403 = vmatpush1.msra.mxu0 %v1182
  %1404 = vmatprep.subr.mxu0 0.0
  %1405 = vmatpush1.msra.mxu0 %v1183
  %1406 = vmatprep.subr.mxu0 0.0
  %1407 = vmatpush1.msra.mxu0 0.0
  %1408 = vmatprep.subr.mxu0 0.0
  %1409 = vmatpush1.msra.mxu0 0.0
  %1410 = vmatprep.subr.mxu0 0.0
  %1411 = vmatpush1.msra.mxu0 0.0
  %1412 = vmatprep.subr.mxu0 0.0
  %1413 = vmatpush1.msra.mxu0 0.0
  %1414 = vmatprep.subr.mxu0 0.0
  %1415 = vmatpush1.msra.mxu0 0.0
  %1416 = vmatprep.subr.mxu0 0.0
  %1417 = vmatpush1.msra.mxu0 0.0
  %1418 = vmatprep.subr.mxu0 0.0
  %1419 = vmatpush1.msra.mxu0 0.0
  %1420 = vmatprep.subr.mxu0 0.0
  %1421 = vmatpush1.msra.mxu0 0.0
  %1422 = vmatprep.subr.mxu0 0.0
  %1423 = vmatpush1.msra.mxu0 0.0
  %1424 = vmatprep.subr.mxu0 0.0
  %1425 = vmatpush1.msra.mxu0 0.0
  %1426 = vmatprep.subr.mxu0 0.0
  %1427 = vmatpush1.msra.mxu0 0.0
  %1428 = vmatprep.subr.mxu0 0.0
  %1429 = vmatpush1.msra.mxu0 0.0
  %1430 = vmatprep.subr.mxu0 0.0
  %1431 = vmatpush1.msra.mxu0 0.0
  %1432 = vmatprep.subr.mxu0 0.0
  %1433 = vmatpush1.msra.mxu0 0.0
  %1434 = vmatprep.subr.mxu0 0.0
  %1435 = vmatpush1.msra.mxu0 0.0
  %1436 = vmatprep.subr.mxu0 0.0
  %1437 = vmatpush1.msra.mxu0 0.0
  %1438 = vmatprep.subr.mxu0 0.0
  %1439 = vmatpush1.msra.mxu0 0.0
  %1440 = vmatprep.subr.mxu0 0.0
  %1441 = vmatpush1.msra.mxu0 0.0
  %1442 = vmatprep.subr.mxu0 0.0
  %1443 = vmatpush1.msra.mxu0 0.0
  %1444 = vmatprep.subr.mxu0 0.0
  %1445 = vmatpush1.msra.mxu0 0.0
  %1446 = vmatprep.subr.mxu0 0.0
  %1447 = vmatpush1.msra.mxu0 0.0
  %1448 = vmatprep.subr.mxu0 0.0
  %1449 = vmatpush1.msra.mxu0 0.0
  %1450 = vmatprep.subr.mxu0 0.0
  %1451 = vmatpush1.msra.mxu0 0.0
  %1452 = vmatprep.subr.mxu0 0.0
  %1453 = vmatpush1.msra.mxu0 0.0
  %1454 = vmatprep.subr.mxu0 0.0
  %1455 = vmatpush1.msra.mxu0 0.0
  %1456 = vmatprep.subr.mxu0 0.0
  %1457 = vmatpush1.msra.mxu0 0.0
  %1458 = vmatprep.subr.mxu0 0.0
  %1459 = vmatpush1.msra.mxu0 0.0
  %1460 = vmatprep.subr.mxu0 0.0
  %1461 = vmatpush1.msra.mxu0 0.0
  %1462 = vmatprep.mubr.f32.mxu0 0.0
  %1463 = vmatmul.mubr.f32.gmra.mrb[0].mxu0 %v1390
  %v1464 = vpop.f32.mrb[0].mxu0
  %v1465 = vadd.f32 0.0, %v1464
  %v1466 = vpop.f32.mrb[0].mxu0
  %1467 = vmatprep.mubr.f32.mxu0 0.0
  %1468 = vmatmul.mubr.f32.gmra.mrb[0].mxu0 %v1392
  %v1469 = vpop.f32.mrb[0].mxu0
  %v1470 = vadd.f32 0.0, %v1469
  %v1471 = vpop.f32.mrb[0].mxu0
  %1472 = vmatprep.mubr.f32.mxu0 0.0
  %1473 = vmatmul.mubr.f32.gmra.mrb[0].mxu0 %v1394
  %v1474 = vpop.f32.mrb[0].mxu0
  %v1475 = vadd.f32 0.0, %v1474
  %v1476 = vpop.f32.mrb[0].mxu0
  %1477 = vmatprep.mubr.f32.mxu0 0.0
  %1478 = vmatmul.mubr.f32.gmra.mrb[0].mxu0 %v1396
  %v1479 = vpop.f32.mrb[0].mxu0
  %v1480 = vadd.f32 0.0, %v1479
  %v1481 = vpop.f32.mrb[0].mxu0
  %1482 = vdwg.mxu0
  %1483 = vrot.lane.b32.xlu0 %v1164, 32
  %v1484 = vpop.permute.xlu0 %1483
  %1485 = vrot.lane.b32.xlu0 %v1168, 32
  %v1486 = vpop.permute.xlu0 %1485
  %1487 = vrot.lane.b32.xlu0 %v1172, 32
  %v1488 = vpop.permute.xlu0 %1487
  %1489 = vrot.lane.b32.xlu0 %v1176, 32
  %v1490 = vpop.permute.xlu0 %1489
  %v1491 = vsel %vm1102, %v1484, 0
  %v1493 = vsel %vm1102, %v1486, 0
  %v1495 = vsel %vm1102, %v1488, 0
  %v1497 = vsel %vm1102, %v1490, 0
  %1499 = vmatprep.subr.mxu0 0.0
  %1500 = vmatpush1.msra.mxu0 %v1180
  %1501 = vmatprep.subr.mxu0 0.0
  %1502 = vmatpush1.msra.mxu0 %v1181
  %1503 = vmatprep.subr.mxu0 0.0
  %1504 = vmatpush1.msra.mxu0 %v1182
  %1505 = vmatprep.subr.mxu0 0.0
  %1506 = vmatpush1.msra.mxu0 %v1183
  %1507 = vmatprep.subr.mxu0 0.0
  %1508 = vmatpush1.msra.mxu0 0.0
  %1509 = vmatprep.subr.mxu0 0.0
  %1510 = vmatpush1.msra.mxu0 0.0
  %1511 = vmatprep.subr.mxu0 0.0
  %1512 = vmatpush1.msra.mxu0 0.0
  %1513 = vmatprep.subr.mxu0 0.0
  %1514 = vmatpush1.msra.mxu0 0.0
  %1515 = vmatprep.subr.mxu0 0.0
  %1516 = vmatpush1.msra.mxu0 0.0
  %1517 = vmatprep.subr.mxu0 0.0
  %1518 = vmatpush1.msra.mxu0 0.0
  %1519 = vmatprep.subr.mxu0 0.0
  %1520 = vmatpush1.msra.mxu0 0.0
  %1521 = vmatprep.subr.mxu0 0.0
  %1522 = vmatpush1.msra.mxu0 0.0
  %1523 = vmatprep.subr.mxu0 0.0
  %1524 = vmatpush1.msra.mxu0 0.0
  %1525 = vmatprep.subr.mxu0 0.0
  %1526 = vmatpush1.msra.mxu0 0.0
  %1527 = vmatprep.subr.mxu0 0.0
  %1528 = vmatpush1.msra.mxu0 0.0
  %1529 = vmatprep.subr.mxu0 0.0
  %1530 = vmatpush1.msra.mxu0 0.0
  %1531 = vmatprep.subr.mxu0 0.0
  %1532 = vmatpush1.msra.mxu0 0.0
  %1533 = vmatprep.subr.mxu0 0.0
  %1534 = vmatpush1.msra.mxu0 0.0
  %1535 = vmatprep.subr.mxu0 0.0
  %1536 = vmatpush1.msra.mxu0 0.0
  %1537 = vmatprep.subr.mxu0 0.0
  %1538 = vmatpush1.msra.mxu0 0.0
  %1539 = vmatprep.subr.mxu0 0.0
  %1540 = vmatpush1.msra.mxu0 0.0
  %1541 = vmatprep.subr.mxu0 0.0
  %1542 = vmatpush1.msra.mxu0 0.0
  %1543 = vmatprep.subr.mxu0 0.0
  %1544 = vmatpush1.msra.mxu0 0.0
  %1545 = vmatprep.subr.mxu0 0.0
  %1546 = vmatpush1.msra.mxu0 0.0
  %1547 = vmatprep.subr.mxu0 0.0
  %1548 = vmatpush1.msra.mxu0 0.0
  %1549 = vmatprep.subr.mxu0 0.0
  %1550 = vmatpush1.msra.mxu0 0.0
  %1551 = vmatprep.subr.mxu0 0.0
  %1552 = vmatpush1.msra.mxu0 0.0
  %1553 = vmatprep.subr.mxu0 0.0
  %1554 = vmatpush1.msra.mxu0 0.0
  %1555 = vmatprep.subr.mxu0 0.0
  %1556 = vmatpush1.msra.mxu0 0.0
  %1557 = vmatprep.subr.mxu0 0.0
  %1558 = vmatpush1.msra.mxu0 0.0
  %1559 = vmatprep.subr.mxu0 0.0
  %1560 = vmatpush1.msra.mxu0 0.0
  %1561 = vmatprep.subr.mxu0 0.0
  %1562 = vmatpush1.msra.mxu0 0.0
  %1563 = vmatprep.mubr.f32.mxu0 0.0
  %1564 = vmatmul.mubr.f32.gmra.mrb[0].mxu0 %v1491
  %v1565 = vpop.f32.mrb[0].mxu0
  %v1566 = vadd.f32 0.0, %v1565
  %v1567 = vpop.f32.mrb[0].mxu0
  %1568 = vmatprep.mubr.f32.mxu0 0.0
  %1569 = vmatmul.mubr.f32.gmra.mrb[0].mxu0 %v1493
  %v1570 = vpop.f32.mrb[0].mxu0
  %v1571 = vadd.f32 0.0, %v1570
  %v1572 = vpop.f32.mrb[0].mxu0
  %1573 = vmatprep.mubr.f32.mxu0 0.0
  %1574 = vmatmul.mubr.f32.gmra.mrb[0].mxu0 %v1495
  %v1575 = vpop.f32.mrb[0].mxu0
  %v1576 = vadd.f32 0.0, %v1575
  %v1577 = vpop.f32.mrb[0].mxu0
  %1578 = vmatprep.mubr.f32.mxu0 0.0
  %1579 = vmatmul.mubr.f32.gmra.mrb[0].mxu0 %v1497
  %v1580 = vpop.f32.mrb[0].mxu0
  %v1581 = vadd.f32 0.0, %v1580
  %v1582 = vpop.f32.mrb[0].mxu0
  %1583 = vdwg.mxu0
  %v1585 = vsel %vm1102, %v1165, 0
  %v1588 = vsel %vm1102, %v1169, 0
  %v1591 = vsel %vm1102, %v1173, 0
  %v1594 = vsel %vm1102, %v1177, 0
  %1596 = vmatprep.subr.mxu0 0.0
  %1597 = vmatpush1.msra.mxu0 %v1180
  %1598 = vmatprep.subr.mxu0 0.0
  %1599 = vmatpush1.msra.mxu0 %v1181
  %1600 = vmatprep.subr.mxu0 0.0
  %1601 = vmatpush1.msra.mxu0 %v1182
  %1602 = vmatprep.subr.mxu0 0.0
  %1603 = vmatpush1.msra.mxu0 %v1183
  %1604 = vmatprep.subr.mxu0 0.0
  %1605 = vmatpush1.msra.mxu0 0.0
  %1606 = vmatprep.subr.mxu0 0.0
  %1607 = vmatpush1.msra.mxu0 0.0
  %1608 = vmatprep.subr.mxu0 0.0
  %1609 = vmatpush1.msra.mxu0 0.0
  %1610 = vmatprep.subr.mxu0 0.0
  %1611 = vmatpush1.msra.mxu0 0.0
  %1612 = vmatprep.subr.mxu0 0.0
  %1613 = vmatpush1.msra.mxu0 0.0
  %1614 = vmatprep.subr.mxu0 0.0
  %1615 = vmatpush1.msra.mxu0 0.0
  %1616 = vmatprep.subr.mxu0 0.0
  %1617 = vmatpush1.msra.mxu0 0.0
  %1618 = vmatprep.subr.mxu0 0.0
  %1619 = vmatpush1.msra.mxu0 0.0
  %1620 = vmatprep.subr.mxu0 0.0
  %1621 = vmatpush1.msra.mxu0 0.0
  %1622 = vmatprep.subr.mxu0 0.0
  %1623 = vmatpush1.msra.mxu0 0.0
  %1624 = vmatprep.subr.mxu0 0.0
  %1625 = vmatpush1.msra.mxu0 0.0
  %1626 = vmatprep.subr.mxu0 0.0
  %1627 = vmatpush1.msra.mxu0 0.0
  %1628 = vmatprep.subr.mxu0 0.0
  %1629 = vmatpush1.msra.mxu0 0.0
  %1630 = vmatprep.subr.mxu0 0.0
  %1631 = vmatpush1.msra.mxu0 0.0
  %1632 = vmatprep.subr.mxu0 0.0
  %1633 = vmatpush1.msra.mxu0 0.0
  %1634 = vmatprep.subr.mxu0 0.0
  %1635 = vmatpush1.msra.mxu0 0.0
  %1636 = vmatprep.subr.mxu0 0.0
  %1637 = vmatpush1.msra.mxu0 0.0
  %1638 = vmatprep.subr.mxu0 0.0
  %1639 = vmatpush1.msra.mxu0 0.0
  %1640 = vmatprep.subr.mxu0 0.0
  %1641 = vmatpush1.msra.mxu0 0.0
  %1642 = vmatprep.subr.mxu0 0.0
  %1643 = vmatpush1.msra.mxu0 0.0
  %1644 = vmatprep.subr.mxu0 0.0
  %1645 = vmatpush1.msra.mxu0 0.0
  %1646 = vmatprep.subr.mxu0 0.0
  %1647 = vmatpush1.msra.mxu0 0.0
  %1648 = vmatprep.subr.mxu0 0.0
  %1649 = vmatpush1.msra.mxu0 0.0
  %1650 = vmatprep.subr.mxu0 0.0
  %1651 = vmatpush1.msra.mxu0 0.0
  %1652 = vmatprep.subr.mxu0 0.0
  %1653 = vmatpush1.msra.mxu0 0.0
  %1654 = vmatprep.subr.mxu0 0.0
  %1655 = vmatpush1.msra.mxu0 0.0
  %1656 = vmatprep.subr.mxu0 0.0
  %1657 = vmatpush1.msra.mxu0 0.0
  %1658 = vmatprep.subr.mxu0 0.0
  %1659 = vmatpush1.msra.mxu0 0.0
  %1660 = vmatprep.mubr.f32.mxu0 0.0
  %1661 = vmatmul.mubr.f32.gmra.mrb[0].mxu0 %v1585
  %v1662 = vpop.f32.mrb[0].mxu0
  %v1663 = vadd.f32 0.0, %v1662
  %v1664 = vpop.f32.mrb[0].mxu0
  %1665 = vmatprep.mubr.f32.mxu0 0.0
  %1666 = vmatmul.mubr.f32.gmra.mrb[0].mxu0 %v1588
  %v1667 = vpop.f32.mrb[0].mxu0
  %v1668 = vadd.f32 0.0, %v1667
  %v1669 = vpop.f32.mrb[0].mxu0
  %1670 = vmatprep.mubr.f32.mxu0 0.0
  %1671 = vmatmul.mubr.f32.gmra.mrb[0].mxu0 %v1591
  %v1672 = vpop.f32.mrb[0].mxu0
  %v1673 = vadd.f32 0.0, %v1672
  %v1674 = vpop.f32.mrb[0].mxu0
  %1675 = vmatprep.mubr.f32.mxu0 0.0
  %1676 = vmatmul.mubr.f32.gmra.mrb[0].mxu0 %v1594
  %v1677 = vpop.f32.mrb[0].mxu0
  %v1678 = vadd.f32 0.0, %v1677
  %v1679 = vpop.f32.mrb[0].mxu0
  %1680 = vdwg.mxu0
  %1681 = vrot.lane.b32.xlu0 %v1165, 96
  %v1682 = vpop.permute.xlu0 %1681
  %1683 = vrot.lane.b32.xlu0 %v1169, 96
  %v1684 = vpop.permute.xlu0 %1683
  %1685 = vrot.lane.b32.xlu0 %v1173, 96
  %v1686 = vpop.permute.xlu0 %1685
  %1687 = vrot.lane.b32.xlu0 %v1177, 96
  %v1688 = vpop.permute.xlu0 %1687
  %v1689 = vsel %vm1102, %v1682, 0
  %v1691 = vsel %vm1102, %v1684, 0
  %v1693 = vsel %vm1102, %v1686, 0
  %v1695 = vsel %vm1102, %v1688, 0
  %1697 = vmatprep.subr.mxu0 0.0
  %1698 = vmatpush1.msra.mxu0 %v1180
  %1699 = vmatprep.subr.mxu0 0.0
  %1700 = vmatpush1.msra.mxu0 %v1181
  %1701 = vmatprep.subr.mxu0 0.0
  %1702 = vmatpush1.msra.mxu0 %v1182
  %1703 = vmatprep.subr.mxu0 0.0
  %1704 = vmatpush1.msra.mxu0 %v1183
  %1705 = vmatprep.subr.mxu0 0.0
  %1706 = vmatpush1.msra.mxu0 0.0
  %1707 = vmatprep.subr.mxu0 0.0
  %1708 = vmatpush1.msra.mxu0 0.0
  %1709 = vmatprep.subr.mxu0 0.0
  %1710 = vmatpush1.msra.mxu0 0.0
  %1711 = vmatprep.subr.mxu0 0.0
  %1712 = vmatpush1.msra.mxu0 0.0
  %1713 = vmatprep.subr.mxu0 0.0
  %1714 = vmatpush1.msra.mxu0 0.0
  %1715 = vmatprep.subr.mxu0 0.0
  %1716 = vmatpush1.msra.mxu0 0.0
  %1717 = vmatprep.subr.mxu0 0.0
  %1718 = vmatpush1.msra.mxu0 0.0
  %1719 = vmatprep.subr.mxu0 0.0
  %1720 = vmatpush1.msra.mxu0 0.0
  %1721 = vmatprep.subr.mxu0 0.0
  %1722 = vmatpush1.msra.mxu0 0.0
  %1723 = vmatprep.subr.mxu0 0.0
  %1724 = vmatpush1.msra.mxu0 0.0
  %1725 = vmatprep.subr.mxu0 0.0
  %1726 = vmatpush1.msra.mxu0 0.0
  %1727 = vmatprep.subr.mxu0 0.0
  %1728 = vmatpush1.msra.mxu0 0.0
  %1729 = vmatprep.subr.mxu0 0.0
  %1730 = vmatpush1.msra.mxu0 0.0
  %1731 = vmatprep.subr.mxu0 0.0
  %1732 = vmatpush1.msra.mxu0 0.0
  %1733 = vmatprep.subr.mxu0 0.0
  %1734 = vmatpush1.msra.mxu0 0.0
  %1735 = vmatprep.subr.mxu0 0.0
  %1736 = vmatpush1.msra.mxu0 0.0
  %1737 = vmatprep.subr.mxu0 0.0
  %1738 = vmatpush1.msra.mxu0 0.0
  %1739 = vmatprep.subr.mxu0 0.0
  %1740 = vmatpush1.msra.mxu0 0.0
  %1741 = vmatprep.subr.mxu0 0.0
  %1742 = vmatpush1.msra.mxu0 0.0
  %1743 = vmatprep.subr.mxu0 0.0
  %1744 = vmatpush1.msra.mxu0 0.0
  %1745 = vmatprep.subr.mxu0 0.0
  %1746 = vmatpush1.msra.mxu0 0.0
  %1747 = vmatprep.subr.mxu0 0.0
  %1748 = vmatpush1.msra.mxu0 0.0
  %1749 = vmatprep.subr.mxu0 0.0
  %1750 = vmatpush1.msra.mxu0 0.0
  %1751 = vmatprep.subr.mxu0 0.0
  %1752 = vmatpush1.msra.mxu0 0.0
  %1753 = vmatprep.subr.mxu0 0.0
  %1754 = vmatpush1.msra.mxu0 0.0
  %1755 = vmatprep.subr.mxu0 0.0
  %1756 = vmatpush1.msra.mxu0 0.0
  %1757 = vmatprep.subr.mxu0 0.0
  %1758 = vmatpush1.msra.mxu0 0.0
  %1759 = vmatprep.subr.mxu0 0.0
  %1760 = vmatpush1.msra.mxu0 0.0
  %1761 = vmatprep.mubr.f32.mxu0 0.0
  %1762 = vmatmul.mubr.f32.gmra.mrb[0].mxu0 %v1689
  %v1763 = vpop.f32.mrb[0].mxu0
  %v1764 = vadd.f32 0.0, %v1763
  %v1765 = vpop.f32.mrb[0].mxu0
  %1766 = vmatprep.mubr.f32.mxu0 0.0
  %1767 = vmatmul.mubr.f32.gmra.mrb[0].mxu0 %v1691
  %v1768 = vpop.f32.mrb[0].mxu0
  %v1769 = vadd.f32 0.0, %v1768
  %v1770 = vpop.f32.mrb[0].mxu0
  %1771 = vmatprep.mubr.f32.mxu0 0.0
  %1772 = vmatmul.mubr.f32.gmra.mrb[0].mxu0 %v1693
  %v1773 = vpop.f32.mrb[0].mxu0
  %v1774 = vadd.f32 0.0, %v1773
  %v1775 = vpop.f32.mrb[0].mxu0
  %1776 = vmatprep.mubr.f32.mxu0 0.0
  %1777 = vmatmul.mubr.f32.gmra.mrb[0].mxu0 %v1695
  %v1778 = vpop.f32.mrb[0].mxu0
  %v1779 = vadd.f32 0.0, %v1778
  %v1780 = vpop.f32.mrb[0].mxu0
  %1781 = vdwg.mxu0
  %1782 = vrot.lane.b32.xlu0 %v1165, 64
  %v1783 = vpop.permute.xlu0 %1782
  %1784 = vrot.lane.b32.xlu0 %v1169, 64
  %v1785 = vpop.permute.xlu0 %1784
  %1786 = vrot.lane.b32.xlu0 %v1173, 64
  %v1787 = vpop.permute.xlu0 %1786
  %1788 = vrot.lane.b32.xlu0 %v1177, 64
  %v1789 = vpop.permute.xlu0 %1788
  %v1790 = vsel %vm1102, %v1783, 0
  %v1792 = vsel %vm1102, %v1785, 0
  %v1794 = vsel %vm1102, %v1787, 0
  %v1796 = vsel %vm1102, %v1789, 0
  %1798 = vmatprep.subr.mxu0 0.0
  %1799 = vmatpush1.msra.mxu0 %v1180
  %1800 = vmatprep.subr.mxu0 0.0
  %1801 = vmatpush1.msra.mxu0 %v1181
  %1802 = vmatprep.subr.mxu0 0.0
  %1803 = vmatpush1.msra.mxu0 %v1182
  %1804 = vmatprep.subr.mxu0 0.0
  %1805 = vmatpush1.msra.mxu0 %v1183
  %1806 = vmatprep.subr.mxu0 0.0
  %1807 = vmatpush1.msra.mxu0 0.0
  %1808 = vmatprep.subr.mxu0 0.0
  %1809 = vmatpush1.msra.mxu0 0.0
  %1810 = vmatprep.subr.mxu0 0.0
  %1811 = vmatpush1.msra.mxu0 0.0
  %1812 = vmatprep.subr.mxu0 0.0
  %1813 = vmatpush1.msra.mxu0 0.0
  %1814 = vmatprep.subr.mxu0 0.0
  %1815 = vmatpush1.msra.mxu0 0.0
  %1816 = vmatprep.subr.mxu0 0.0
  %1817 = vmatpush1.msra.mxu0 0.0
  %1818 = vmatprep.subr.mxu0 0.0
  %1819 = vmatpush1.msra.mxu0 0.0
  %1820 = vmatprep.subr.mxu0 0.0
  %1821 = vmatpush1.msra.mxu0 0.0
  %1822 = vmatprep.subr.mxu0 0.0
  %1823 = vmatpush1.msra.mxu0 0.0
  %1824 = vmatprep.subr.mxu0 0.0
  %1825 = vmatpush1.msra.mxu0 0.0
  %1826 = vmatprep.subr.mxu0 0.0
  %1827 = vmatpush1.msra.mxu0 0.0
  %1828 = vmatprep.subr.mxu0 0.0
  %1829 = vmatpush1.msra.mxu0 0.0
  %1830 = vmatprep.subr.mxu0 0.0
  %1831 = vmatpush1.msra.mxu0 0.0
  %1832 = vmatprep.subr.mxu0 0.0
  %1833 = vmatpush1.msra.mxu0 0.0
  %1834 = vmatprep.subr.mxu0 0.0
  %1835 = vmatpush1.msra.mxu0 0.0
  %1836 = vmatprep.subr.mxu0 0.0
  %1837 = vmatpush1.msra.mxu0 0.0
  %1838 = vmatprep.subr.mxu0 0.0
  %1839 = vmatpush1.msra.mxu0 0.0
  %1840 = vmatprep.subr.mxu0 0.0
  %1841 = vmatpush1.msra.mxu0 0.0
  %1842 = vmatprep.subr.mxu0 0.0
  %1843 = vmatpush1.msra.mxu0 0.0
  %1844 = vmatprep.subr.mxu0 0.0
  %1845 = vmatpush1.msra.mxu0 0.0
  %1846 = vmatprep.subr.mxu0 0.0
  %1847 = vmatpush1.msra.mxu0 0.0
  %1848 = vmatprep.subr.mxu0 0.0
  %1849 = vmatpush1.msra.mxu0 0.0
  %1850 = vmatprep.subr.mxu0 0.0
  %1851 = vmatpush1.msra.mxu0 0.0
  %1852 = vmatprep.subr.mxu0 0.0
  %1853 = vmatpush1.msra.mxu0 0.0
  %1854 = vmatprep.subr.mxu0 0.0
  %1855 = vmatpush1.msra.mxu0 0.0
  %1856 = vmatprep.subr.mxu0 0.0
  %1857 = vmatpush1.msra.mxu0 0.0
  %1858 = vmatprep.subr.mxu0 0.0
  %1859 = vmatpush1.msra.mxu0 0.0
  %1860 = vmatprep.subr.mxu0 0.0
  %1861 = vmatpush1.msra.mxu0 0.0
  %1862 = vmatprep.mubr.f32.mxu0 0.0
  %1863 = vmatmul.mubr.f32.gmra.mrb[0].mxu0 %v1790
  %v1864 = vpop.f32.mrb[0].mxu0
  %v1865 = vadd.f32 0.0, %v1864
  %v1866 = vpop.f32.mrb[0].mxu0
  %1867 = vmatprep.mubr.f32.mxu0 0.0
  %1868 = vmatmul.mubr.f32.gmra.mrb[0].mxu0 %v1792
  %v1869 = vpop.f32.mrb[0].mxu0
  %v1870 = vadd.f32 0.0, %v1869
  %v1871 = vpop.f32.mrb[0].mxu0
  %1872 = vmatprep.mubr.f32.mxu0 0.0
  %1873 = vmatmul.mubr.f32.gmra.mrb[0].mxu0 %v1794
  %v1874 = vpop.f32.mrb[0].mxu0
  %v1875 = vadd.f32 0.0, %v1874
  %v1876 = vpop.f32.mrb[0].mxu0
  %1877 = vmatprep.mubr.f32.mxu0 0.0
  %1878 = vmatmul.mubr.f32.gmra.mrb[0].mxu0 %v1796
  %v1879 = vpop.f32.mrb[0].mxu0
  %v1880 = vadd.f32 0.0, %v1879
  %v1881 = vpop.f32.mrb[0].mxu0
  %1882 = vdwg.mxu0
  %1883 = vrot.lane.b32.xlu0 %v1165, 32
  %v1884 = vpop.permute.xlu0 %1883
  %1885 = vrot.lane.b32.xlu0 %v1169, 32
  %v1886 = vpop.permute.xlu0 %1885
  %1887 = vrot.lane.b32.xlu0 %v1173, 32
  %v1888 = vpop.permute.xlu0 %1887
  %1889 = vrot.lane.b32.xlu0 %v1177, 32
  %v1890 = vpop.permute.xlu0 %1889
  %v1891 = vsel %vm1102, %v1884, 0
  %v1893 = vsel %vm1102, %v1886, 0
  %v1895 = vsel %vm1102, %v1888, 0
  %v1897 = vsel %vm1102, %v1890, 0
  %1899 = vmatprep.subr.mxu0 0.0
  %1900 = vmatpush1.msra.mxu0 %v1180
  %1901 = vmatprep.subr.mxu0 0.0
  %1902 = vmatpush1.msra.mxu0 %v1181
  %1903 = vmatprep.subr.mxu0 0.0
  %1904 = vmatpush1.msra.mxu0 %v1182
  %1905 = vmatprep.subr.mxu0 0.0
  %1906 = vmatpush1.msra.mxu0 %v1183
  %1907 = vmatprep.subr.mxu0 0.0
  %1908 = vmatpush1.msra.mxu0 0.0
  %1909 = vmatprep.subr.mxu0 0.0
  %1910 = vmatpush1.msra.mxu0 0.0
  %1911 = vmatprep.subr.mxu0 0.0
  %1912 = vmatpush1.msra.mxu0 0.0
  %1913 = vmatprep.subr.mxu0 0.0
  %1914 = vmatpush1.msra.mxu0 0.0
  %1915 = vmatprep.subr.mxu0 0.0
  %1916 = vmatpush1.msra.mxu0 0.0
  %1917 = vmatprep.subr.mxu0 0.0
  %1918 = vmatpush1.msra.mxu0 0.0
  %1919 = vmatprep.subr.mxu0 0.0
  %1920 = vmatpush1.msra.mxu0 0.0
  %1921 = vmatprep.subr.mxu0 0.0
  %1922 = vmatpush1.msra.mxu0 0.0
  %1923 = vmatprep.subr.mxu0 0.0
  %1924 = vmatpush1.msra.mxu0 0.0
  %1925 = vmatprep.subr.mxu0 0.0
  %1926 = vmatpush1.msra.mxu0 0.0
  %1927 = vmatprep.subr.mxu0 0.0
  %1928 = vmatpush1.msra.mxu0 0.0
  %1929 = vmatprep.subr.mxu0 0.0
  %1930 = vmatpush1.msra.mxu0 0.0
  %1931 = vmatprep.subr.mxu0 0.0
  %1932 = vmatpush1.msra.mxu0 0.0
  %1933 = vmatprep.subr.mxu0 0.0
  %1934 = vmatpush1.msra.mxu0 0.0
  %1935 = vmatprep.subr.mxu0 0.0
  %1936 = vmatpush1.msra.mxu0 0.0
  %1937 = vmatprep.subr.mxu0 0.0
  %1938 = vmatpush1.msra.mxu0 0.0
  %1939 = vmatprep.subr.mxu0 0.0
  %1940 = vmatpush1.msra.mxu0 0.0
  %1941 = vmatprep.subr.mxu0 0.0
  %1942 = vmatpush1.msra.mxu0 0.0
  %1943 = vmatprep.subr.mxu0 0.0
  %1944 = vmatpush1.msra.mxu0 0.0
  %1945 = vmatprep.subr.mxu0 0.0
  %1946 = vmatpush1.msra.mxu0 0.0
  %1947 = vmatprep.subr.mxu0 0.0
  %1948 = vmatpush1.msra.mxu0 0.0
  %1949 = vmatprep.subr.mxu0 0.0
  %1950 = vmatpush1.msra.mxu0 0.0
  %1951 = vmatprep.subr.mxu0 0.0
  %1952 = vmatpush1.msra.mxu0 0.0
  %1953 = vmatprep.subr.mxu0 0.0
  %1954 = vmatpush1.msra.mxu0 0.0
  %1955 = vmatprep.subr.mxu0 0.0
  %1956 = vmatpush1.msra.mxu0 0.0
  %1957 = vmatprep.subr.mxu0 0.0
  %1958 = vmatpush1.msra.mxu0 0.0
  %1959 = vmatprep.subr.mxu0 0.0
  %1960 = vmatpush1.msra.mxu0 0.0
  %1961 = vmatprep.subr.mxu0 0.0
  %1962 = vmatpush1.msra.mxu0 0.0
  %1963 = vmatprep.mubr.f32.mxu0 0.0
  %1964 = vmatmul.mubr.f32.gmra.mrb[0].mxu0 %v1891
  %v1965 = vpop.f32.mrb[0].mxu0
  %v1966 = vadd.f32 0.0, %v1965
  %v1967 = vpop.f32.mrb[0].mxu0
  %1968 = vmatprep.mubr.f32.mxu0 0.0
  %1969 = vmatmul.mubr.f32.gmra.mrb[0].mxu0 %v1893
  %v1970 = vpop.f32.mrb[0].mxu0
  %v1971 = vadd.f32 0.0, %v1970
  %v1972 = vpop.f32.mrb[0].mxu0
  %1973 = vmatprep.mubr.f32.mxu0 0.0
  %1974 = vmatmul.mubr.f32.gmra.mrb[0].mxu0 %v1895
  %v1975 = vpop.f32.mrb[0].mxu0
  %v1976 = vadd.f32 0.0, %v1975
  %v1977 = vpop.f32.mrb[0].mxu0
  %1978 = vmatprep.mubr.f32.mxu0 0.0
  %1979 = vmatmul.mubr.f32.gmra.mrb[0].mxu0 %v1897
  %v1980 = vpop.f32.mrb[0].mxu0
  %v1981 = vadd.f32 0.0, %v1980
  %v1982 = vpop.f32.mrb[0].mxu0
  %1983 = vdwg.mxu0
  %v1985 = vsel %vm1102, %v1166, 0
  %v1988 = vsel %vm1102, %v1170, 0
  %v1991 = vsel %vm1102, %v1174, 0
  %v1994 = vsel %vm1102, %v1178, 0
  %1996 = vmatprep.subr.mxu0 0.0
  %1997 = vmatpush1.msra.mxu0 %v1180
  %1998 = vmatprep.subr.mxu0 0.0
  %1999 = vmatpush1.msra.mxu0 %v1181
  %2000 = vmatprep.subr.mxu0 0.0
  %2001 = vmatpush1.msra.mxu0 %v1182
  %2002 = vmatprep.subr.mxu0 0.0
  %2003 = vmatpush1.msra.mxu0 %v1183
  %2004 = vmatprep.subr.mxu0 0.0
  %2005 = vmatpush1.msra.mxu0 0.0
  %2006 = vmatprep.subr.mxu0 0.0
  %2007 = vmatpush1.msra.mxu0 0.0
  %2008 = vmatprep.subr.mxu0 0.0
  %2009 = vmatpush1.msra.mxu0 0.0
  %2010 = vmatprep.subr.mxu0 0.0
  %2011 = vmatpush1.msra.mxu0 0.0
  %2012 = vmatprep.subr.mxu0 0.0
  %2013 = vmatpush1.msra.mxu0 0.0
  %2014 = vmatprep.subr.mxu0 0.0
  %2015 = vmatpush1.msra.mxu0 0.0
  %2016 = vmatprep.subr.mxu0 0.0
  %2017 = vmatpush1.msra.mxu0 0.0
  %2018 = vmatprep.subr.mxu0 0.0
  %2019 = vmatpush1.msra.mxu0 0.0
  %2020 = vmatprep.subr.mxu0 0.0
  %2021 = vmatpush1.msra.mxu0 0.0
  %2022 = vmatprep.subr.mxu0 0.0
  %2023 = vmatpush1.msra.mxu0 0.0
  %2024 = vmatprep.subr.mxu0 0.0
  %2025 = vmatpush1.msra.mxu0 0.0
  %2026 = vmatprep.subr.mxu0 0.0
  %2027 = vmatpush1.msra.mxu0 0.0
  %2028 = vmatprep.subr.mxu0 0.0
  %2029 = vmatpush1.msra.mxu0 0.0
  %2030 = vmatprep.subr.mxu0 0.0
  %2031 = vmatpush1.msra.mxu0 0.0
  %2032 = vmatprep.subr.mxu0 0.0
  %2033 = vmatpush1.msra.mxu0 0.0
  %2034 = vmatprep.subr.mxu0 0.0
  %2035 = vmatpush1.msra.mxu0 0.0
  %2036 = vmatprep.subr.mxu0 0.0
  %2037 = vmatpush1.msra.mxu0 0.0
  %2038 = vmatprep.subr.mxu0 0.0
  %2039 = vmatpush1.msra.mxu0 0.0
  %2040 = vmatprep.subr.mxu0 0.0
  %2041 = vmatpush1.msra.mxu0 0.0
  %2042 = vmatprep.subr.mxu0 0.0
  %2043 = vmatpush1.msra.mxu0 0.0
  %2044 = vmatprep.subr.mxu0 0.0
  %2045 = vmatpush1.msra.mxu0 0.0
  %2046 = vmatprep.subr.mxu0 0.0
  %2047 = vmatpush1.msra.mxu0 0.0
  %2048 = vmatprep.subr.mxu0 0.0
  %2049 = vmatpush1.msra.mxu0 0.0
  %2050 = vmatprep.subr.mxu0 0.0
  %2051 = vmatpush1.msra.mxu0 0.0
  %2052 = vmatprep.subr.mxu0 0.0
  %2053 = vmatpush1.msra.mxu0 0.0
  %2054 = vmatprep.subr.mxu0 0.0
  %2055 = vmatpush1.msra.mxu0 0.0
  %2056 = vmatprep.subr.mxu0 0.0
  %2057 = vmatpush1.msra.mxu0 0.0
  %2058 = vmatprep.subr.mxu0 0.0
  %2059 = vmatpush1.msra.mxu0 0.0
  %2060 = vmatprep.mubr.f32.mxu0 0.0
  %2061 = vmatmul.mubr.f32.gmra.mrb[0].mxu0 %v1985
  %v2062 = vpop.f32.mrb[0].mxu0
  %v2063 = vadd.f32 0.0, %v2062
  %v2064 = vpop.f32.mrb[0].mxu0
  %2065 = vmatprep.mubr.f32.mxu0 0.0
  %2066 = vmatmul.mubr.f32.gmra.mrb[0].mxu0 %v1988
  %v2067 = vpop.f32.mrb[0].mxu0
  %v2068 = vadd.f32 0.0, %v2067
  %v2069 = vpop.f32.mrb[0].mxu0
  %2070 = vmatprep.mubr.f32.mxu0 0.0
  %2071 = vmatmul.mubr.f32.gmra.mrb[0].mxu0 %v1991
  %v2072 = vpop.f32.mrb[0].mxu0
  %v2073 = vadd.f32 0.0, %v2072
  %v2074 = vpop.f32.mrb[0].mxu0
  %2075 = vmatprep.mubr.f32.mxu0 0.0
  %2076 = vmatmul.mubr.f32.gmra.mrb[0].mxu0 %v1994
  %v2077 = vpop.f32.mrb[0].mxu0
  %v2078 = vadd.f32 0.0, %v2077
  %v2079 = vpop.f32.mrb[0].mxu0
  %2080 = vdwg.mxu0
  %2081 = vrot.lane.b32.xlu0 %v1166, 96
  %v2082 = vpop.permute.xlu0 %2081
  %2083 = vrot.lane.b32.xlu0 %v1170, 96
  %v2084 = vpop.permute.xlu0 %2083
  %2085 = vrot.lane.b32.xlu0 %v1174, 96
  %v2086 = vpop.permute.xlu0 %2085
  %2087 = vrot.lane.b32.xlu0 %v1178, 96
  %v2088 = vpop.permute.xlu0 %2087
  %v2089 = vsel %vm1102, %v2082, 0
  %v2091 = vsel %vm1102, %v2084, 0
  %v2093 = vsel %vm1102, %v2086, 0
  %v2095 = vsel %vm1102, %v2088, 0
  %2097 = vmatprep.subr.mxu0 0.0
  %2098 = vmatpush1.msra.mxu0 %v1180
  %2099 = vmatprep.subr.mxu0 0.0
  %2100 = vmatpush1.msra.mxu0 %v1181
  %2101 = vmatprep.subr.mxu0 0.0
  %2102 = vmatpush1.msra.mxu0 %v1182
  %2103 = vmatprep.subr.mxu0 0.0
  %2104 = vmatpush1.msra.mxu0 %v1183
  %2105 = vmatprep.subr.mxu0 0.0
  %2106 = vmatpush1.msra.mxu0 0.0
  %2107 = vmatprep.subr.mxu0 0.0
  %2108 = vmatpush1.msra.mxu0 0.0
  %2109 = vmatprep.subr.mxu0 0.0
  %2110 = vmatpush1.msra.mxu0 0.0
  %2111 = vmatprep.subr.mxu0 0.0
  %2112 = vmatpush1.msra.mxu0 0.0
  %2113 = vmatprep.subr.mxu0 0.0
  %2114 = vmatpush1.msra.mxu0 0.0
  %2115 = vmatprep.subr.mxu0 0.0
  %2116 = vmatpush1.msra.mxu0 0.0
  %2117 = vmatprep.subr.mxu0 0.0
  %2118 = vmatpush1.msra.mxu0 0.0
  %2119 = vmatprep.subr.mxu0 0.0
  %2120 = vmatpush1.msra.mxu0 0.0
  %2121 = vmatprep.subr.mxu0 0.0
  %2122 = vmatpush1.msra.mxu0 0.0
  %2123 = vmatprep.subr.mxu0 0.0
  %2124 = vmatpush1.msra.mxu0 0.0
  %2125 = vmatprep.subr.mxu0 0.0
  %2126 = vmatpush1.msra.mxu0 0.0
  %2127 = vmatprep.subr.mxu0 0.0
  %2128 = vmatpush1.msra.mxu0 0.0
  %2129 = vmatprep.subr.mxu0 0.0
  %2130 = vmatpush1.msra.mxu0 0.0
  %2131 = vmatprep.subr.mxu0 0.0
  %2132 = vmatpush1.msra.mxu0 0.0
  %2133 = vmatprep.subr.mxu0 0.0
  %2134 = vmatpush1.msra.mxu0 0.0
  %2135 = vmatprep.subr.mxu0 0.0
  %2136 = vmatpush1.msra.mxu0 0.0
  %2137 = vmatprep.subr.mxu0 0.0
  %2138 = vmatpush1.msra.mxu0 0.0
  %2139 = vmatprep.subr.mxu0 0.0
  %2140 = vmatpush1.msra.mxu0 0.0
  %2141 = vmatprep.subr.mxu0 0.0
  %2142 = vmatpush1.msra.mxu0 0.0
  %2143 = vmatprep.subr.mxu0 0.0
  %2144 = vmatpush1.msra.mxu0 0.0
  %2145 = vmatprep.subr.mxu0 0.0
  %2146 = vmatpush1.msra.mxu0 0.0
  %2147 = vmatprep.subr.mxu0 0.0
  %2148 = vmatpush1.msra.mxu0 0.0
  %2149 = vmatprep.subr.mxu0 0.0
  %2150 = vmatpush1.msra.mxu0 0.0
  %2151 = vmatprep.subr.mxu0 0.0
  %2152 = vmatpush1.msra.mxu0 0.0
  %2153 = vmatprep.subr.mxu0 0.0
  %2154 = vmatpush1.msra.mxu0 0.0
  %2155 = vmatprep.subr.mxu0 0.0
  %2156 = vmatpush1.msra.mxu0 0.0
  %2157 = vmatprep.subr.mxu0 0.0
  %2158 = vmatpush1.msra.mxu0 0.0
  %2159 = vmatprep.subr.mxu0 0.0
  %2160 = vmatpush1.msra.mxu0 0.0
  %2161 = vmatprep.mubr.f32.mxu0 0.0
  %2162 = vmatmul.mubr.f32.gmra.mrb[0].mxu0 %v2089
  %v2163 = vpop.f32.mrb[0].mxu0
  %v2164 = vadd.f32 0.0, %v2163
  %v2165 = vpop.f32.mrb[0].mxu0
  %2166 = vmatprep.mubr.f32.mxu0 0.0
  %2167 = vmatmul.mubr.f32.gmra.mrb[0].mxu0 %v2091
  %v2168 = vpop.f32.mrb[0].mxu0
  %v2169 = vadd.f32 0.0, %v2168
  %v2170 = vpop.f32.mrb[0].mxu0
  %2171 = vmatprep.mubr.f32.mxu0 0.0
  %2172 = vmatmul.mubr.f32.gmra.mrb[0].mxu0 %v2093
  %v2173 = vpop.f32.mrb[0].mxu0
  %v2174 = vadd.f32 0.0, %v2173
  %v2175 = vpop.f32.mrb[0].mxu0
  %2176 = vmatprep.mubr.f32.mxu0 0.0
  %2177 = vmatmul.mubr.f32.gmra.mrb[0].mxu0 %v2095
  %v2178 = vpop.f32.mrb[0].mxu0
  %v2179 = vadd.f32 0.0, %v2178
  %v2180 = vpop.f32.mrb[0].mxu0
  %2181 = vdwg.mxu0
  %2182 = vrot.lane.b32.xlu0 %v1166, 64
  %v2183 = vpop.permute.xlu0 %2182
  %2184 = vrot.lane.b32.xlu0 %v1170, 64
  %v2185 = vpop.permute.xlu0 %2184
  %2186 = vrot.lane.b32.xlu0 %v1174, 64
  %v2187 = vpop.permute.xlu0 %2186
  %2188 = vrot.lane.b32.xlu0 %v1178, 64
  %v2189 = vpop.permute.xlu0 %2188
  %v2190 = vsel %vm1102, %v2183, 0
  %v2192 = vsel %vm1102, %v2185, 0
  %v2194 = vsel %vm1102, %v2187, 0
  %v2196 = vsel %vm1102, %v2189, 0
  %2198 = vmatprep.subr.mxu0 0.0
  %2199 = vmatpush1.msra.mxu0 %v1180
  %2200 = vmatprep.subr.mxu0 0.0
  %2201 = vmatpush1.msra.mxu0 %v1181
  %2202 = vmatprep.subr.mxu0 0.0
  %2203 = vmatpush1.msra.mxu0 %v1182
  %2204 = vmatprep.subr.mxu0 0.0
  %2205 = vmatpush1.msra.mxu0 %v1183
  %2206 = vmatprep.subr.mxu0 0.0
  %2207 = vmatpush1.msra.mxu0 0.0
  %2208 = vmatprep.subr.mxu0 0.0
  %2209 = vmatpush1.msra.mxu0 0.0
  %2210 = vmatprep.subr.mxu0 0.0
  %2211 = vmatpush1.msra.mxu0 0.0
  %2212 = vmatprep.subr.mxu0 0.0
  %2213 = vmatpush1.msra.mxu0 0.0
  %2214 = vmatprep.subr.mxu0 0.0
  %2215 = vmatpush1.msra.mxu0 0.0
  %2216 = vmatprep.subr.mxu0 0.0
  %2217 = vmatpush1.msra.mxu0 0.0
  %2218 = vmatprep.subr.mxu0 0.0
  %2219 = vmatpush1.msra.mxu0 0.0
  %2220 = vmatprep.subr.mxu0 0.0
  %2221 = vmatpush1.msra.mxu0 0.0
  %2222 = vmatprep.subr.mxu0 0.0
  %2223 = vmatpush1.msra.mxu0 0.0
  %2224 = vmatprep.subr.mxu0 0.0
  %2225 = vmatpush1.msra.mxu0 0.0
  %2226 = vmatprep.subr.mxu0 0.0
  %2227 = vmatpush1.msra.mxu0 0.0
  %2228 = vmatprep.subr.mxu0 0.0
  %2229 = vmatpush1.msra.mxu0 0.0
  %2230 = vmatprep.subr.mxu0 0.0
  %2231 = vmatpush1.msra.mxu0 0.0
  %2232 = vmatprep.subr.mxu0 0.0
  %2233 = vmatpush1.msra.mxu0 0.0
  %2234 = vmatprep.subr.mxu0 0.0
  %2235 = vmatpush1.msra.mxu0 0.0
  %2236 = vmatprep.subr.mxu0 0.0
  %2237 = vmatpush1.msra.mxu0 0.0
  %2238 = vmatprep.subr.mxu0 0.0
  %2239 = vmatpush1.msra.mxu0 0.0
  %2240 = vmatprep.subr.mxu0 0.0
  %2241 = vmatpush1.msra.mxu0 0.0
  %2242 = vmatprep.subr.mxu0 0.0
  %2243 = vmatpush1.msra.mxu0 0.0
  %2244 = vmatprep.subr.mxu0 0.0
  %2245 = vmatpush1.msra.mxu0 0.0
  %2246 = vmatprep.subr.mxu0 0.0
  %2247 = vmatpush1.msra.mxu0 0.0
  %2248 = vmatprep.subr.mxu0 0.0
  %2249 = vmatpush1.msra.mxu0 0.0
  %2250 = vmatprep.subr.mxu0 0.0
  %2251 = vmatpush1.msra.mxu0 0.0
  %2252 = vmatprep.subr.mxu0 0.0
  %2253 = vmatpush1.msra.mxu0 0.0
  %2254 = vmatprep.subr.mxu0 0.0
  %2255 = vmatpush1.msra.mxu0 0.0
  %2256 = vmatprep.subr.mxu0 0.0
  %2257 = vmatpush1.msra.mxu0 0.0
  %2258 = vmatprep.subr.mxu0 0.0
  %2259 = vmatpush1.msra.mxu0 0.0
  %2260 = vmatprep.subr.mxu0 0.0
  %2261 = vmatpush1.msra.mxu0 0.0
  %2262 = vmatprep.mubr.f32.mxu0 0.0
  %2263 = vmatmul.mubr.f32.gmra.mrb[0].mxu0 %v2190
  %v2264 = vpop.f32.mrb[0].mxu0
  %v2265 = vadd.f32 0.0, %v2264
  %v2266 = vpop.f32.mrb[0].mxu0
  %2267 = vmatprep.mubr.f32.mxu0 0.0
  %2268 = vmatmul.mubr.f32.gmra.mrb[0].mxu0 %v2192
  %v2269 = vpop.f32.mrb[0].mxu0
  %v2270 = vadd.f32 0.0, %v2269
  %v2271 = vpop.f32.mrb[0].mxu0
  %2272 = vmatprep.mubr.f32.mxu0 0.0
  %2273 = vmatmul.mubr.f32.gmra.mrb[0].mxu0 %v2194
  %v2274 = vpop.f32.mrb[0].mxu0
  %v2275 = vadd.f32 0.0, %v2274
  %v2276 = vpop.f32.mrb[0].mxu0
  %2277 = vmatprep.mubr.f32.mxu0 0.0
  %2278 = vmatmul.mubr.f32.gmra.mrb[0].mxu0 %v2196
  %v2279 = vpop.f32.mrb[0].mxu0
  %v2280 = vadd.f32 0.0, %v2279
  %v2281 = vpop.f32.mrb[0].mxu0
  %2282 = vdwg.mxu0
  %2283 = vrot.lane.b32.xlu0 %v1166, 32
  %v2284 = vpop.permute.xlu0 %2283
  %2285 = vrot.lane.b32.xlu0 %v1170, 32
  %v2286 = vpop.permute.xlu0 %2285
  %2287 = vrot.lane.b32.xlu0 %v1174, 32
  %v2288 = vpop.permute.xlu0 %2287
  %2289 = vrot.lane.b32.xlu0 %v1178, 32
  %v2290 = vpop.permute.xlu0 %2289
  %v2291 = vsel %vm1102, %v2284, 0
  %v2293 = vsel %vm1102, %v2286, 0
  %v2295 = vsel %vm1102, %v2288, 0
  %v2297 = vsel %vm1102, %v2290, 0
  %2299 = vmatprep.subr.mxu0 0.0
  %2300 = vmatpush1.msra.mxu0 %v1180
  %2301 = vmatprep.subr.mxu0 0.0
  %2302 = vmatpush1.msra.mxu0 %v1181
  %2303 = vmatprep.subr.mxu0 0.0
  %2304 = vmatpush1.msra.mxu0 %v1182
  %2305 = vmatprep.subr.mxu0 0.0
  %2306 = vmatpush1.msra.mxu0 %v1183
  %2307 = vmatprep.subr.mxu0 0.0
  %2308 = vmatpush1.msra.mxu0 0.0
  %2309 = vmatprep.subr.mxu0 0.0
  %2310 = vmatpush1.msra.mxu0 0.0
  %2311 = vmatprep.subr.mxu0 0.0
  %2312 = vmatpush1.msra.mxu0 0.0
  %2313 = vmatprep.subr.mxu0 0.0
  %2314 = vmatpush1.msra.mxu0 0.0
  %2315 = vmatprep.subr.mxu0 0.0
  %2316 = vmatpush1.msra.mxu0 0.0
  %2317 = vmatprep.subr.mxu0 0.0
  %2318 = vmatpush1.msra.mxu0 0.0
  %2319 = vmatprep.subr.mxu0 0.0
  %2320 = vmatpush1.msra.mxu0 0.0
  %2321 = vmatprep.subr.mxu0 0.0
  %2322 = vmatpush1.msra.mxu0 0.0
  %2323 = vmatprep.subr.mxu0 0.0
  %2324 = vmatpush1.msra.mxu0 0.0
  %2325 = vmatprep.subr.mxu0 0.0
  %2326 = vmatpush1.msra.mxu0 0.0
  %2327 = vmatprep.subr.mxu0 0.0
  %2328 = vmatpush1.msra.mxu0 0.0
  %2329 = vmatprep.subr.mxu0 0.0
  %2330 = vmatpush1.msra.mxu0 0.0
  %2331 = vmatprep.subr.mxu0 0.0
  %2332 = vmatpush1.msra.mxu0 0.0
  %2333 = vmatprep.subr.mxu0 0.0
  %2334 = vmatpush1.msra.mxu0 0.0
  %2335 = vmatprep.subr.mxu0 0.0
  %2336 = vmatpush1.msra.mxu0 0.0
  %2337 = vmatprep.subr.mxu0 0.0
  %2338 = vmatpush1.msra.mxu0 0.0
  %2339 = vmatprep.subr.mxu0 0.0
  %2340 = vmatpush1.msra.mxu0 0.0
  %2341 = vmatprep.subr.mxu0 0.0
  %2342 = vmatpush1.msra.mxu0 0.0
  %2343 = vmatprep.subr.mxu0 0.0
  %2344 = vmatpush1.msra.mxu0 0.0
  %2345 = vmatprep.subr.mxu0 0.0
  %2346 = vmatpush1.msra.mxu0 0.0
  %2347 = vmatprep.subr.mxu0 0.0
  %2348 = vmatpush1.msra.mxu0 0.0
  %2349 = vmatprep.subr.mxu0 0.0
  %2350 = vmatpush1.msra.mxu0 0.0
  %2351 = vmatprep.subr.mxu0 0.0
  %2352 = vmatpush1.msra.mxu0 0.0
  %2353 = vmatprep.subr.mxu0 0.0
  %2354 = vmatpush1.msra.mxu0 0.0
  %2355 = vmatprep.subr.mxu0 0.0
  %2356 = vmatpush1.msra.mxu0 0.0
  %2357 = vmatprep.subr.mxu0 0.0
  %2358 = vmatpush1.msra.mxu0 0.0
  %2359 = vmatprep.subr.mxu0 0.0
  %2360 = vmatpush1.msra.mxu0 0.0
  %2361 = vmatprep.subr.mxu0 0.0
  %2362 = vmatpush1.msra.mxu0 0.0
  %2363 = vmatprep.mubr.f32.mxu0 0.0
  %2364 = vmatmul.mubr.f32.gmra.mrb[0].mxu0 %v2291
  %v2365 = vpop.f32.mrb[0].mxu0
  %v2366 = vadd.f32 0.0, %v2365
  %v2367 = vpop.f32.mrb[0].mxu0
  %2368 = vmatprep.mubr.f32.mxu0 0.0
  %2369 = vmatmul.mubr.f32.gmra.mrb[0].mxu0 %v2293
  %v2370 = vpop.f32.mrb[0].mxu0
  %v2371 = vadd.f32 0.0, %v2370
  %v2372 = vpop.f32.mrb[0].mxu0
  %2373 = vmatprep.mubr.f32.mxu0 0.0
  %2374 = vmatmul.mubr.f32.gmra.mrb[0].mxu0 %v2295
  %v2375 = vpop.f32.mrb[0].mxu0
  %v2376 = vadd.f32 0.0, %v2375
  %v2377 = vpop.f32.mrb[0].mxu0
  %2378 = vmatprep.mubr.f32.mxu0 0.0
  %2379 = vmatmul.mubr.f32.gmra.mrb[0].mxu0 %v2297
  %v2380 = vpop.f32.mrb[0].mxu0
  %v2381 = vadd.f32 0.0, %v2380
  %v2382 = vpop.f32.mrb[0].mxu0
  %2383 = vdwg.mxu0
  %v2385 = vsel %vm1102, %v1167, 0
  %v2388 = vsel %vm1102, %v1171, 0
  %v2391 = vsel %vm1102, %v1175, 0
  %v2394 = vsel %vm1102, %v1179, 0
  %2396 = vmatprep.subr.mxu0 0.0
  %2397 = vmatpush1.msra.mxu0 %v1180
  %2398 = vmatprep.subr.mxu0 0.0
  %2399 = vmatpush1.msra.mxu0 %v1181
  %2400 = vmatprep.subr.mxu0 0.0
  %2401 = vmatpush1.msra.mxu0 %v1182
  %2402 = vmatprep.subr.mxu0 0.0
  %2403 = vmatpush1.msra.mxu0 %v1183
  %2404 = vmatprep.subr.mxu0 0.0
  %2405 = vmatpush1.msra.mxu0 0.0
  %2406 = vmatprep.subr.mxu0 0.0
  %2407 = vmatpush1.msra.mxu0 0.0
  %2408 = vmatprep.subr.mxu0 0.0
  %2409 = vmatpush1.msra.mxu0 0.0
  %2410 = vmatprep.subr.mxu0 0.0
  %2411 = vmatpush1.msra.mxu0 0.0
  %2412 = vmatprep.subr.mxu0 0.0
  %2413 = vmatpush1.msra.mxu0 0.0
  %2414 = vmatprep.subr.mxu0 0.0
  %2415 = vmatpush1.msra.mxu0 0.0
  %2416 = vmatprep.subr.mxu0 0.0
  %2417 = vmatpush1.msra.mxu0 0.0
  %2418 = vmatprep.subr.mxu0 0.0
  %2419 = vmatpush1.msra.mxu0 0.0
  %2420 = vmatprep.subr.mxu0 0.0
  %2421 = vmatpush1.msra.mxu0 0.0
  %2422 = vmatprep.subr.mxu0 0.0
  %2423 = vmatpush1.msra.mxu0 0.0
  %2424 = vmatprep.subr.mxu0 0.0
  %2425 = vmatpush1.msra.mxu0 0.0
  %2426 = vmatprep.subr.mxu0 0.0
  %2427 = vmatpush1.msra.mxu0 0.0
  %2428 = vmatprep.subr.mxu0 0.0
  %2429 = vmatpush1.msra.mxu0 0.0
  %2430 = vmatprep.subr.mxu0 0.0
  %2431 = vmatpush1.msra.mxu0 0.0
  %2432 = vmatprep.subr.mxu0 0.0
  %2433 = vmatpush1.msra.mxu0 0.0
  %2434 = vmatprep.subr.mxu0 0.0
  %2435 = vmatpush1.msra.mxu0 0.0
  %2436 = vmatprep.subr.mxu0 0.0
  %2437 = vmatpush1.msra.mxu0 0.0
  %2438 = vmatprep.subr.mxu0 0.0
  %2439 = vmatpush1.msra.mxu0 0.0
  %2440 = vmatprep.subr.mxu0 0.0
  %2441 = vmatpush1.msra.mxu0 0.0
  %2442 = vmatprep.subr.mxu0 0.0
  %2443 = vmatpush1.msra.mxu0 0.0
  %2444 = vmatprep.subr.mxu0 0.0
  %2445 = vmatpush1.msra.mxu0 0.0
  %2446 = vmatprep.subr.mxu0 0.0
  %2447 = vmatpush1.msra.mxu0 0.0
  %2448 = vmatprep.subr.mxu0 0.0
  %2449 = vmatpush1.msra.mxu0 0.0
  %2450 = vmatprep.subr.mxu0 0.0
  %2451 = vmatpush1.msra.mxu0 0.0
  %2452 = vmatprep.subr.mxu0 0.0
  %2453 = vmatpush1.msra.mxu0 0.0
  %2454 = vmatprep.subr.mxu0 0.0
  %2455 = vmatpush1.msra.mxu0 0.0
  %2456 = vmatprep.subr.mxu0 0.0
  %2457 = vmatpush1.msra.mxu0 0.0
  %2458 = vmatprep.subr.mxu0 0.0
  %2459 = vmatpush1.msra.mxu0 0.0
  %2460 = vmatprep.mubr.f32.mxu0 0.0
  %2461 = vmatmul.mubr.f32.gmra.mrb[0].mxu0 %v2385
  %v2462 = vpop.f32.mrb[0].mxu0
  %v2463 = vadd.f32 0.0, %v2462
  %v2464 = vpop.f32.mrb[0].mxu0
  %2465 = vmatprep.mubr.f32.mxu0 0.0
  %2466 = vmatmul.mubr.f32.gmra.mrb[0].mxu0 %v2388
  %v2467 = vpop.f32.mrb[0].mxu0
  %v2468 = vadd.f32 0.0, %v2467
  %v2469 = vpop.f32.mrb[0].mxu0
  %2470 = vmatprep.mubr.f32.mxu0 0.0
  %2471 = vmatmul.mubr.f32.gmra.mrb[0].mxu0 %v2391
  %v2472 = vpop.f32.mrb[0].mxu0
  %v2473 = vadd.f32 0.0, %v2472
  %v2474 = vpop.f32.mrb[0].mxu0
  %2475 = vmatprep.mubr.f32.mxu0 0.0
  %2476 = vmatmul.mubr.f32.gmra.mrb[0].mxu0 %v2394
  %v2477 = vpop.f32.mrb[0].mxu0
  %v2478 = vadd.f32 0.0, %v2477
  %v2479 = vpop.f32.mrb[0].mxu0
  %2480 = vdwg.mxu0
  %2481 = vrot.lane.b32.xlu0 %v1167, 96
  %v2482 = vpop.permute.xlu0 %2481
  %2483 = vrot.lane.b32.xlu0 %v1171, 96
  %v2484 = vpop.permute.xlu0 %2483
  %2485 = vrot.lane.b32.xlu0 %v1175, 96
  %v2486 = vpop.permute.xlu0 %2485
  %2487 = vrot.lane.b32.xlu0 %v1179, 96
  %v2488 = vpop.permute.xlu0 %2487
  %v2489 = vsel %vm1102, %v2482, 0
  %v2491 = vsel %vm1102, %v2484, 0
  %v2493 = vsel %vm1102, %v2486, 0
  %v2495 = vsel %vm1102, %v2488, 0
  %2497 = vmatprep.subr.mxu0 0.0
  %2498 = vmatpush1.msra.mxu0 %v1180
  %2499 = vmatprep.subr.mxu0 0.0
  %2500 = vmatpush1.msra.mxu0 %v1181
  %2501 = vmatprep.subr.mxu0 0.0
  %2502 = vmatpush1.msra.mxu0 %v1182
  %2503 = vmatprep.subr.mxu0 0.0
  %2504 = vmatpush1.msra.mxu0 %v1183
  %2505 = vmatprep.subr.mxu0 0.0
  %2506 = vmatpush1.msra.mxu0 0.0
  %2507 = vmatprep.subr.mxu0 0.0
  %2508 = vmatpush1.msra.mxu0 0.0
  %2509 = vmatprep.subr.mxu0 0.0
  %2510 = vmatpush1.msra.mxu0 0.0
  %2511 = vmatprep.subr.mxu0 0.0
  %2512 = vmatpush1.msra.mxu0 0.0
  %2513 = vmatprep.subr.mxu0 0.0
  %2514 = vmatpush1.msra.mxu0 0.0
  %2515 = vmatprep.subr.mxu0 0.0
  %2516 = vmatpush1.msra.mxu0 0.0
  %2517 = vmatprep.subr.mxu0 0.0
  %2518 = vmatpush1.msra.mxu0 0.0
  %2519 = vmatprep.subr.mxu0 0.0
  %2520 = vmatpush1.msra.mxu0 0.0
  %2521 = vmatprep.subr.mxu0 0.0
  %2522 = vmatpush1.msra.mxu0 0.0
  %2523 = vmatprep.subr.mxu0 0.0
  %2524 = vmatpush1.msra.mxu0 0.0
  %2525 = vmatprep.subr.mxu0 0.0
  %2526 = vmatpush1.msra.mxu0 0.0
  %2527 = vmatprep.subr.mxu0 0.0
  %2528 = vmatpush1.msra.mxu0 0.0
  %2529 = vmatprep.subr.mxu0 0.0
  %2530 = vmatpush1.msra.mxu0 0.0
  %2531 = vmatprep.subr.mxu0 0.0
  %2532 = vmatpush1.msra.mxu0 0.0
  %2533 = vmatprep.subr.mxu0 0.0
  %2534 = vmatpush1.msra.mxu0 0.0
  %2535 = vmatprep.subr.mxu0 0.0
  %2536 = vmatpush1.msra.mxu0 0.0
  %2537 = vmatprep.subr.mxu0 0.0
  %2538 = vmatpush1.msra.mxu0 0.0
  %2539 = vmatprep.subr.mxu0 0.0
  %2540 = vmatpush1.msra.mxu0 0.0
  %2541 = vmatprep.subr.mxu0 0.0
  %2542 = vmatpush1.msra.mxu0 0.0
  %2543 = vmatprep.subr.mxu0 0.0
  %2544 = vmatpush1.msra.mxu0 0.0
  %2545 = vmatprep.subr.mxu0 0.0
  %2546 = vmatpush1.msra.mxu0 0.0
  %2547 = vmatprep.subr.mxu0 0.0
  %2548 = vmatpush1.msra.mxu0 0.0
  %2549 = vmatprep.subr.mxu0 0.0
  %2550 = vmatpush1.msra.mxu0 0.0
  %2551 = vmatprep.subr.mxu0 0.0
  %2552 = vmatpush1.msra.mxu0 0.0
  %2553 = vmatprep.subr.mxu0 0.0
  %2554 = vmatpush1.msra.mxu0 0.0
  %2555 = vmatprep.subr.mxu0 0.0
  %2556 = vmatpush1.msra.mxu0 0.0
  %2557 = vmatprep.subr.mxu0 0.0
  %2558 = vmatpush1.msra.mxu0 0.0
  %2559 = vmatprep.subr.mxu0 0.0
  %2560 = vmatpush1.msra.mxu0 0.0
  %2561 = vmatprep.mubr.f32.mxu0 0.0
  %2562 = vmatmul.mubr.f32.gmra.mrb[0].mxu0 %v2489
  %v2563 = vpop.f32.mrb[0].mxu0
  %v2564 = vadd.f32 0.0, %v2563
  %v2565 = vpop.f32.mrb[0].mxu0
  %2566 = vmatprep.mubr.f32.mxu0 0.0
  %2567 = vmatmul.mubr.f32.gmra.mrb[0].mxu0 %v2491
  %v2568 = vpop.f32.mrb[0].mxu0
  %v2569 = vadd.f32 0.0, %v2568
  %v2570 = vpop.f32.mrb[0].mxu0
  %2571 = vmatprep.mubr.f32.mxu0 0.0
  %2572 = vmatmul.mubr.f32.gmra.mrb[0].mxu0 %v2493
  %v2573 = vpop.f32.mrb[0].mxu0
  %v2574 = vadd.f32 0.0, %v2573
  %v2575 = vpop.f32.mrb[0].mxu0
  %2576 = vmatprep.mubr.f32.mxu0 0.0
  %2577 = vmatmul.mubr.f32.gmra.mrb[0].mxu0 %v2495
  %v2578 = vpop.f32.mrb[0].mxu0
  %v2579 = vadd.f32 0.0, %v2578
  %v2580 = vpop.f32.mrb[0].mxu0
  %2581 = vdwg.mxu0
  %2582 = vrot.lane.b32.xlu0 %v1167, 64
  %v2583 = vpop.permute.xlu0 %2582
  %2584 = vrot.lane.b32.xlu0 %v1171, 64
  %v2585 = vpop.permute.xlu0 %2584
  %2586 = vrot.lane.b32.xlu0 %v1175, 64
  %v2587 = vpop.permute.xlu0 %2586
  %2588 = vrot.lane.b32.xlu0 %v1179, 64
  %v2589 = vpop.permute.xlu0 %2588
  %v2590 = vsel %vm1102, %v2583, 0
  %v2592 = vsel %vm1102, %v2585, 0
  %v2594 = vsel %vm1102, %v2587, 0
  %v2596 = vsel %vm1102, %v2589, 0
  %2598 = vmatprep.subr.mxu0 0.0
  %2599 = vmatpush1.msra.mxu0 %v1180
  %2600 = vmatprep.subr.mxu0 0.0
  %2601 = vmatpush1.msra.mxu0 %v1181
  %2602 = vmatprep.subr.mxu0 0.0
  %2603 = vmatpush1.msra.mxu0 %v1182
  %2604 = vmatprep.subr.mxu0 0.0
  %2605 = vmatpush1.msra.mxu0 %v1183
  %2606 = vmatprep.subr.mxu0 0.0
  %2607 = vmatpush1.msra.mxu0 0.0
  %2608 = vmatprep.subr.mxu0 0.0
  %2609 = vmatpush1.msra.mxu0 0.0
  %2610 = vmatprep.subr.mxu0 0.0
  %2611 = vmatpush1.msra.mxu0 0.0
  %2612 = vmatprep.subr.mxu0 0.0
  %2613 = vmatpush1.msra.mxu0 0.0
  %2614 = vmatprep.subr.mxu0 0.0
  %2615 = vmatpush1.msra.mxu0 0.0
  %2616 = vmatprep.subr.mxu0 0.0
  %2617 = vmatpush1.msra.mxu0 0.0
  %2618 = vmatprep.subr.mxu0 0.0
  %2619 = vmatpush1.msra.mxu0 0.0
  %2620 = vmatprep.subr.mxu0 0.0
  %2621 = vmatpush1.msra.mxu0 0.0
  %2622 = vmatprep.subr.mxu0 0.0
  %2623 = vmatpush1.msra.mxu0 0.0
  %2624 = vmatprep.subr.mxu0 0.0
  %2625 = vmatpush1.msra.mxu0 0.0
  %2626 = vmatprep.subr.mxu0 0.0
  %2627 = vmatpush1.msra.mxu0 0.0
  %2628 = vmatprep.subr.mxu0 0.0
  %2629 = vmatpush1.msra.mxu0 0.0
  %2630 = vmatprep.subr.mxu0 0.0
  %2631 = vmatpush1.msra.mxu0 0.0
  %2632 = vmatprep.subr.mxu0 0.0
  %2633 = vmatpush1.msra.mxu0 0.0
  %2634 = vmatprep.subr.mxu0 0.0
  %2635 = vmatpush1.msra.mxu0 0.0
  %2636 = vmatprep.subr.mxu0 0.0
  %2637 = vmatpush1.msra.mxu0 0.0
  %2638 = vmatprep.subr.mxu0 0.0
  %2639 = vmatpush1.msra.mxu0 0.0
  %2640 = vmatprep.subr.mxu0 0.0
  %2641 = vmatpush1.msra.mxu0 0.0
  %2642 = vmatprep.subr.mxu0 0.0
  %2643 = vmatpush1.msra.mxu0 0.0
  %2644 = vmatprep.subr.mxu0 0.0
  %2645 = vmatpush1.msra.mxu0 0.0
  %2646 = vmatprep.subr.mxu0 0.0
  %2647 = vmatpush1.msra.mxu0 0.0
  %2648 = vmatprep.subr.mxu0 0.0
  %2649 = vmatpush1.msra.mxu0 0.0
  %2650 = vmatprep.subr.mxu0 0.0
  %2651 = vmatpush1.msra.mxu0 0.0
  %2652 = vmatprep.subr.mxu0 0.0
  %2653 = vmatpush1.msra.mxu0 0.0
  %2654 = vmatprep.subr.mxu0 0.0
  %2655 = vmatpush1.msra.mxu0 0.0
  %2656 = vmatprep.subr.mxu0 0.0
  %2657 = vmatpush1.msra.mxu0 0.0
  %2658 = vmatprep.subr.mxu0 0.0
  %2659 = vmatpush1.msra.mxu0 0.0
  %2660 = vmatprep.subr.mxu0 0.0
  %2661 = vmatpush1.msra.mxu0 0.0
  %2662 = vmatprep.mubr.f32.mxu0 0.0
  %2663 = vmatmul.mubr.f32.gmra.mrb[0].mxu0 %v2590
  %v2664 = vpop.f32.mrb[0].mxu0
  %v2665 = vadd.f32 0.0, %v2664
  %v2666 = vpop.f32.mrb[0].mxu0
  %2667 = vmatprep.mubr.f32.mxu0 0.0
  %2668 = vmatmul.mubr.f32.gmra.mrb[0].mxu0 %v2592
  %v2669 = vpop.f32.mrb[0].mxu0
  %v2670 = vadd.f32 0.0, %v2669
  %v2671 = vpop.f32.mrb[0].mxu0
  %2672 = vmatprep.mubr.f32.mxu0 0.0
  %2673 = vmatmul.mubr.f32.gmra.mrb[0].mxu0 %v2594
  %v2674 = vpop.f32.mrb[0].mxu0
  %v2675 = vadd.f32 0.0, %v2674
  %v2676 = vpop.f32.mrb[0].mxu0
  %2677 = vmatprep.mubr.f32.mxu0 0.0
  %2678 = vmatmul.mubr.f32.gmra.mrb[0].mxu0 %v2596
  %v2679 = vpop.f32.mrb[0].mxu0
  %v2680 = vadd.f32 0.0, %v2679
  %v2681 = vpop.f32.mrb[0].mxu0
  %2682 = vdwg.mxu0
  %2683 = vrot.lane.b32.xlu0 %v1167, 32
  %v2684 = vpop.permute.xlu0 %2683
  %2685 = vrot.lane.b32.xlu0 %v1171, 32
  %v2686 = vpop.permute.xlu0 %2685
  %2687 = vrot.lane.b32.xlu0 %v1175, 32
  %v2688 = vpop.permute.xlu0 %2687
  %2689 = vrot.lane.b32.xlu0 %v1179, 32
  %v2690 = vpop.permute.xlu0 %2689
  %v2691 = vsel %vm1102, %v2684, 0
  %v2693 = vsel %vm1102, %v2686, 0
  %v2695 = vsel %vm1102, %v2688, 0
  %v2697 = vsel %vm1102, %v2690, 0
  %2699 = vmatprep.subr.mxu0 0.0
  %2700 = vmatpush1.msra.mxu0 %v1180
  %2701 = vmatprep.subr.mxu0 0.0
  %2702 = vmatpush1.msra.mxu0 %v1181
  %2703 = vmatprep.subr.mxu0 0.0
  %2704 = vmatpush1.msra.mxu0 %v1182
  %2705 = vmatprep.subr.mxu0 0.0
  %2706 = vmatpush1.msra.mxu0 %v1183
  %2707 = vmatprep.subr.mxu0 0.0
  %2708 = vmatpush1.msra.mxu0 0.0
  %2709 = vmatprep.subr.mxu0 0.0
  %2710 = vmatpush1.msra.mxu0 0.0
  %2711 = vmatprep.subr.mxu0 0.0
  %2712 = vmatpush1.msra.mxu0 0.0
  %2713 = vmatprep.subr.mxu0 0.0
  %2714 = vmatpush1.msra.mxu0 0.0
  %2715 = vmatprep.subr.mxu0 0.0
  %2716 = vmatpush1.msra.mxu0 0.0
  %2717 = vmatprep.subr.mxu0 0.0
  %2718 = vmatpush1.msra.mxu0 0.0
  %2719 = vmatprep.subr.mxu0 0.0
  %2720 = vmatpush1.msra.mxu0 0.0
  %2721 = vmatprep.subr.mxu0 0.0
  %2722 = vmatpush1.msra.mxu0 0.0
  %2723 = vmatprep.subr.mxu0 0.0
  %2724 = vmatpush1.msra.mxu0 0.0
  %2725 = vmatprep.subr.mxu0 0.0
  %2726 = vmatpush1.msra.mxu0 0.0
  %2727 = vmatprep.subr.mxu0 0.0
  %2728 = vmatpush1.msra.mxu0 0.0
  %2729 = vmatprep.subr.mxu0 0.0
  %2730 = vmatpush1.msra.mxu0 0.0
  %2731 = vmatprep.subr.mxu0 0.0
  %2732 = vmatpush1.msra.mxu0 0.0
  %2733 = vmatprep.subr.mxu0 0.0
  %2734 = vmatpush1.msra.mxu0 0.0
  %2735 = vmatprep.subr.mxu0 0.0
  %2736 = vmatpush1.msra.mxu0 0.0
  %2737 = vmatprep.subr.mxu0 0.0
  %2738 = vmatpush1.msra.mxu0 0.0
  %2739 = vmatprep.subr.mxu0 0.0
  %2740 = vmatpush1.msra.mxu0 0.0
  %2741 = vmatprep.subr.mxu0 0.0
  %2742 = vmatpush1.msra.mxu0 0.0
  %2743 = vmatprep.subr.mxu0 0.0
  %2744 = vmatpush1.msra.mxu0 0.0
  %2745 = vmatprep.subr.mxu0 0.0
  %2746 = vmatpush1.msra.mxu0 0.0
  %2747 = vmatprep.subr.mxu0 0.0
  %2748 = vmatpush1.msra.mxu0 0.0
  %2749 = vmatprep.subr.mxu0 0.0
  %2750 = vmatpush1.msra.mxu0 0.0
  %2751 = vmatprep.subr.mxu0 0.0
  %2752 = vmatpush1.msra.mxu0 0.0
  %2753 = vmatprep.subr.mxu0 0.0
  %2754 = vmatpush1.msra.mxu0 0.0
  %2755 = vmatprep.subr.mxu0 0.0
  %2756 = vmatpush1.msra.mxu0 0.0
  %2757 = vmatprep.subr.mxu0 0.0
  %2758 = vmatpush1.msra.mxu0 0.0
  %2759 = vmatprep.subr.mxu0 0.0
  %2760 = vmatpush1.msra.mxu0 0.0
  %2761 = vmatprep.subr.mxu0 0.0
  %2762 = vmatpush1.msra.mxu0 0.0
  %2763 = vmatprep.mubr.f32.mxu0 0.0
  %2764 = vmatmul.mubr.f32.gmra.mrb[0].mxu0 %v2691
  %v2765 = vpop.f32.mrb[0].mxu0
  %v2766 = vadd.f32 0.0, %v2765
  %v2767 = vpop.f32.mrb[0].mxu0
  %2768 = vmatprep.mubr.f32.mxu0 0.0
  %2769 = vmatmul.mubr.f32.gmra.mrb[0].mxu0 %v2693
  %v2770 = vpop.f32.mrb[0].mxu0
  %v2771 = vadd.f32 0.0, %v2770
  %v2772 = vpop.f32.mrb[0].mxu0
  %2773 = vmatprep.mubr.f32.mxu0 0.0
  %2774 = vmatmul.mubr.f32.gmra.mrb[0].mxu0 %v2695
  %v2775 = vpop.f32.mrb[0].mxu0
  %v2776 = vadd.f32 0.0, %v2775
  %v2777 = vpop.f32.mrb[0].mxu0
  %2778 = vmatprep.mubr.f32.mxu0 0.0
  %2779 = vmatmul.mubr.f32.gmra.mrb[0].mxu0 %v2697
  %v2780 = vpop.f32.mrb[0].mxu0
  %v2781 = vadd.f32 0.0, %v2780
  %v2782 = vpop.f32.mrb[0].mxu0
  %2783 = vdwg.mxu0
  %2788 = vrot.lane.b32.xlu0 %v1364, 8
  %v2789 = vpop.permute.xlu0 %2788
  %2790 = vrot.lane.b32.xlu0 %v1369, 8
  %v2791 = vpop.permute.xlu0 %2790
  %2792 = vrot.lane.b32.xlu0 %v1374, 8
  %v2793 = vpop.permute.xlu0 %2792
  %2794 = vrot.lane.b32.xlu0 %v1379, 8
  %v2795 = vpop.permute.xlu0 %2794
  %2804 = vrot.lane.b32.xlu0 %v1465, 16
  %v2805 = vpop.permute.xlu0 %2804
  %2806 = vrot.lane.b32.xlu0 %v1470, 16
  %v2807 = vpop.permute.xlu0 %2806
  %2808 = vrot.lane.b32.xlu0 %v1475, 16
  %v2809 = vpop.permute.xlu0 %2808
  %2810 = vrot.lane.b32.xlu0 %v1480, 16
  %v2811 = vpop.permute.xlu0 %2810
  %2820 = vrot.lane.b32.xlu0 %v1566, 24
  %v2821 = vpop.permute.xlu0 %2820
  %2822 = vrot.lane.b32.xlu0 %v1571, 24
  %v2823 = vpop.permute.xlu0 %2822
  %2824 = vrot.lane.b32.xlu0 %v1576, 24
  %v2825 = vpop.permute.xlu0 %2824
  %2826 = vrot.lane.b32.xlu0 %v1581, 24
  %v2827 = vpop.permute.xlu0 %2826
  %2836 = vrot.lane.b32.xlu0 %v1663, 32
  %v2837 = vpop.permute.xlu0 %2836
  %2838 = vrot.lane.b32.xlu0 %v1668, 32
  %v2839 = vpop.permute.xlu0 %2838
  %2840 = vrot.lane.b32.xlu0 %v1673, 32
  %v2841 = vpop.permute.xlu0 %2840
  %2842 = vrot.lane.b32.xlu0 %v1678, 32
  %v2843 = vpop.permute.xlu0 %2842
  %2852 = vrot.lane.b32.xlu0 %v1764, 40
  %v2853 = vpop.permute.xlu0 %2852
  %2854 = vrot.lane.b32.xlu0 %v1769, 40
  %v2855 = vpop.permute.xlu0 %2854
  %2856 = vrot.lane.b32.xlu0 %v1774, 40
  %v2857 = vpop.permute.xlu0 %2856
  %2858 = vrot.lane.b32.xlu0 %v1779, 40
  %v2859 = vpop.permute.xlu0 %2858
  %2868 = vrot.lane.b32.xlu0 %v1865, 48
  %v2869 = vpop.permute.xlu0 %2868
  %2870 = vrot.lane.b32.xlu0 %v1870, 48
  %v2871 = vpop.permute.xlu0 %2870
  %2872 = vrot.lane.b32.xlu0 %v1875, 48
  %v2873 = vpop.permute.xlu0 %2872
  %2874 = vrot.lane.b32.xlu0 %v1880, 48
  %v2875 = vpop.permute.xlu0 %2874
  %2884 = vrot.lane.b32.xlu0 %v1966, 56
  %v2885 = vpop.permute.xlu0 %2884
  %2886 = vrot.lane.b32.xlu0 %v1971, 56
  %v2887 = vpop.permute.xlu0 %2886
  %2888 = vrot.lane.b32.xlu0 %v1976, 56
  %v2889 = vpop.permute.xlu0 %2888
  %2890 = vrot.lane.b32.xlu0 %v1981, 56
  %v2891 = vpop.permute.xlu0 %2890
  %2900 = vrot.lane.b32.xlu0 %v2063, 64
  %v2901 = vpop.permute.xlu0 %2900
  %2902 = vrot.lane.b32.xlu0 %v2068, 64
  %v2903 = vpop.permute.xlu0 %2902
  %2904 = vrot.lane.b32.xlu0 %v2073, 64
  %v2905 = vpop.permute.xlu0 %2904
  %2906 = vrot.lane.b32.xlu0 %v2078, 64
  %v2907 = vpop.permute.xlu0 %2906
  %2916 = vrot.lane.b32.xlu0 %v2164, 72
  %v2917 = vpop.permute.xlu0 %2916
  %2918 = vrot.lane.b32.xlu0 %v2169, 72
  %v2919 = vpop.permute.xlu0 %2918
  %2920 = vrot.lane.b32.xlu0 %v2174, 72
  %v2921 = vpop.permute.xlu0 %2920
  %2922 = vrot.lane.b32.xlu0 %v2179, 72
  %v2923 = vpop.permute.xlu0 %2922
  %2932 = vrot.lane.b32.xlu0 %v2265, 80
  %v2933 = vpop.permute.xlu0 %2932
  %2934 = vrot.lane.b32.xlu0 %v2270, 80
  %v2935 = vpop.permute.xlu0 %2934
  %2936 = vrot.lane.b32.xlu0 %v2275, 80
  %v2937 = vpop.permute.xlu0 %2936
  %2938 = vrot.lane.b32.xlu0 %v2280, 80
  %v2939 = vpop.permute.xlu0 %2938
  %2948 = vrot.lane.b32.xlu0 %v2366, 88
  %v2949 = vpop.permute.xlu0 %2948
  %2950 = vrot.lane.b32.xlu0 %v2371, 88
  %v2951 = vpop.permute.xlu0 %2950
  %2952 = vrot.lane.b32.xlu0 %v2376, 88
  %v2953 = vpop.permute.xlu0 %2952
  %2954 = vrot.lane.b32.xlu0 %v2381, 88
  %v2955 = vpop.permute.xlu0 %2954
  %2964 = vrot.lane.b32.xlu0 %v2463, 96
  %v2965 = vpop.permute.xlu0 %2964
  %2966 = vrot.lane.b32.xlu0 %v2468, 96
  %v2967 = vpop.permute.xlu0 %2966
  %2968 = vrot.lane.b32.xlu0 %v2473, 96
  %v2969 = vpop.permute.xlu0 %2968
  %2970 = vrot.lane.b32.xlu0 %v2478, 96
  %v2971 = vpop.permute.xlu0 %2970
  %2980 = vrot.lane.b32.xlu0 %v2564, 104
  %v2981 = vpop.permute.xlu0 %2980
  %2982 = vrot.lane.b32.xlu0 %v2569, 104
  %v2983 = vpop.permute.xlu0 %2982
  %2984 = vrot.lane.b32.xlu0 %v2574, 104
  %v2985 = vpop.permute.xlu0 %2984
  %2986 = vrot.lane.b32.xlu0 %v2579, 104
  %v2987 = vpop.permute.xlu0 %2986
  %2996 = vrot.lane.b32.xlu0 %v2665, 112
  %v2997 = vpop.permute.xlu0 %2996
  %2998 = vrot.lane.b32.xlu0 %v2670, 112
  %v2999 = vpop.permute.xlu0 %2998
  %3000 = vrot.lane.b32.xlu0 %v2675, 112
  %v3001 = vpop.permute.xlu0 %3000
  %3002 = vrot.lane.b32.xlu0 %v2680, 112
  %v3003 = vpop.permute.xlu0 %3002
  %3012 = vrot.lane.b32.xlu0 %v2766, 120
  %v3013 = vpop.permute.xlu0 %3012
  %3014 = vrot.lane.b32.xlu0 %v2771, 120
  %v3015 = vpop.permute.xlu0 %3014
  %3016 = vrot.lane.b32.xlu0 %v2776, 120
  %v3017 = vpop.permute.xlu0 %3016
  %3018 = vrot.lane.b32.xlu0 %v2781, 120
  %v3019 = vpop.permute.xlu0 %3018
  %vm3024 = vcmask 64512
  %v3025 = vsel %vm3024, %v1263, %v2789
  %v3026 = vsel %vm3024, %v1268, %v2791
  %v3027 = vsel %vm3024, %v1273, %v2793
  %v3028 = vsel %vm3024, %v1278, %v2795
  %vm3029 = vcmask 130048
  %v3030 = vsel %vm3029, %v3025, %v2805
  %v3031 = vsel %vm3029, %v3026, %v2807
  %v3032 = vsel %vm3029, %v3027, %v2809
  %v3033 = vsel %vm3029, %v3028, %v2811
  %vm3034 = vcmask 195584
  %v3035 = vsel %vm3034, %v3030, %v2821
  %v3036 = vsel %vm3034, %v3031, %v2823
  %v3037 = vsel %vm3034, %v3032, %v2825
  %v3038 = vsel %vm3034, %v3033, %v2827
  %v3039 = vsel %vm1102, %v3035, %v2837
  %v3040 = vsel %vm1102, %v3036, %v2839
  %v3041 = vsel %vm1102, %v3037, %v2841
  %v3042 = vsel %vm1102, %v3038, %v2843
  %vm3043 = vcmask 326656
  %v3044 = vsel %vm3043, %v3039, %v2853
  %v3045 = vsel %vm3043, %v3040, %v2855
  %v3046 = vsel %vm3043, %v3041, %v2857
  %v3047 = vsel %vm3043, %v3042, %v2859
  %vm3048 = vcmask 392192
  %v3049 = vsel %vm3048, %v3044, %v2869
  %v3050 = vsel %vm3048, %v3045, %v2871
  %v3051 = vsel %vm3048, %v3046, %v2873
  %v3052 = vsel %vm3048, %v3047, %v2875
  %vm3053 = vcmask 457728
  %v3054 = vsel %vm3053, %v3049, %v2885
  %v3055 = vsel %vm3053, %v3050, %v2887
  %v3056 = vsel %vm3053, %v3051, %v2889
  %v3057 = vsel %vm3053, %v3052, %v2891
  %v3058 = vsel %vm432, %v3054, %v2901
  %v3059 = vsel %vm432, %v3055, %v2903
  %v3060 = vsel %vm432, %v3056, %v2905
  %v3061 = vsel %vm432, %v3057, %v2907
  %vm3062 = vcmask 588800
  %v3063 = vsel %vm3062, %v3058, %v2917
  %v3064 = vsel %vm3062, %v3059, %v2919
  %v3065 = vsel %vm3062, %v3060, %v2921
  %v3066 = vsel %vm3062, %v3061, %v2923
  %vm3067 = vcmask 654336
  %v3068 = vsel %vm3067, %v3063, %v2933
  %v3069 = vsel %vm3067, %v3064, %v2935
  %v3070 = vsel %vm3067, %v3065, %v2937
  %v3071 = vsel %vm3067, %v3066, %v2939
  %vm3072 = vcmask 719872
  %v3073 = vsel %vm3072, %v3068, %v2949
  %v3074 = vsel %vm3072, %v3069, %v2951
  %v3075 = vsel %vm3072, %v3070, %v2953
  %v3076 = vsel %vm3072, %v3071, %v2955
  %v3077 = vsel %vm1105, %v3073, %v2965
  %v3078 = vsel %vm1105, %v3074, %v2967
  %v3079 = vsel %vm1105, %v3075, %v2969
  %v3080 = vsel %vm1105, %v3076, %v2971
  %vm3081 = vcmask 850944
  %v3082 = vsel %vm3081, %v3077, %v2981
  %v3083 = vsel %vm3081, %v3078, %v2983
  %v3084 = vsel %vm3081, %v3079, %v2985
  %v3085 = vsel %vm3081, %v3080, %v2987
  %vm3086 = vcmask 916480
  %v3087 = vsel %vm3086, %v3082, %v2997
  %v3088 = vsel %vm3086, %v3083, %v2999
  %v3089 = vsel %vm3086, %v3084, %v3001
  %v3090 = vsel %vm3086, %v3085, %v3003
  %vm3091 = vcmask 982016
  %v3092 = vsel %vm3091, %v3087, %v3013
  %v3093 = vsel %vm3091, %v3088, %v3015
  %v3094 = vsel %vm3091, %v3089, %v3017
  %v3095 = vsel %vm3091, %v3090, %v3019
  %v3096 = vadd.f32 %v3092, %v3093
  %v3097 = vadd.f32 %v3096, %v3094
  %v3098 = vadd.f32 %v3097, %v3095
  %v3099 = vrot.slane %v3098, 4
  %v3100 = vadd.f32 %v3098, %v3099
  %v3101 = vrot.slane %v3100, 2
  %v3102 = vadd.f32 %v3100, %v3101
  %v3103 = vrot.slane %v3102, 1
  %v3104 = vadd.f32 %v3102, %v3103
  %v3105 = vmul.f32 %v3092, %v3092
  %v3106 = vmul.f32 %v3093, %v3093
  %v3107 = vmul.f32 %v3094, %v3094
  %v3108 = vmul.f32 %v3095, %v3095
  %v3109 = vadd.f32 %v3105, %v3106
  %v3110 = vadd.f32 %v3109, %v3107
  %v3111 = vadd.f32 %v3110, %v3108
  %v3112 = vrot.slane %v3111, 4
  %v3113 = vadd.f32 %v3111, %v3112
  %v3114 = vrot.slane %v3113, 2
  %v3115 = vadd.f32 %v3113, %v3114
  %v3116 = vrot.slane %v3115, 1
  %v3117 = vadd.f32 %v3115, %v3116
  %3119 = vrot.lane.b32.xlu0 %v3104, 120
  %v3120 = vpop.permute.xlu0 %3119
  %v3122 = vadd.f32 %v3104, %v3120
  %3124 = vrot.lane.b32.xlu0 %v3117, 120
  %v3125 = vpop.permute.xlu0 %3124
  %v3127 = vadd.f32 %v3117, %v3125
  %3128 = vrot.lane.b32.xlu0 %v3104, 112
  %v3129 = vpop.permute.xlu0 %3128
  %v3131 = vadd.f32 %v3122, %v3129
  %3132 = vrot.lane.b32.xlu0 %v3117, 112
  %v3133 = vpop.permute.xlu0 %3132
  %v3135 = vadd.f32 %v3127, %v3133
  %3136 = vrot.lane.b32.xlu0 %v3104, 104
  %v3137 = vpop.permute.xlu0 %3136
  %v3139 = vadd.f32 %v3131, %v3137
  %3140 = vrot.lane.b32.xlu0 %v3117, 104
  %v3141 = vpop.permute.xlu0 %3140
  %v3143 = vadd.f32 %v3135, %v3141
  %3144 = vrot.lane.b32.xlu0 %v3104, 96
  %v3145 = vpop.permute.xlu0 %3144
  %v3147 = vadd.f32 %v3139, %v3145
  %3148 = vrot.lane.b32.xlu0 %v3117, 96
  %v3149 = vpop.permute.xlu0 %3148
  %v3151 = vadd.f32 %v3143, %v3149
  %3152 = vrot.lane.b32.xlu0 %v3104, 88
  %v3153 = vpop.permute.xlu0 %3152
  %v3155 = vadd.f32 %v3147, %v3153
  %3156 = vrot.lane.b32.xlu0 %v3117, 88
  %v3157 = vpop.permute.xlu0 %3156
  %v3159 = vadd.f32 %v3151, %v3157
  %3160 = vrot.lane.b32.xlu0 %v3104, 80
  %v3161 = vpop.permute.xlu0 %3160
  %v3163 = vadd.f32 %v3155, %v3161
  %3164 = vrot.lane.b32.xlu0 %v3117, 80
  %v3165 = vpop.permute.xlu0 %3164
  %v3167 = vadd.f32 %v3159, %v3165
  %3168 = vrot.lane.b32.xlu0 %v3104, 72
  %v3169 = vpop.permute.xlu0 %3168
  %v3171 = vadd.f32 %v3163, %v3169
  %3172 = vrot.lane.b32.xlu0 %v3117, 72
  %v3173 = vpop.permute.xlu0 %3172
  %v3175 = vadd.f32 %v3167, %v3173
  %3176 = vrot.lane.b32.xlu0 %v3104, 64
  %v3177 = vpop.permute.xlu0 %3176
  %v3179 = vadd.f32 %v3171, %v3177
  %3180 = vrot.lane.b32.xlu0 %v3117, 64
  %v3181 = vpop.permute.xlu0 %3180
  %v3183 = vadd.f32 %v3175, %v3181
  %3184 = vrot.lane.b32.xlu0 %v3104, 56
  %v3185 = vpop.permute.xlu0 %3184
  %v3187 = vadd.f32 %v3179, %v3185
  %3188 = vrot.lane.b32.xlu0 %v3117, 56
  %v3189 = vpop.permute.xlu0 %3188
  %v3191 = vadd.f32 %v3183, %v3189
  %3192 = vrot.lane.b32.xlu0 %v3104, 48
  %v3193 = vpop.permute.xlu0 %3192
  %v3195 = vadd.f32 %v3187, %v3193
  %3196 = vrot.lane.b32.xlu0 %v3117, 48
  %v3197 = vpop.permute.xlu0 %3196
  %v3199 = vadd.f32 %v3191, %v3197
  %3200 = vrot.lane.b32.xlu0 %v3104, 40
  %v3201 = vpop.permute.xlu0 %3200
  %v3203 = vadd.f32 %v3195, %v3201
  %3204 = vrot.lane.b32.xlu0 %v3117, 40
  %v3205 = vpop.permute.xlu0 %3204
  %v3207 = vadd.f32 %v3199, %v3205
  %3208 = vrot.lane.b32.xlu0 %v3104, 32
  %v3209 = vpop.permute.xlu0 %3208
  %v3211 = vadd.f32 %v3203, %v3209
  %3212 = vrot.lane.b32.xlu0 %v3117, 32
  %v3213 = vpop.permute.xlu0 %3212
  %v3215 = vadd.f32 %v3207, %v3213
  %3216 = vrot.lane.b32.xlu0 %v3104, 24
  %v3217 = vpop.permute.xlu0 %3216
  %v3219 = vadd.f32 %v3211, %v3217
  %3220 = vrot.lane.b32.xlu0 %v3117, 24
  %v3221 = vpop.permute.xlu0 %3220
  %v3223 = vadd.f32 %v3215, %v3221
  %3224 = vrot.lane.b32.xlu0 %v3104, 16
  %v3225 = vpop.permute.xlu0 %3224
  %v3227 = vadd.f32 %v3219, %v3225
  %3228 = vrot.lane.b32.xlu0 %v3117, 16
  %v3229 = vpop.permute.xlu0 %3228
  %v3231 = vadd.f32 %v3223, %v3229
  %3232 = vrot.lane.b32.xlu0 %v3104, 8
  %v3233 = vpop.permute.xlu0 %3232
  %v3235 = vadd.f32 %v3227, %v3233
  %3236 = vrot.lane.b32.xlu0 %v3117, 8
  %v3237 = vpop.permute.xlu0 %3236
  %v3239 = vadd.f32 %v3231, %v3237
  %v3240 = vmul.f32 %v3235, 0.001953125
  %v3241 = vmul.f32 %v3239, 0.001953125
  %v3242 = vmul.f32 %v3240, %v3240
  %v3243 = vsub.f32 %v3241, %v3242
  %v3244 = vadd.f32 %v3243, 1e-05
  %v3245 = vrsqrt.pop %v3244
  %v3246 = vld [vmem:[%s11] sm:$0x1]
  %v3247 = vmul.f32 %v3246, %v3245
  %v3248 = vld [vmem:[%s12] sm:$0x1]
  %v3249 = vmul.f32 %v3240, %v3247
  %v3250 = vsub.f32 %v3248, %v3249
  %v3252 = vlaneseq
  %v3253 = vshrl.u32 %v3252, 7
  %v3254 = vsub.s32 0, %v3253
  %v3255 = vrot.slane %v3247, %v3254
  %3256 = vrot.lane.b32.xlu0 %v3255, 8
  %v3257 = vpop.permute.xlu0 %3256
  %3259 = vrot.lane.b32.xlu0 %v3255, 16
  %v3260 = vpop.permute.xlu0 %3259
  %3262 = vrot.lane.b32.xlu0 %v3255, 24
  %v3263 = vpop.permute.xlu0 %3262
  %3265 = vrot.lane.b32.xlu0 %v3255, 32
  %v3266 = vpop.permute.xlu0 %3265
  %3268 = vrot.lane.b32.xlu0 %v3255, 40
  %v3269 = vpop.permute.xlu0 %3268
  %3271 = vrot.lane.b32.xlu0 %v3255, 48
  %v3272 = vpop.permute.xlu0 %3271
  %3274 = vrot.lane.b32.xlu0 %v3255, 56
  %v3275 = vpop.permute.xlu0 %3274
  %3277 = vrot.lane.b32.xlu0 %v3255, 64
  %v3278 = vpop.permute.xlu0 %3277
  %3280 = vrot.lane.b32.xlu0 %v3255, 72
  %v3281 = vpop.permute.xlu0 %3280
  %3283 = vrot.lane.b32.xlu0 %v3255, 80
  %v3284 = vpop.permute.xlu0 %3283
  %3286 = vrot.lane.b32.xlu0 %v3255, 88
  %v3287 = vpop.permute.xlu0 %3286
  %3289 = vrot.lane.b32.xlu0 %v3255, 96
  %v3290 = vpop.permute.xlu0 %3289
  %3292 = vrot.lane.b32.xlu0 %v3255, 104
  %v3293 = vpop.permute.xlu0 %3292
  %3295 = vrot.lane.b32.xlu0 %v3255, 112
  %v3296 = vpop.permute.xlu0 %3295
  %3298 = vrot.lane.b32.xlu0 %v3255, 120
  %v3299 = vpop.permute.xlu0 %3298
  %v3301 = vsel %vm3024, %v3247, %v3257
  %v3302 = vsel %vm3029, %v3301, %v3260
  %v3303 = vsel %vm3034, %v3302, %v3263
  %v3304 = vsel %vm1102, %v3303, %v3266
  %v3305 = vsel %vm3043, %v3304, %v3269
  %v3306 = vsel %vm3048, %v3305, %v3272
  %v3307 = vsel %vm3053, %v3306, %v3275
  %v3308 = vsel %vm432, %v3307, %v3278
  %v3309 = vsel %vm3062, %v3308, %v3281
  %v3310 = vsel %vm3067, %v3309, %v3284
  %v3311 = vsel %vm3072, %v3310, %v3287
  %v3312 = vsel %vm1105, %v3311, %v3290
  %v3313 = vsel %vm3081, %v3312, %v3293
  %v3314 = vsel %vm3086, %v3313, %v3296
  %v3315 = vsel %vm3091, %v3314, %v3299
  %v3317 = vlaneseq
  %v3318 = vshrl.u32 %v3317, 7
  %v3319 = vsub.s32 0, %v3318
  %v3320 = vrot.slane %v3250, %v3319
  %3321 = vrot.lane.b32.xlu0 %v3320, 8
  %v3322 = vpop.permute.xlu0 %3321
  %3324 = vrot.lane.b32.xlu0 %v3320, 16
  %v3325 = vpop.permute.xlu0 %3324
  %3327 = vrot.lane.b32.xlu0 %v3320, 24
  %v3328 = vpop.permute.xlu0 %3327
  %3330 = vrot.lane.b32.xlu0 %v3320, 32
  %v3331 = vpop.permute.xlu0 %3330
  %3333 = vrot.lane.b32.xlu0 %v3320, 40
  %v3334 = vpop.permute.xlu0 %3333
  %3336 = vrot.lane.b32.xlu0 %v3320, 48
  %v3337 = vpop.permute.xlu0 %3336
  %3339 = vrot.lane.b32.xlu0 %v3320, 56
  %v3340 = vpop.permute.xlu0 %3339
  %3342 = vrot.lane.b32.xlu0 %v3320, 64
  %v3343 = vpop.permute.xlu0 %3342
  %3345 = vrot.lane.b32.xlu0 %v3320, 72
  %v3346 = vpop.permute.xlu0 %3345
  %3348 = vrot.lane.b32.xlu0 %v3320, 80
  %v3349 = vpop.permute.xlu0 %3348
  %3351 = vrot.lane.b32.xlu0 %v3320, 88
  %v3352 = vpop.permute.xlu0 %3351
  %3354 = vrot.lane.b32.xlu0 %v3320, 96
  %v3355 = vpop.permute.xlu0 %3354
  %3357 = vrot.lane.b32.xlu0 %v3320, 104
  %v3358 = vpop.permute.xlu0 %3357
  %3360 = vrot.lane.b32.xlu0 %v3320, 112
  %v3361 = vpop.permute.xlu0 %3360
  %3363 = vrot.lane.b32.xlu0 %v3320, 120
  %v3364 = vpop.permute.xlu0 %3363
  %v3366 = vsel %vm3024, %v3250, %v3322
  %v3367 = vsel %vm3029, %v3366, %v3325
  %v3368 = vsel %vm3034, %v3367, %v3328
  %v3369 = vsel %vm1102, %v3368, %v3331
  %v3370 = vsel %vm3043, %v3369, %v3334
  %v3371 = vsel %vm3048, %v3370, %v3337
  %v3372 = vsel %vm3053, %v3371, %v3340
  %v3373 = vsel %vm432, %v3372, %v3343
  %v3374 = vsel %vm3062, %v3373, %v3346
  %v3375 = vsel %vm3067, %v3374, %v3349
  %v3376 = vsel %vm3072, %v3375, %v3352
  %v3377 = vsel %vm1105, %v3376, %v3355
  %v3378 = vsel %vm3081, %v3377, %v3358
  %v3379 = vsel %vm3086, %v3378, %v3361
  %v3380 = vsel %vm3091, %v3379, %v3364
  %v3381 = vlaneseq
  %v3382 = vshrl.u32 %v3381, 7
  %v3383 = vsub.s32 0, %v3382
  %v3384 = vrot.slane %v3315, %v3383
  %v3385 = vmul.f32 %v3092, %v3384
  %v3386 = vmul.f32 %v3093, %v3384
  %v3387 = vmul.f32 %v3094, %v3384
  %v3388 = vmul.f32 %v3095, %v3384
  %v3389 = vlaneseq
  %v3390 = vshrl.u32 %v3389, 7
  %v3391 = vsub.s32 0, %v3390
  %v3392 = vrot.slane %v3380, %v3391
  %v3393 = vadd.f32 %v3385, %v3392
  %v3394 = vadd.f32 %v3386, %v3392
  %v3395 = vadd.f32 %v3387, %v3392
  %v3396 = vadd.f32 %v3388, %v3392
  %v3397 = vxor.u32 %v3393, 2147483648
  %v3398 = vxor.u32 %v3394, 2147483648
  %v3399 = vxor.u32 %v3395, 2147483648
  %v3400 = vxor.u32 %v3396, 2147483648
  %v3401 = vmul.f32 %v3397, 1.442695
  %v3402 = vpow.pop %v3401
  %v3403 = vmul.f32 %v3398, 1.442695
  %v3404 = vpow.pop %v3403
  %v3405 = vmul.f32 %v3399, 1.442695
  %v3406 = vpow.pop %v3405
  %v3407 = vmul.f32 %v3400, 1.442695
  %v3408 = vpow.pop %v3407
  %v3409 = vadd.f32 %v3402, 1.0
  %v3410 = vadd.f32 %v3404, 1.0
  %v3411 = vadd.f32 %v3406, 1.0
  %v3412 = vadd.f32 %v3408, 1.0
  %v3413 = vrcp.pop %v3409
  %v3414 = vmul.f32 1.0, %v3413
  %v3415 = vrcp.pop %v3410
  %v3416 = vmul.f32 1.0, %v3415
  %v3417 = vrcp.pop %v3411
  %v3418 = vmul.f32 1.0, %v3417
  %v3419 = vrcp.pop %v3412
  %v3420 = vmul.f32 1.0, %v3419
  %3421 = vst [vmem:[%s13] sm:$0xff] %v3414
  %3422 = vst [vmem:[%s13 + $0x8] sm:$0xff] %v3416
  %3423 = vst [vmem:[%s13 + $0x10] sm:$0xff] %v3418
  %3424 = vst [vmem:[%s13 + $0x18] sm:$0xff] %v3420
  // Predicated region
  $region54: #{forward.1} parent=0 // pred_check
    _
  $region55: #{forward.1} parent=0 // pred_check_branch
    %3426 = sbr.rel (0) target = $region57
  $region56: #{forward.1} parent=0 // pred_region
    _
  $region57: #{forward.1} parent=0 // pred_fallthru
    _
  // Predicated region
  $region58: #{forward.1} parent=0 // pred_check
    _
  $region59: #{forward.1} parent=0 // pred_check_branch
    %3428 = sbr.rel (0) target = $region61
  $region60: #{forward.1} parent=0 // pred_region
    _
  $region61: #{forward.1} parent=0 // pred_fallthru
    _

</llo_original>
